<compile_context>
chip_gen: v7x
topology: tpu7x:2x2x1
jax: 0.10.0
libtpu: 0.0.40
codegen_flags: <defaults>
</compile_context>

<pallas_src>
import functools

import numpy as np
import jax
import jax.numpy as jnp
from jax.experimental import pallas as pl
from jax.experimental.pallas import tpu as pltpu


def _resblock_kernel(x_ref, w1_ref, w2_ref, g1_ref, b1_ref, g2_ref, b2_ref,
                     mask_ref, out_ref, *, dims, eps):
    # x_ref   : (1, C, DHW)   lane-dense flattened input sample
    # w*_ref  : (C, 27*C)     conv weights, column index = k*C + c_in,
    #                         k = kd*9 + kh*3 + kw
    # g*/b*   : (C, 1)        InstanceNorm affine params
    # mask_ref: (27, DHW)     1.0 where tap k's source voxel is in bounds
    # out_ref : (1, C, DHW)
    D, H, W = dims
    C = out_ref.shape[1]
    HW = H * W
    DHW = D * HW
    PADL = HW + W + 1          # largest magnitude of a negative flat tap offset

    mask = mask_ref[...]                               # (27, DHW), {0., 1.}
    zeros_halo = jnp.zeros((C, PADL), jnp.float32)

    def conv3x3x3(h_flat, w_ref):
        # h_flat: (C, DHW) -> (C, DHW); a single MXU dot with K = 27*C.
        hp = jnp.concatenate([zeros_halo, h_flat, zeros_halo], axis=1)
        parts = []
        for kd in range(3):
            for kh in range(3):
                for kw in range(3):
                    k = kd * 9 + kh * 3 + kw
                    s = kd * HW + kh * W + kw          # = PADL + flat tap offset
                    tap = hp[:, s:s + DHW]             # (C, DHW) shifted view
                    parts.append(tap * mask[k:k + 1, :])
        patches = jnp.concatenate(parts, axis=0)       # (27*C, DHW)
        return jnp.dot(w_ref[...], patches,
                       preferred_element_type=jnp.float32)

    def instance_norm(h, g, b):
        # h: (C, DHW); biased per-channel stats over DHW (training-mode IN).
        m = jnp.mean(h, axis=1, keepdims=True)
        hc = h - m                                     # centered once, reused
        v = jnp.mean(hc * hc, axis=1, keepdims=True)
        return hc * jax.lax.rsqrt(v + eps) * g + b

    x = x_ref[0].astype(jnp.float32)                   # (C, DHW)

    # conv1 -> IN1 -> ReLU
    h = conv3x3x3(x, w1_ref)
    h = instance_norm(h, g1_ref[...], b1_ref[...])
    h = jnp.maximum(h, 0.0)

    # conv2 -> IN2
    h = conv3x3x3(h, w2_ref)
    h = instance_norm(h, g2_ref[...], b2_ref[...])

    # residual add; lane-dense store (last dim = DHW, multiple of 128)
    out_ref[0] = (x + h).astype(out_ref.dtype)


def residual_block(x, w1, w2, g1, b1, g2, b2, eps=1e-5):
    """x: (N, C, D, H, W) f32; w*: (C, C, 3, 3, 3); g*/b*: (C,)."""
    N, C, D, H, W = x.shape
    DHW = D * H * W

    # Glue (all cheap / layout-only):
    x_flat = x.reshape(N, C, DHW)   # collapse of trailing dims -> no data movement
    # w_mat[o, k*C + i] = w[o, i, kd, kh, kw], k = kd*9 + kh*3 + kw
    w1m = jnp.transpose(w1, (0, 2, 3, 4, 1)).reshape(C, 27 * C).astype(jnp.float32)
    w2m = jnp.transpose(w2, (0, 2, 3, 4, 1)).reshape(C, 27 * C).astype(jnp.float32)
    g1c = g1.reshape(C, 1).astype(jnp.float32)
    b1c = b1.reshape(C, 1).astype(jnp.float32)
    g2c = g2.reshape(C, 1).astype(jnp.float32)
    b2c = b2.reshape(C, 1).astype(jnp.float32)

    # (27, DHW) tap-validity mask for the flat-shift conv formulation (constant).
    dd = np.arange(D).reshape(D, 1, 1)
    hh = np.arange(H).reshape(1, H, 1)
    ww = np.arange(W).reshape(1, 1, W)
    masks = []
    for kd in range(3):
        for kh in range(3):
            for kw in range(3):
                m = ((dd + kd - 1 >= 0) & (dd + kd - 1 < D) &
                     (hh + kh - 1 >= 0) & (hh + kh - 1 < H) &
                     (ww + kw - 1 >= 0) & (ww + kw - 1 < W))
                masks.append(np.broadcast_to(m, (D, H, W)).reshape(DHW))
    mask = jnp.asarray(np.stack(masks).astype(np.float32))      # (27, DHW)

    kernel = functools.partial(_resblock_kernel, dims=(D, H, W), eps=eps)

    cost = pl.CostEstimate(
        flops=N * 2 * (2 * 27 * C * C * DHW),
        transcendentals=N * 2 * C,
        bytes_accessed=(2 * N * C * DHW + 2 * 27 * C * C + 27 * DHW + 4 * C) * 4,
    )

    out_flat = pl.pallas_call(
        kernel,
        out_shape=jax.ShapeDtypeStruct((N, C, DHW), x.dtype),
        grid=(N,),
        in_specs=[
            pl.BlockSpec((1, C, DHW), lambda n: (n, 0, 0)),    # x (per sample)
            pl.BlockSpec((C, 27 * C), lambda n: (0, 0)),       # w1
            pl.BlockSpec((C, 27 * C), lambda n: (0, 0)),       # w2
            pl.BlockSpec((C, 1), lambda n: (0, 0)),            # gamma1
            pl.BlockSpec((C, 1), lambda n: (0, 0)),            # beta1
            pl.BlockSpec((C, 1), lambda n: (0, 0)),            # gamma2
            pl.BlockSpec((C, 1), lambda n: (0, 0)),            # beta2
            pl.BlockSpec((27, DHW), lambda n: (0, 0)),         # tap masks
        ],
        out_specs=pl.BlockSpec((1, C, DHW), lambda n: (n, 0, 0)),
        compiler_params=pltpu.CompilerParams(
            dimension_semantics=("parallel",)),
        cost_estimate=cost,
    )(x_flat, w1m, w2m, g1c, b1c, g2c, b2c, mask)

    return out_flat.reshape(N, C, D, H, W)


def residual_block_ref(x, w1, w2, g1, b1, g2, b2, eps=1e-5):
    """Pure-JAX reference (training-mode InstanceNorm)."""
    def conv(h, w):
        return jax.lax.conv_general_dilated(
            h, w, window_strides=(1, 1, 1),
            padding=((1, 1), (1, 1), (1, 1)),
            dimension_numbers=("NCDHW", "OIDHW", "NCDHW"))

    def inorm(h, g, b):
        m = h.mean(axis=(2, 3, 4), keepdims=True)
        v = ((h - m) ** 2).mean(axis=(2, 3, 4), keepdims=True)
        return ((h - m) / jnp.sqrt(v + eps)
                * g.reshape(1, -1, 1, 1, 1) + b.reshape(1, -1, 1, 1, 1))

    h = conv(x, w1)
    h = inorm(h, g1, b1)
    h = jnp.maximum(h, 0.0)
    h = conv(h, w2)
    h = inorm(h, g2, b2)
    return x + h


if __name__ == "__main__":
    N, C, D, H, W = 2, 4, 8, 8, 8   # dim_in == dim_out (required by residual add)

    key = jax.random.PRNGKey(0)
    kx, kw1, kw2, kg1, kb1, kg2, kb2 = jax.random.split(key, 7)

    x = jax.random.normal(kx, (N, C, D, H, W), dtype=jnp.float32)
    w1 = 0.1 * jax.random.normal(kw1, (C, C, 3, 3, 3), dtype=jnp.float32)
    w2 = 0.1 * jax.random.normal(kw2, (C, C, 3, 3, 3), dtype=jnp.float32)
    g1 = 1.0 + 0.1 * jax.random.normal(kg1, (C,), dtype=jnp.float32)
    b1 = 0.1 * jax.random.normal(kb1, (C,), dtype=jnp.float32)
    g2 = 1.0 + 0.1 * jax.random.normal(kg2, (C,), dtype=jnp.float32)
    b2 = 0.1 * jax.random.normal(kb2, (C,), dtype=jnp.float32)

    out = residual_block(x, w1, w2, g1, b1, g2, b2)
    out = jax.block_until_ready(out)

    ref = jax.block_until_ready(residual_block_ref(x, w1, w2, g1, b1, g2, b2))
    assert out.shape == (N, C, D, H, W)
    assert jnp.allclose(out, ref, atol=1e-2, rtol=1e-2), "mismatch vs JAX reference"

    print("KERNEL_OK")
</pallas_src>

<mosaic_0001>
module attributes {stable_mosaic.version = 11 : i64} {
  func.func @_resblock_kernel(%arg0: i32, %arg1: memref<1x4x512xf32, #tpu.memory_space<vmem>>, %arg2: memref<4x108xf32, #tpu.memory_space<vmem>>, %arg3: memref<4x108xf32, #tpu.memory_space<vmem>>, %arg4: memref<4x1xf32, #tpu.memory_space<vmem>>, %arg5: memref<4x1xf32, #tpu.memory_space<vmem>>, %arg6: memref<4x1xf32, #tpu.memory_space<vmem>>, %arg7: memref<4x1xf32, #tpu.memory_space<vmem>>, %arg8: memref<27x512xf32, #tpu.memory_space<vmem>>, %arg9: memref<1x4x512xf32, #tpu.memory_space<vmem>>) attributes {dimension_semantics = [#tpu.dimension_semantics<parallel>], iteration_bounds = array<i64: 2>, scalar_prefetch = 0 : i64, scratch_operands = 0 : i64, tpu.core_type = #tpu.core_type<tc>, window_params = [{transform_indices = @transform_0, window_bounds = array<i64: 1, 4, 512>}, {pipeline_mode = #tpu.pipeline_mode<synchronous>, transform_indices = @transform_1, window_bounds = array<i64: 4, 108>}, {pipeline_mode = #tpu.pipeline_mode<synchronous>, transform_indices = @transform_2, window_bounds = array<i64: 4, 108>}, {pipeline_mode = #tpu.pipeline_mode<synchronous>, transform_indices = @transform_3, window_bounds = array<i64: 4, 1>}, {pipeline_mode = #tpu.pipeline_mode<synchronous>, transform_indices = @transform_4, window_bounds = array<i64: 4, 1>}, {pipeline_mode = #tpu.pipeline_mode<synchronous>, transform_indices = @transform_5, window_bounds = array<i64: 4, 1>}, {pipeline_mode = #tpu.pipeline_mode<synchronous>, transform_indices = @transform_6, window_bounds = array<i64: 4, 1>}, {pipeline_mode = #tpu.pipeline_mode<synchronous>, transform_indices = @transform_7, window_bounds = array<i64: 27, 512>}, {transform_indices = @transform_8, window_bounds = array<i64: 1, 4, 512>}]} {
    %c0 = arith.constant 0 : index
    %c0_0 = arith.constant 0 : index
    %0 = vector.load %arg8[%c0, %c0_0] : memref<27x512xf32, #tpu.memory_space<vmem>>, vector<27x512xf32>
    %cst = arith.constant 0.000000e+00 : f32
    %1 = vector.broadcast %cst : f32 to vector<4x73xf32>
    %c0_1 = arith.constant 0 : index
    %c0_2 = arith.constant 0 : index
    %c0_3 = arith.constant 0 : index
    %2 = vector.load %arg1[%c0_1, %c0_2, %c0_3] : memref<1x4x512xf32, #tpu.memory_space<vmem>>, vector<1x4x512xf32>
    %3 = vector.shape_cast %2 : vector<1x4x512xf32> to vector<4x512xf32>
    %4 = tpu.concatenate %1, %3, %1 in 1 : vector<4x73xf32>, vector<4x512xf32>, vector<4x73xf32> -> vector<4x658xf32>
    %5 = vector.extract_strided_slice %4 {offsets = [0, 0], sizes = [4, 512], strides = [1, 1]} : vector<4x658xf32> to vector<4x512xf32>
    %6 = vector.extract_strided_slice %0 {offsets = [0, 0], sizes = [1, 512], strides = [1, 1]} : vector<27x512xf32> to vector<1x512xf32>
    %7 = vector.broadcast %6 : vector<1x512xf32> to vector<4x512xf32>
    %8 = arith.mulf %5, %7 : vector<4x512xf32>
    %9 = vector.extract_strided_slice %4 {offsets = [0, 1], sizes = [4, 512], strides = [1, 1]} : vector<4x658xf32> to vector<4x512xf32>
    %10 = vector.extract_strided_slice %0 {offsets = [1, 0], sizes = [1, 512], strides = [1, 1]} : vector<27x512xf32> to vector<1x512xf32>
    %11 = vector.broadcast %10 : vector<1x512xf32> to vector<4x512xf32>
    %12 = arith.mulf %9, %11 : vector<4x512xf32>
    %13 = vector.extract_strided_slice %4 {offsets = [0, 2], sizes = [4, 512], strides = [1, 1]} : vector<4x658xf32> to vector<4x512xf32>
    %14 = vector.extract_strided_slice %0 {offsets = [2, 0], sizes = [1, 512], strides = [1, 1]} : vector<27x512xf32> to vector<1x512xf32>
    %15 = vector.broadcast %14 : vector<1x512xf32> to vector<4x512xf32>
    %16 = arith.mulf %13, %15 : vector<4x512xf32>
    %17 = vector.extract_strided_slice %4 {offsets = [0, 8], sizes = [4, 512], strides = [1, 1]} : vector<4x658xf32> to vector<4x512xf32>
    %18 = vector.extract_strided_slice %0 {offsets = [3, 0], sizes = [1, 512], strides = [1, 1]} : vector<27x512xf32> to vector<1x512xf32>
    %19 = vector.broadcast %18 : vector<1x512xf32> to vector<4x512xf32>
    %20 = arith.mulf %17, %19 : vector<4x512xf32>
    %21 = vector.extract_strided_slice %4 {offsets = [0, 9], sizes = [4, 512], strides = [1, 1]} : vector<4x658xf32> to vector<4x512xf32>
    %22 = vector.extract_strided_slice %0 {offsets = [4, 0], sizes = [1, 512], strides = [1, 1]} : vector<27x512xf32> to vector<1x512xf32>
    %23 = vector.broadcast %22 : vector<1x512xf32> to vector<4x512xf32>
    %24 = arith.mulf %21, %23 : vector<4x512xf32>
    %25 = vector.extract_strided_slice %4 {offsets = [0, 10], sizes = [4, 512], strides = [1, 1]} : vector<4x658xf32> to vector<4x512xf32>
    %26 = vector.extract_strided_slice %0 {offsets = [5, 0], sizes = [1, 512], strides = [1, 1]} : vector<27x512xf32> to vector<1x512xf32>
    %27 = vector.broadcast %26 : vector<1x512xf32> to vector<4x512xf32>
    %28 = arith.mulf %25, %27 : vector<4x512xf32>
    %29 = vector.extract_strided_slice %4 {offsets = [0, 16], sizes = [4, 512], strides = [1, 1]} : vector<4x658xf32> to vector<4x512xf32>
    %30 = vector.extract_strided_slice %0 {offsets = [6, 0], sizes = [1, 512], strides = [1, 1]} : vector<27x512xf32> to vector<1x512xf32>
    %31 = vector.broadcast %30 : vector<1x512xf32> to vector<4x512xf32>
    %32 = arith.mulf %29, %31 : vector<4x512xf32>
    %33 = vector.extract_strided_slice %4 {offsets = [0, 17], sizes = [4, 512], strides = [1, 1]} : vector<4x658xf32> to vector<4x512xf32>
    %34 = vector.extract_strided_slice %0 {offsets = [7, 0], sizes = [1, 512], strides = [1, 1]} : vector<27x512xf32> to vector<1x512xf32>
    %35 = vector.broadcast %34 : vector<1x512xf32> to vector<4x512xf32>
    %36 = arith.mulf %33, %35 : vector<4x512xf32>
    %37 = vector.extract_strided_slice %4 {offsets = [0, 18], sizes = [4, 512], strides = [1, 1]} : vector<4x658xf32> to vector<4x512xf32>
    %38 = vector.extract_strided_slice %0 {offsets = [8, 0], sizes = [1, 512], strides = [1, 1]} : vector<27x512xf32> to vector<1x512xf32>
    %39 = vector.broadcast %38 : vector<1x512xf32> to vector<4x512xf32>
    %40 = arith.mulf %37, %39 : vector<4x512xf32>
    %41 = vector.extract_strided_slice %4 {offsets = [0, 64], sizes = [4, 512], strides = [1, 1]} : vector<4x658xf32> to vector<4x512xf32>
    %42 = vector.extract_strided_slice %0 {offsets = [9, 0], sizes = [1, 512], strides = [1, 1]} : vector<27x512xf32> to vector<1x512xf32>
    %43 = vector.broadcast %42 : vector<1x512xf32> to vector<4x512xf32>
    %44 = arith.mulf %41, %43 : vector<4x512xf32>
    %45 = vector.extract_strided_slice %4 {offsets = [0, 65], sizes = [4, 512], strides = [1, 1]} : vector<4x658xf32> to vector<4x512xf32>
    %46 = vector.extract_strided_slice %0 {offsets = [10, 0], sizes = [1, 512], strides = [1, 1]} : vector<27x512xf32> to vector<1x512xf32>
    %47 = vector.broadcast %46 : vector<1x512xf32> to vector<4x512xf32>
    %48 = arith.mulf %45, %47 : vector<4x512xf32>
    %49 = vector.extract_strided_slice %4 {offsets = [0, 66], sizes = [4, 512], strides = [1, 1]} : vector<4x658xf32> to vector<4x512xf32>
    %50 = vector.extract_strided_slice %0 {offsets = [11, 0], sizes = [1, 512], strides = [1, 1]} : vector<27x512xf32> to vector<1x512xf32>
    %51 = vector.broadcast %50 : vector<1x512xf32> to vector<4x512xf32>
    %52 = arith.mulf %49, %51 : vector<4x512xf32>
    %53 = vector.extract_strided_slice %4 {offsets = [0, 72], sizes = [4, 512], strides = [1, 1]} : vector<4x658xf32> to vector<4x512xf32>
    %54 = vector.extract_strided_slice %0 {offsets = [12, 0], sizes = [1, 512], strides = [1, 1]} : vector<27x512xf32> to vector<1x512xf32>
    %55 = vector.broadcast %54 : vector<1x512xf32> to vector<4x512xf32>
    %56 = arith.mulf %53, %55 : vector<4x512xf32>
    %57 = vector.extract_strided_slice %4 {offsets = [0, 73], sizes = [4, 512], strides = [1, 1]} : vector<4x658xf32> to vector<4x512xf32>
    %58 = vector.extract_strided_slice %0 {offsets = [13, 0], sizes = [1, 512], strides = [1, 1]} : vector<27x512xf32> to vector<1x512xf32>
    %59 = vector.broadcast %58 : vector<1x512xf32> to vector<4x512xf32>
    %60 = arith.mulf %57, %59 : vector<4x512xf32>
    %61 = vector.extract_strided_slice %4 {offsets = [0, 74], sizes = [4, 512], strides = [1, 1]} : vector<4x658xf32> to vector<4x512xf32>
    %62 = vector.extract_strided_slice %0 {offsets = [14, 0], sizes = [1, 512], strides = [1, 1]} : vector<27x512xf32> to vector<1x512xf32>
    %63 = vector.broadcast %62 : vector<1x512xf32> to vector<4x512xf32>
    %64 = arith.mulf %61, %63 : vector<4x512xf32>
    %65 = vector.extract_strided_slice %4 {offsets = [0, 80], sizes = [4, 512], strides = [1, 1]} : vector<4x658xf32> to vector<4x512xf32>
    %66 = vector.extract_strided_slice %0 {offsets = [15, 0], sizes = [1, 512], strides = [1, 1]} : vector<27x512xf32> to vector<1x512xf32>
    %67 = vector.broadcast %66 : vector<1x512xf32> to vector<4x512xf32>
    %68 = arith.mulf %65, %67 : vector<4x512xf32>
    %69 = vector.extract_strided_slice %4 {offsets = [0, 81], sizes = [4, 512], strides = [1, 1]} : vector<4x658xf32> to vector<4x512xf32>
    %70 = vector.extract_strided_slice %0 {offsets = [16, 0], sizes = [1, 512], strides = [1, 1]} : vector<27x512xf32> to vector<1x512xf32>
    %71 = vector.broadcast %70 : vector<1x512xf32> to vector<4x512xf32>
    %72 = arith.mulf %69, %71 : vector<4x512xf32>
    %73 = vector.extract_strided_slice %4 {offsets = [0, 82], sizes = [4, 512], strides = [1, 1]} : vector<4x658xf32> to vector<4x512xf32>
    %74 = vector.extract_strided_slice %0 {offsets = [17, 0], sizes = [1, 512], strides = [1, 1]} : vector<27x512xf32> to vector<1x512xf32>
    %75 = vector.broadcast %74 : vector<1x512xf32> to vector<4x512xf32>
    %76 = arith.mulf %73, %75 : vector<4x512xf32>
    %77 = vector.extract_strided_slice %4 {offsets = [0, 128], sizes = [4, 512], strides = [1, 1]} : vector<4x658xf32> to vector<4x512xf32>
    %78 = vector.extract_strided_slice %0 {offsets = [18, 0], sizes = [1, 512], strides = [1, 1]} : vector<27x512xf32> to vector<1x512xf32>
    %79 = vector.broadcast %78 : vector<1x512xf32> to vector<4x512xf32>
    %80 = arith.mulf %77, %79 : vector<4x512xf32>
    %81 = vector.extract_strided_slice %4 {offsets = [0, 129], sizes = [4, 512], strides = [1, 1]} : vector<4x658xf32> to vector<4x512xf32>
    %82 = vector.extract_strided_slice %0 {offsets = [19, 0], sizes = [1, 512], strides = [1, 1]} : vector<27x512xf32> to vector<1x512xf32>
    %83 = vector.broadcast %82 : vector<1x512xf32> to vector<4x512xf32>
    %84 = arith.mulf %81, %83 : vector<4x512xf32>
    %85 = vector.extract_strided_slice %4 {offsets = [0, 130], sizes = [4, 512], strides = [1, 1]} : vector<4x658xf32> to vector<4x512xf32>
    %86 = vector.extract_strided_slice %0 {offsets = [20, 0], sizes = [1, 512], strides = [1, 1]} : vector<27x512xf32> to vector<1x512xf32>
    %87 = vector.broadcast %86 : vector<1x512xf32> to vector<4x512xf32>
    %88 = arith.mulf %85, %87 : vector<4x512xf32>
    %89 = vector.extract_strided_slice %4 {offsets = [0, 136], sizes = [4, 512], strides = [1, 1]} : vector<4x658xf32> to vector<4x512xf32>
    %90 = vector.extract_strided_slice %0 {offsets = [21, 0], sizes = [1, 512], strides = [1, 1]} : vector<27x512xf32> to vector<1x512xf32>
    %91 = vector.broadcast %90 : vector<1x512xf32> to vector<4x512xf32>
    %92 = arith.mulf %89, %91 : vector<4x512xf32>
    %93 = vector.extract_strided_slice %4 {offsets = [0, 137], sizes = [4, 512], strides = [1, 1]} : vector<4x658xf32> to vector<4x512xf32>
    %94 = vector.extract_strided_slice %0 {offsets = [22, 0], sizes = [1, 512], strides = [1, 1]} : vector<27x512xf32> to vector<1x512xf32>
    %95 = vector.broadcast %94 : vector<1x512xf32> to vector<4x512xf32>
    %96 = arith.mulf %93, %95 : vector<4x512xf32>
    %97 = vector.extract_strided_slice %4 {offsets = [0, 138], sizes = [4, 512], strides = [1, 1]} : vector<4x658xf32> to vector<4x512xf32>
    %98 = vector.extract_strided_slice %0 {offsets = [23, 0], sizes = [1, 512], strides = [1, 1]} : vector<27x512xf32> to vector<1x512xf32>
    %99 = vector.broadcast %98 : vector<1x512xf32> to vector<4x512xf32>
    %100 = arith.mulf %97, %99 : vector<4x512xf32>
    %101 = vector.extract_strided_slice %4 {offsets = [0, 144], sizes = [4, 512], strides = [1, 1]} : vector<4x658xf32> to vector<4x512xf32>
    %102 = vector.extract_strided_slice %0 {offsets = [24, 0], sizes = [1, 512], strides = [1, 1]} : vector<27x512xf32> to vector<1x512xf32>
    %103 = vector.broadcast %102 : vector<1x512xf32> to vector<4x512xf32>
    %104 = arith.mulf %101, %103 : vector<4x512xf32>
    %105 = vector.extract_strided_slice %4 {offsets = [0, 145], sizes = [4, 512], strides = [1, 1]} : vector<4x658xf32> to vector<4x512xf32>
    %106 = vector.extract_strided_slice %0 {offsets = [25, 0], sizes = [1, 512], strides = [1, 1]} : vector<27x512xf32> to vector<1x512xf32>
    %107 = vector.broadcast %106 : vector<1x512xf32> to vector<4x512xf32>
    %108 = arith.mulf %105, %107 : vector<4x512xf32>
    %109 = vector.extract_strided_slice %4 {offsets = [0, 146], sizes = [4, 512], strides = [1, 1]} : vector<4x658xf32> to vector<4x512xf32>
    %110 = vector.extract_strided_slice %0 {offsets = [26, 0], sizes = [1, 512], strides = [1, 1]} : vector<27x512xf32> to vector<1x512xf32>
    %111 = vector.broadcast %110 : vector<1x512xf32> to vector<4x512xf32>
    %112 = arith.mulf %109, %111 : vector<4x512xf32>
    %113 = tpu.concatenate %8, %12, %16, %20, %24, %28, %32, %36, %40, %44, %48, %52, %56, %60, %64, %68 in 0 : vector<4x512xf32>, vector<4x512xf32>, vector<4x512xf32>, vector<4x512xf32>, vector<4x512xf32>, vector<4x512xf32>, vector<4x512xf32>, vector<4x512xf32>, vector<4x512xf32>, vector<4x512xf32>, vector<4x512xf32>, vector<4x512xf32>, vector<4x512xf32>, vector<4x512xf32>, vector<4x512xf32>, vector<4x512xf32> -> vector<64x512xf32>
    %114 = tpu.concatenate %72, %76, %80, %84, %88, %92, %96, %100, %104, %108, %112 in 0 : vector<4x512xf32>, vector<4x512xf32>, vector<4x512xf32>, vector<4x512xf32>, vector<4x512xf32>, vector<4x512xf32>, vector<4x512xf32>, vector<4x512xf32>, vector<4x512xf32>, vector<4x512xf32>, vector<4x512xf32> -> vector<44x512xf32>
    %115 = tpu.concatenate %113, %114 in 0 : vector<64x512xf32>, vector<44x512xf32> -> vector<108x512xf32>
    %c0_4 = arith.constant 0 : index
    %c0_5 = arith.constant 0 : index
    %116 = vector.load %arg2[%c0_4, %c0_5] : memref<4x108xf32, #tpu.memory_space<vmem>>, vector<4x108xf32>
    %cst_6 = arith.constant dense<0.000000e+00> : vector<4x512xf32>
    %117 = tpu.matmul %116, %115, %cst_6 {dimension_numbers = #tpu.dot_dimension_numbers<[1], [0], [0], [1], [0, 0, 1, 1], [], []>} : vector<4x108xf32>, vector<108x512xf32>, vector<4x512xf32> -> vector<4x512xf32>
    %c0_7 = arith.constant 0 : index
    %c0_8 = arith.constant 0 : index
    %118 = vector.load %arg4[%c0_7, %c0_8] : memref<4x1xf32, #tpu.memory_space<vmem>>, vector<4x1xf32>
    %c0_9 = arith.constant 0 : index
    %c0_10 = arith.constant 0 : index
    %119 = vector.load %arg5[%c0_9, %c0_10] : memref<4x1xf32, #tpu.memory_space<vmem>>, vector<4x1xf32>
    %cst_11 = arith.constant dense<0.000000e+00> : vector<4xf32>
    %120 = vector.multi_reduction <add>, %117, %cst_11 [1] : vector<4x512xf32> to vector<4xf32>
    %121 = vector.shape_cast %120 : vector<4xf32> to vector<4x1xf32>
    %cst_12 = arith.constant 5.120000e+02 : f32
    %122 = vector.broadcast %cst_12 : f32 to vector<4x1xf32>
    %123 = arith.divf %121, %122 : vector<4x1xf32>
    %124 = vector.broadcast %123 : vector<4x1xf32> to vector<4x512xf32>
    %125 = arith.subf %117, %124 : vector<4x512xf32>
    %126 = arith.mulf %125, %125 : vector<4x512xf32>
    %cst_13 = arith.constant dense<0.000000e+00> : vector<4xf32>
    %127 = vector.multi_reduction <add>, %126, %cst_13 [1] : vector<4x512xf32> to vector<4xf32>
    %128 = vector.shape_cast %127 : vector<4xf32> to vector<4x1xf32>
    %cst_14 = arith.constant 5.120000e+02 : f32
    %129 = vector.broadcast %cst_14 : f32 to vector<4x1xf32>
    %130 = arith.divf %128, %129 : vector<4x1xf32>
    %cst_15 = arith.constant 9.99999974E-6 : f32
    %131 = vector.broadcast %cst_15 : f32 to vector<4x1xf32>
    %132 = arith.addf %130, %131 : vector<4x1xf32>
    %133 = math.rsqrt %132 : vector<4x1xf32>
    %134 = vector.broadcast %133 : vector<4x1xf32> to vector<4x512xf32>
    %135 = arith.mulf %125, %134 : vector<4x512xf32>
    %136 = vector.broadcast %118 : vector<4x1xf32> to vector<4x512xf32>
    %137 = arith.mulf %135, %136 : vector<4x512xf32>
    %138 = vector.broadcast %119 : vector<4x1xf32> to vector<4x512xf32>
    %139 = arith.addf %137, %138 : vector<4x512xf32>
    %cst_16 = arith.constant 0.000000e+00 : f32
    %140 = vector.broadcast %cst_16 : f32 to vector<4x512xf32>
    %141 = arith.maximumf %139, %140 : vector<4x512xf32>
    %142 = tpu.concatenate %1, %141, %1 in 1 : vector<4x73xf32>, vector<4x512xf32>, vector<4x73xf32> -> vector<4x658xf32>
    %143 = vector.extract_strided_slice %142 {offsets = [0, 0], sizes = [4, 512], strides = [1, 1]} : vector<4x658xf32> to vector<4x512xf32>
    %144 = vector.extract_strided_slice %0 {offsets = [0, 0], sizes = [1, 512], strides = [1, 1]} : vector<27x512xf32> to vector<1x512xf32>
    %145 = vector.broadcast %144 : vector<1x512xf32> to vector<4x512xf32>
    %146 = arith.mulf %143, %145 : vector<4x512xf32>
    %147 = vector.extract_strided_slice %142 {offsets = [0, 1], sizes = [4, 512], strides = [1, 1]} : vector<4x658xf32> to vector<4x512xf32>
    %148 = vector.extract_strided_slice %0 {offsets = [1, 0], sizes = [1, 512], strides = [1, 1]} : vector<27x512xf32> to vector<1x512xf32>
    %149 = vector.broadcast %148 : vector<1x512xf32> to vector<4x512xf32>
    %150 = arith.mulf %147, %149 : vector<4x512xf32>
    %151 = vector.extract_strided_slice %142 {offsets = [0, 2], sizes = [4, 512], strides = [1, 1]} : vector<4x658xf32> to vector<4x512xf32>
    %152 = vector.extract_strided_slice %0 {offsets = [2, 0], sizes = [1, 512], strides = [1, 1]} : vector<27x512xf32> to vector<1x512xf32>
    %153 = vector.broadcast %152 : vector<1x512xf32> to vector<4x512xf32>
    %154 = arith.mulf %151, %153 : vector<4x512xf32>
    %155 = vector.extract_strided_slice %142 {offsets = [0, 8], sizes = [4, 512], strides = [1, 1]} : vector<4x658xf32> to vector<4x512xf32>
    %156 = vector.extract_strided_slice %0 {offsets = [3, 0], sizes = [1, 512], strides = [1, 1]} : vector<27x512xf32> to vector<1x512xf32>
    %157 = vector.broadcast %156 : vector<1x512xf32> to vector<4x512xf32>
    %158 = arith.mulf %155, %157 : vector<4x512xf32>
    %159 = vector.extract_strided_slice %142 {offsets = [0, 9], sizes = [4, 512], strides = [1, 1]} : vector<4x658xf32> to vector<4x512xf32>
    %160 = vector.extract_strided_slice %0 {offsets = [4, 0], sizes = [1, 512], strides = [1, 1]} : vector<27x512xf32> to vector<1x512xf32>
    %161 = vector.broadcast %160 : vector<1x512xf32> to vector<4x512xf32>
    %162 = arith.mulf %159, %161 : vector<4x512xf32>
    %163 = vector.extract_strided_slice %142 {offsets = [0, 10], sizes = [4, 512], strides = [1, 1]} : vector<4x658xf32> to vector<4x512xf32>
    %164 = vector.extract_strided_slice %0 {offsets = [5, 0], sizes = [1, 512], strides = [1, 1]} : vector<27x512xf32> to vector<1x512xf32>
    %165 = vector.broadcast %164 : vector<1x512xf32> to vector<4x512xf32>
    %166 = arith.mulf %163, %165 : vector<4x512xf32>
    %167 = vector.extract_strided_slice %142 {offsets = [0, 16], sizes = [4, 512], strides = [1, 1]} : vector<4x658xf32> to vector<4x512xf32>
    %168 = vector.extract_strided_slice %0 {offsets = [6, 0], sizes = [1, 512], strides = [1, 1]} : vector<27x512xf32> to vector<1x512xf32>
    %169 = vector.broadcast %168 : vector<1x512xf32> to vector<4x512xf32>
    %170 = arith.mulf %167, %169 : vector<4x512xf32>
    %171 = vector.extract_strided_slice %142 {offsets = [0, 17], sizes = [4, 512], strides = [1, 1]} : vector<4x658xf32> to vector<4x512xf32>
    %172 = vector.extract_strided_slice %0 {offsets = [7, 0], sizes = [1, 512], strides = [1, 1]} : vector<27x512xf32> to vector<1x512xf32>
    %173 = vector.broadcast %172 : vector<1x512xf32> to vector<4x512xf32>
    %174 = arith.mulf %171, %173 : vector<4x512xf32>
    %175 = vector.extract_strided_slice %142 {offsets = [0, 18], sizes = [4, 512], strides = [1, 1]} : vector<4x658xf32> to vector<4x512xf32>
    %176 = vector.extract_strided_slice %0 {offsets = [8, 0], sizes = [1, 512], strides = [1, 1]} : vector<27x512xf32> to vector<1x512xf32>
    %177 = vector.broadcast %176 : vector<1x512xf32> to vector<4x512xf32>
    %178 = arith.mulf %175, %177 : vector<4x512xf32>
    %179 = vector.extract_strided_slice %142 {offsets = [0, 64], sizes = [4, 512], strides = [1, 1]} : vector<4x658xf32> to vector<4x512xf32>
    %180 = vector.extract_strided_slice %0 {offsets = [9, 0], sizes = [1, 512], strides = [1, 1]} : vector<27x512xf32> to vector<1x512xf32>
    %181 = vector.broadcast %180 : vector<1x512xf32> to vector<4x512xf32>
    %182 = arith.mulf %179, %181 : vector<4x512xf32>
    %183 = vector.extract_strided_slice %142 {offsets = [0, 65], sizes = [4, 512], strides = [1, 1]} : vector<4x658xf32> to vector<4x512xf32>
    %184 = vector.extract_strided_slice %0 {offsets = [10, 0], sizes = [1, 512], strides = [1, 1]} : vector<27x512xf32> to vector<1x512xf32>
    %185 = vector.broadcast %184 : vector<1x512xf32> to vector<4x512xf32>
    %186 = arith.mulf %183, %185 : vector<4x512xf32>
    %187 = vector.extract_strided_slice %142 {offsets = [0, 66], sizes = [4, 512], strides = [1, 1]} : vector<4x658xf32> to vector<4x512xf32>
    %188 = vector.extract_strided_slice %0 {offsets = [11, 0], sizes = [1, 512], strides = [1, 1]} : vector<27x512xf32> to vector<1x512xf32>
    %189 = vector.broadcast %188 : vector<1x512xf32> to vector<4x512xf32>
    %190 = arith.mulf %187, %189 : vector<4x512xf32>
    %191 = vector.extract_strided_slice %142 {offsets = [0, 72], sizes = [4, 512], strides = [1, 1]} : vector<4x658xf32> to vector<4x512xf32>
    %192 = vector.extract_strided_slice %0 {offsets = [12, 0], sizes = [1, 512], strides = [1, 1]} : vector<27x512xf32> to vector<1x512xf32>
    %193 = vector.broadcast %192 : vector<1x512xf32> to vector<4x512xf32>
    %194 = arith.mulf %191, %193 : vector<4x512xf32>
    %195 = vector.extract_strided_slice %142 {offsets = [0, 73], sizes = [4, 512], strides = [1, 1]} : vector<4x658xf32> to vector<4x512xf32>
    %196 = vector.extract_strided_slice %0 {offsets = [13, 0], sizes = [1, 512], strides = [1, 1]} : vector<27x512xf32> to vector<1x512xf32>
    %197 = vector.broadcast %196 : vector<1x512xf32> to vector<4x512xf32>
    %198 = arith.mulf %195, %197 : vector<4x512xf32>
    %199 = vector.extract_strided_slice %142 {offsets = [0, 74], sizes = [4, 512], strides = [1, 1]} : vector<4x658xf32> to vector<4x512xf32>
    %200 = vector.extract_strided_slice %0 {offsets = [14, 0], sizes = [1, 512], strides = [1, 1]} : vector<27x512xf32> to vector<1x512xf32>
    %201 = vector.broadcast %200 : vector<1x512xf32> to vector<4x512xf32>
    %202 = arith.mulf %199, %201 : vector<4x512xf32>
    %203 = vector.extract_strided_slice %142 {offsets = [0, 80], sizes = [4, 512], strides = [1, 1]} : vector<4x658xf32> to vector<4x512xf32>
    %204 = vector.extract_strided_slice %0 {offsets = [15, 0], sizes = [1, 512], strides = [1, 1]} : vector<27x512xf32> to vector<1x512xf32>
    %205 = vector.broadcast %204 : vector<1x512xf32> to vector<4x512xf32>
    %206 = arith.mulf %203, %205 : vector<4x512xf32>
    %207 = vector.extract_strided_slice %142 {offsets = [0, 81], sizes = [4, 512], strides = [1, 1]} : vector<4x658xf32> to vector<4x512xf32>
    %208 = vector.extract_strided_slice %0 {offsets = [16, 0], sizes = [1, 512], strides = [1, 1]} : vector<27x512xf32> to vector<1x512xf32>
    %209 = vector.broadcast %208 : vector<1x512xf32> to vector<4x512xf32>
    %210 = arith.mulf %207, %209 : vector<4x512xf32>
    %211 = vector.extract_strided_slice %142 {offsets = [0, 82], sizes = [4, 512], strides = [1, 1]} : vector<4x658xf32> to vector<4x512xf32>
    %212 = vector.extract_strided_slice %0 {offsets = [17, 0], sizes = [1, 512], strides = [1, 1]} : vector<27x512xf32> to vector<1x512xf32>
    %213 = vector.broadcast %212 : vector<1x512xf32> to vector<4x512xf32>
    %214 = arith.mulf %211, %213 : vector<4x512xf32>
    %215 = vector.extract_strided_slice %142 {offsets = [0, 128], sizes = [4, 512], strides = [1, 1]} : vector<4x658xf32> to vector<4x512xf32>
    %216 = vector.extract_strided_slice %0 {offsets = [18, 0], sizes = [1, 512], strides = [1, 1]} : vector<27x512xf32> to vector<1x512xf32>
    %217 = vector.broadcast %216 : vector<1x512xf32> to vector<4x512xf32>
    %218 = arith.mulf %215, %217 : vector<4x512xf32>
    %219 = vector.extract_strided_slice %142 {offsets = [0, 129], sizes = [4, 512], strides = [1, 1]} : vector<4x658xf32> to vector<4x512xf32>
    %220 = vector.extract_strided_slice %0 {offsets = [19, 0], sizes = [1, 512], strides = [1, 1]} : vector<27x512xf32> to vector<1x512xf32>
    %221 = vector.broadcast %220 : vector<1x512xf32> to vector<4x512xf32>
    %222 = arith.mulf %219, %221 : vector<4x512xf32>
    %223 = vector.extract_strided_slice %142 {offsets = [0, 130], sizes = [4, 512], strides = [1, 1]} : vector<4x658xf32> to vector<4x512xf32>
    %224 = vector.extract_strided_slice %0 {offsets = [20, 0], sizes = [1, 512], strides = [1, 1]} : vector<27x512xf32> to vector<1x512xf32>
    %225 = vector.broadcast %224 : vector<1x512xf32> to vector<4x512xf32>
    %226 = arith.mulf %223, %225 : vector<4x512xf32>
    %227 = vector.extract_strided_slice %142 {offsets = [0, 136], sizes = [4, 512], strides = [1, 1]} : vector<4x658xf32> to vector<4x512xf32>
    %228 = vector.extract_strided_slice %0 {offsets = [21, 0], sizes = [1, 512], strides = [1, 1]} : vector<27x512xf32> to vector<1x512xf32>
    %229 = vector.broadcast %228 : vector<1x512xf32> to vector<4x512xf32>
    %230 = arith.mulf %227, %229 : vector<4x512xf32>
    %231 = vector.extract_strided_slice %142 {offsets = [0, 137], sizes = [4, 512], strides = [1, 1]} : vector<4x658xf32> to vector<4x512xf32>
    %232 = vector.extract_strided_slice %0 {offsets = [22, 0], sizes = [1, 512], strides = [1, 1]} : vector<27x512xf32> to vector<1x512xf32>
    %233 = vector.broadcast %232 : vector<1x512xf32> to vector<4x512xf32>
    %234 = arith.mulf %231, %233 : vector<4x512xf32>
    %235 = vector.extract_strided_slice %142 {offsets = [0, 138], sizes = [4, 512], strides = [1, 1]} : vector<4x658xf32> to vector<4x512xf32>
    %236 = vector.extract_strided_slice %0 {offsets = [23, 0], sizes = [1, 512], strides = [1, 1]} : vector<27x512xf32> to vector<1x512xf32>
    %237 = vector.broadcast %236 : vector<1x512xf32> to vector<4x512xf32>
    %238 = arith.mulf %235, %237 : vector<4x512xf32>
    %239 = vector.extract_strided_slice %142 {offsets = [0, 144], sizes = [4, 512], strides = [1, 1]} : vector<4x658xf32> to vector<4x512xf32>
    %240 = vector.extract_strided_slice %0 {offsets = [24, 0], sizes = [1, 512], strides = [1, 1]} : vector<27x512xf32> to vector<1x512xf32>
    %241 = vector.broadcast %240 : vector<1x512xf32> to vector<4x512xf32>
    %242 = arith.mulf %239, %241 : vector<4x512xf32>
    %243 = vector.extract_strided_slice %142 {offsets = [0, 145], sizes = [4, 512], strides = [1, 1]} : vector<4x658xf32> to vector<4x512xf32>
    %244 = vector.extract_strided_slice %0 {offsets = [25, 0], sizes = [1, 512], strides = [1, 1]} : vector<27x512xf32> to vector<1x512xf32>
    %245 = vector.broadcast %244 : vector<1x512xf32> to vector<4x512xf32>
    %246 = arith.mulf %243, %245 : vector<4x512xf32>
    %247 = vector.extract_strided_slice %142 {offsets = [0, 146], sizes = [4, 512], strides = [1, 1]} : vector<4x658xf32> to vector<4x512xf32>
    %248 = vector.extract_strided_slice %0 {offsets = [26, 0], sizes = [1, 512], strides = [1, 1]} : vector<27x512xf32> to vector<1x512xf32>
    %249 = vector.broadcast %248 : vector<1x512xf32> to vector<4x512xf32>
    %250 = arith.mulf %247, %249 : vector<4x512xf32>
    %251 = tpu.concatenate %146, %150, %154, %158, %162, %166, %170, %174, %178, %182, %186, %190, %194, %198, %202, %206 in 0 : vector<4x512xf32>, vector<4x512xf32>, vector<4x512xf32>, vector<4x512xf32>, vector<4x512xf32>, vector<4x512xf32>, vector<4x512xf32>, vector<4x512xf32>, vector<4x512xf32>, vector<4x512xf32>, vector<4x512xf32>, vector<4x512xf32>, vector<4x512xf32>, vector<4x512xf32>, vector<4x512xf32>, vector<4x512xf32> -> vector<64x512xf32>
    %252 = tpu.concatenate %210, %214, %218, %222, %226, %230, %234, %238, %242, %246, %250 in 0 : vector<4x512xf32>, vector<4x512xf32>, vector<4x512xf32>, vector<4x512xf32>, vector<4x512xf32>, vector<4x512xf32>, vector<4x512xf32>, vector<4x512xf32>, vector<4x512xf32>, vector<4x512xf32>, vector<4x512xf32> -> vector<44x512xf32>
    %253 = tpu.concatenate %251, %252 in 0 : vector<64x512xf32>, vector<44x512xf32> -> vector<108x512xf32>
    %c0_17 = arith.constant 0 : index
    %c0_18 = arith.constant 0 : index
    %254 = vector.load %arg3[%c0_17, %c0_18] : memref<4x108xf32, #tpu.memory_space<vmem>>, vector<4x108xf32>
    %cst_19 = arith.constant dense<0.000000e+00> : vector<4x512xf32>
    %255 = tpu.matmul %254, %253, %cst_19 {dimension_numbers = #tpu.dot_dimension_numbers<[1], [0], [0], [1], [0, 0, 1, 1], [], []>} : vector<4x108xf32>, vector<108x512xf32>, vector<4x512xf32> -> vector<4x512xf32>
    %c0_20 = arith.constant 0 : index
    %c0_21 = arith.constant 0 : index
    %256 = vector.load %arg6[%c0_20, %c0_21] : memref<4x1xf32, #tpu.memory_space<vmem>>, vector<4x1xf32>
    %c0_22 = arith.constant 0 : index
    %c0_23 = arith.constant 0 : index
    %257 = vector.load %arg7[%c0_22, %c0_23] : memref<4x1xf32, #tpu.memory_space<vmem>>, vector<4x1xf32>
    %cst_24 = arith.constant dense<0.000000e+00> : vector<4xf32>
    %258 = vector.multi_reduction <add>, %255, %cst_24 [1] : vector<4x512xf32> to vector<4xf32>
    %259 = vector.shape_cast %258 : vector<4xf32> to vector<4x1xf32>
    %cst_25 = arith.constant 5.120000e+02 : f32
    %260 = vector.broadcast %cst_25 : f32 to vector<4x1xf32>
    %261 = arith.divf %259, %260 : vector<4x1xf32>
    %262 = vector.broadcast %261 : vector<4x1xf32> to vector<4x512xf32>
    %263 = arith.subf %255, %262 : vector<4x512xf32>
    %264 = arith.mulf %263, %263 : vector<4x512xf32>
    %cst_26 = arith.constant dense<0.000000e+00> : vector<4xf32>
    %265 = vector.multi_reduction <add>, %264, %cst_26 [1] : vector<4x512xf32> to vector<4xf32>
    %266 = vector.shape_cast %265 : vector<4xf32> to vector<4x1xf32>
    %cst_27 = arith.constant 5.120000e+02 : f32
    %267 = vector.broadcast %cst_27 : f32 to vector<4x1xf32>
    %268 = arith.divf %266, %267 : vector<4x1xf32>
    %cst_28 = arith.constant 9.99999974E-6 : f32
    %269 = vector.broadcast %cst_28 : f32 to vector<4x1xf32>
    %270 = arith.addf %268, %269 : vector<4x1xf32>
    %271 = math.rsqrt %270 : vector<4x1xf32>
    %272 = vector.broadcast %271 : vector<4x1xf32> to vector<4x512xf32>
    %273 = arith.mulf %263, %272 : vector<4x512xf32>
    %274 = vector.broadcast %256 : vector<4x1xf32> to vector<4x512xf32>
    %275 = arith.mulf %273, %274 : vector<4x512xf32>
    %276 = vector.broadcast %257 : vector<4x1xf32> to vector<4x512xf32>
    %277 = arith.addf %275, %276 : vector<4x512xf32>
    %278 = arith.addf %3, %277 : vector<4x512xf32>
    %c0_29 = arith.constant 0 : index
    %c0_30 = arith.constant 0 : index
    %c0_31 = arith.constant 0 : index
    %279 = vector.load %arg9[%c0_29, %c0_30, %c0_31] : memref<1x4x512xf32, #tpu.memory_space<vmem>>, vector<1x4x512xf32>
    %280 = vector.shape_cast %279 : vector<1x4x512xf32> to vector<4x512xf32>
    %281 = vector.shape_cast %278 : vector<4x512xf32> to vector<1x4x512xf32>
    tpu.vector_store %arg9[%c0_29, %c0_30, %c0_31], %281 {strides = array<i32>} : memref<1x4x512xf32, #tpu.memory_space<vmem>>, vector<1x4x512xf32>,
    return
  }
  func.func @transform_0(%arg0: i32) -> (i32, i32, i32) {
    %c0_i32 = arith.constant 0 : i32
    %c0_i32_0 = arith.constant 0 : i32
    %c0_i32_1 = arith.constant 0 : i32
    return %arg0, %c0_i32, %c0_i32_0 : i32, i32, i32
  }
  func.func @transform_1(%arg0: i32) -> (i32, i32) {
    %c0_i32 = arith.constant 0 : i32
    %c0_i32_0 = arith.constant 0 : i32
    %c0_i32_1 = arith.constant 0 : i32
    return %c0_i32, %c0_i32_0 : i32, i32
  }
  func.func @transform_2(%arg0: i32) -> (i32, i32) {
    %c0_i32 = arith.constant 0 : i32
    %c0_i32_0 = arith.constant 0 : i32
    %c0_i32_1 = arith.constant 0 : i32
    return %c0_i32, %c0_i32_0 : i32, i32
  }
  func.func @transform_3(%arg0: i32) -> (i32, i32) {
    %c0_i32 = arith.constant 0 : i32
    %c0_i32_0 = arith.constant 0 : i32
    %c0_i32_1 = arith.constant 0 : i32
    return %c0_i32, %c0_i32_0 : i32, i32
  }
  func.func @transform_4(%arg0: i32) -> (i32, i32) {
    %c0_i32 = arith.constant 0 : i32
    %c0_i32_0 = arith.constant 0 : i32
    %c0_i32_1 = arith.constant 0 : i32
    return %c0_i32, %c0_i32_0 : i32, i32
  }
  func.func @transform_5(%arg0: i32) -> (i32, i32) {
    %c0_i32 = arith.constant 0 : i32
    %c0_i32_0 = arith.constant 0 : i32
    %c0_i32_1 = arith.constant 0 : i32
    return %c0_i32, %c0_i32_0 : i32, i32
  }
  func.func @transform_6(%arg0: i32) -> (i32, i32) {
    %c0_i32 = arith.constant 0 : i32
    %c0_i32_0 = arith.constant 0 : i32
    %c0_i32_1 = arith.constant 0 : i32
    return %c0_i32, %c0_i32_0 : i32, i32
  }
  func.func @transform_7(%arg0: i32) -> (i32, i32) {
    %c0_i32 = arith.constant 0 : i32
    %c0_i32_0 = arith.constant 0 : i32
    %c0_i32_1 = arith.constant 0 : i32
    return %c0_i32, %c0_i32_0 : i32, i32
  }
  func.func @transform_8(%arg0: i32) -> (i32, i32, i32) {
    %c0_i32 = arith.constant 0 : i32
    %c0_i32_0 = arith.constant 0 : i32
    %c0_i32_1 = arith.constant 0 : i32
    return %arg0, %c0_i32, %c0_i32_0 : i32, i32, i32
  }
}

</mosaic_0001>

<llo_original>
// kernel: tpu_custom_call.1
$region0: #{tpu_custom_call.1}
  #allocation0 [shape = 'u32[]', space=smem, size = 0x4, offset = 0x4, fixed_abs, tag = 'smem constant byte address 0x4 - core index']
  #allocation1 [shape = 'u32[144,128]{1,0:T(1,128)}', space=vmem, size = 0x12000, scoped, tag = 'internal scratch']
  %s0 = inlined_call_operand.hbm [shape: f32[2,4,512], index: 0, kind: input, shape index: {}]
  %s1 = inlined_call_operand.vmem [shape: f32[4,108], index: 1, kind: input, shape index: {}]
  %s2 = inlined_call_operand.vmem [shape: f32[4,108], index: 2, kind: input, shape index: {}]
  %s3 = inlined_call_operand.vmem [shape: f32[4,1], index: 3, kind: input, shape index: {}]
  %s4 = inlined_call_operand.vmem [shape: f32[4,1], index: 4, kind: input, shape index: {}]
  %s5 = inlined_call_operand.vmem [shape: f32[4,1], index: 5, kind: input, shape index: {}]
  %s6 = inlined_call_operand.vmem [shape: f32[4,1], index: 6, kind: input, shape index: {}]
  %s7 = inlined_call_operand.hbm [shape: f32[27,512], index: 7, kind: input, shape index: {}]
  %s8 = inlined_call_operand.hbm [shape: f32[2,4,512], index: 8, kind: output, shape index: {}]
  %s9 = sld [smem:[#allocation0]]
  $region73: #{tpu_custom_call.1} parent=0
    _
  %s11 = ssub.s32 1, %s9
  %s12 = scalar_select 0, %s11, %s9
  $region1: #{tpu_custom_call.1} parent=0
    #allocation2 [shape = 'u8[16384]{0}', space=vmem, size = 0x4000, scoped, tag = 'input window, operand 0']
    #allocation3 [shape = 's32[2]{0}', space=sflag, size = 0x8, scoped, tag = 'scoped memory for tpu_custom_call.1']
    #allocation4 [shape = 's32[2]{0}', space=sflag, size = 0x8, scoped, tag = 'scoped memory for tpu_custom_call.1']
    #allocation5 [shape = 'u8[65536]{0}', space=vmem, size = 0x10000, scoped, tag = 'input window, operand 7, single buffered']
    #allocation6 [shape = 's32[1]{0}', space=sflag, size = 0x4, scoped, tag = 'scoped memory for tpu_custom_call.1']
    #allocation7 [shape = 'u8[16384]{0}', space=vmem, size = 0x4000, scoped, tag = 'output window, operand 0']
    %13 = vsyncpa [#allocation3], 0
    %s14 = scalar_lea.sflag [#allocation3], 1
    %15 = vsyncpa %s14, 0
    %16 = vsyncpa [#allocation6], 0
    %17 = vsyncpa [#allocation4], 0
    %s18 = scalar_lea.sflag [#allocation4], 1
    %19 = vsyncpa %s18, 0
    loop: start=0, step=1, limit=4
    $region2: #{tpu_custom_call.1} parent=1 // loop_pre_header
      _
    $region3: #{tpu_custom_call.1} parent=1 // loop_header
      %s21 = sphi 0, %s25
      %p22 = scmp.ge.s32.totalorder %s21, 4
      %s31 = sphi 0, %s33
      %s34 = sphi 0, %s31
      %s35 = sphi 0, %s34
      %s51 = sphi 0, %s35
      %s55 = sphi 0, %s55
      %s57 = sphi 0, %s55
      %s58 = sphi 0, %s57
      %s72 = sphi 0, %s58
      %s76 = sphi 0, %s76
      %s78 = sphi 0, %s76
      %s79 = sphi 0, %s78
      %s93 = sphi 0, %s79
      %s97 = sphi 0, %s97
      %s99 = sphi 0, %s97
      %s100 = sphi 0, %s99
      %s114 = sphi 0, %s100
      %s118 = sphi 0, %s118
      %s120 = sphi 0, %s118
      %s121 = sphi 0, %s120
      %s135 = sphi 0, %s121
      %s139 = sphi 0, %s139
      %s141 = sphi 0, %s139
      %s142 = sphi 0, %s141
      %s156 = sphi 0, %s142
      %s160 = sphi 0, %s160
      %s162 = sphi 0, %s160
      %s163 = sphi 0, %s162
      %s177 = sphi 0, %s163
      %s181 = sphi 0, %s181
      %s183 = sphi 0, %s181
      %s184 = sphi 0, %s183
      %s198 = sphi 0, %s184
      %s204 = sphi 0, %s206
      %s207 = sphi 0, %s204
      %s208 = sphi 0, %s207
      %s224 = sphi 0, %s208
    $region4: #{tpu_custom_call.1} parent=1 // loop_header_branch
      %24 = sbr.rel (%p22) target = $region8
    $region5: #{tpu_custom_call.1} parent=1 // loop_body
      %s26 = ssub.s32 %s21, 1
      %s27 = ssub.s32 %s21, 2
      %s28 = sadd.s32 %s21, 1
      %s29 = ssub.s32 %s21, %s28
      %p30 = scmp.eq.s32.totalorder %s29, 0
      %s32 = sadd.s32 %s31, 1
      %s33 = scalar_select %p30, %s31, %s32
      %p36 = pneg %p30
      %p37 = scmp.eq.s32.totalorder %s21, 1
      %p38 = por %p36, %p37
      %p39 = scmp.ne.s32.totalorder %s31, %s34
      %p40 = scmp.eq.s32.totalorder %s21, 0
      %p41 = por %p39, %p40
      %p42 = scmp.ne.s32.totalorder %s31, %s34
      %p43 = scmp.eq.s32.totalorder %s26, 1
      %p44 = por %p42, %p43
      %p45 = scmp.ne.s32.totalorder %s34, %s35
      %p46 = scmp.eq.s32.totalorder %s26, 0
      %p47 = por %p45, %p46
      %p48 = scmp.ne.s32.totalorder %s34, %s35
      %p49 = scmp.eq.s32.totalorder %s27, 1
      %p50 = por %p48, %p49
      %p52 = scmp.ne.s32.totalorder %s35, %s51
      %p53 = scmp.eq.s32.totalorder %s27, 0
      %p54 = por %p52, %p53
      %s56 = sadd.s32 %s55, 1
      %p59 = scmp.eq.s32.totalorder %s21, 1
      %p60 = scmp.ne.s32.totalorder %s55, %s57
      %p61 = scmp.eq.s32.totalorder %s21, 0
      %p62 = por %p60, %p61
      %p63 = scmp.ne.s32.totalorder %s55, %s57
      %p64 = scmp.eq.s32.totalorder %s26, 1
      %p65 = por %p63, %p64
      %p66 = scmp.ne.s32.totalorder %s57, %s58
      %p67 = scmp.eq.s32.totalorder %s26, 0
      %p68 = por %p66, %p67
      %p69 = scmp.ne.s32.totalorder %s57, %s58
      %p70 = scmp.eq.s32.totalorder %s27, 1
      %p71 = por %p69, %p70
      %p73 = scmp.ne.s32.totalorder %s58, %s72
      %p74 = scmp.eq.s32.totalorder %s27, 0
      %p75 = por %p73, %p74
      %s77 = sadd.s32 %s76, 1
      %p80 = scmp.eq.s32.totalorder %s21, 1
      %p81 = scmp.ne.s32.totalorder %s76, %s78
      %p82 = scmp.eq.s32.totalorder %s21, 0
      %p83 = por %p81, %p82
      %p84 = scmp.ne.s32.totalorder %s76, %s78
      %p85 = scmp.eq.s32.totalorder %s26, 1
      %p86 = por %p84, %p85
      %p87 = scmp.ne.s32.totalorder %s78, %s79
      %p88 = scmp.eq.s32.totalorder %s26, 0
      %p89 = por %p87, %p88
      %p90 = scmp.ne.s32.totalorder %s78, %s79
      %p91 = scmp.eq.s32.totalorder %s27, 1
      %p92 = por %p90, %p91
      %p94 = scmp.ne.s32.totalorder %s79, %s93
      %p95 = scmp.eq.s32.totalorder %s27, 0
      %p96 = por %p94, %p95
      %s98 = sadd.s32 %s97, 1
      %p101 = scmp.eq.s32.totalorder %s21, 1
      %p102 = scmp.ne.s32.totalorder %s97, %s99
      %p103 = scmp.eq.s32.totalorder %s21, 0
      %p104 = por %p102, %p103
      %p105 = scmp.ne.s32.totalorder %s97, %s99
      %p106 = scmp.eq.s32.totalorder %s26, 1
      %p107 = por %p105, %p106
      %p108 = scmp.ne.s32.totalorder %s99, %s100
      %p109 = scmp.eq.s32.totalorder %s26, 0
      %p110 = por %p108, %p109
      %p111 = scmp.ne.s32.totalorder %s99, %s100
      %p112 = scmp.eq.s32.totalorder %s27, 1
      %p113 = por %p111, %p112
      %p115 = scmp.ne.s32.totalorder %s100, %s114
      %p116 = scmp.eq.s32.totalorder %s27, 0
      %p117 = por %p115, %p116
      %s119 = sadd.s32 %s118, 1
      %p122 = scmp.eq.s32.totalorder %s21, 1
      %p123 = scmp.ne.s32.totalorder %s118, %s120
      %p124 = scmp.eq.s32.totalorder %s21, 0
      %p125 = por %p123, %p124
      %p126 = scmp.ne.s32.totalorder %s118, %s120
      %p127 = scmp.eq.s32.totalorder %s26, 1
      %p128 = por %p126, %p127
      %p129 = scmp.ne.s32.totalorder %s120, %s121
      %p130 = scmp.eq.s32.totalorder %s26, 0
      %p131 = por %p129, %p130
      %p132 = scmp.ne.s32.totalorder %s120, %s121
      %p133 = scmp.eq.s32.totalorder %s27, 1
      %p134 = por %p132, %p133
      %p136 = scmp.ne.s32.totalorder %s121, %s135
      %p137 = scmp.eq.s32.totalorder %s27, 0
      %p138 = por %p136, %p137
      %s140 = sadd.s32 %s139, 1
      %p143 = scmp.eq.s32.totalorder %s21, 1
      %p144 = scmp.ne.s32.totalorder %s139, %s141
      %p145 = scmp.eq.s32.totalorder %s21, 0
      %p146 = por %p144, %p145
      %p147 = scmp.ne.s32.totalorder %s139, %s141
      %p148 = scmp.eq.s32.totalorder %s26, 1
      %p149 = por %p147, %p148
      %p150 = scmp.ne.s32.totalorder %s141, %s142
      %p151 = scmp.eq.s32.totalorder %s26, 0
      %p152 = por %p150, %p151
      %p153 = scmp.ne.s32.totalorder %s141, %s142
      %p154 = scmp.eq.s32.totalorder %s27, 1
      %p155 = por %p153, %p154
      %p157 = scmp.ne.s32.totalorder %s142, %s156
      %p158 = scmp.eq.s32.totalorder %s27, 0
      %p159 = por %p157, %p158
      %s161 = sadd.s32 %s160, 1
      %p164 = scmp.eq.s32.totalorder %s21, 1
      %p165 = scmp.ne.s32.totalorder %s160, %s162
      %p166 = scmp.eq.s32.totalorder %s21, 0
      %p167 = por %p165, %p166
      %p168 = scmp.ne.s32.totalorder %s160, %s162
      %p169 = scmp.eq.s32.totalorder %s26, 1
      %p170 = por %p168, %p169
      %p171 = scmp.ne.s32.totalorder %s162, %s163
      %p172 = scmp.eq.s32.totalorder %s26, 0
      %p173 = por %p171, %p172
      %p174 = scmp.ne.s32.totalorder %s162, %s163
      %p175 = scmp.eq.s32.totalorder %s27, 1
      %p176 = por %p174, %p175
      %p178 = scmp.ne.s32.totalorder %s163, %s177
      %p179 = scmp.eq.s32.totalorder %s27, 0
      %p180 = por %p178, %p179
      %s182 = sadd.s32 %s181, 1
      %p185 = scmp.eq.s32.totalorder %s21, 1
      %p186 = scmp.ne.s32.totalorder %s181, %s183
      %p187 = scmp.eq.s32.totalorder %s21, 0
      %p188 = por %p186, %p187
      %p189 = scmp.ne.s32.totalorder %s181, %s183
      %p190 = scmp.eq.s32.totalorder %s26, 1
      %p191 = por %p189, %p190
      %p192 = scmp.ne.s32.totalorder %s183, %s184
      %p193 = scmp.eq.s32.totalorder %s26, 0
      %p194 = por %p192, %p193
      %p195 = scmp.ne.s32.totalorder %s183, %s184
      %p196 = scmp.eq.s32.totalorder %s27, 1
      %p197 = por %p195, %p196
      %p199 = scmp.ne.s32.totalorder %s184, %s198
      %p200 = scmp.eq.s32.totalorder %s27, 0
      %p201 = por %p199, %p200
      %s202 = ssub.s32 %s21, %s28
      %p203 = scmp.eq.s32.totalorder %s202, 0
      %s205 = sadd.s32 %s204, 1
      %s206 = scalar_select %p203, %s204, %s205
      %p209 = pneg %p203
      %p210 = scmp.eq.s32.totalorder %s21, 1
      %p211 = por %p209, %p210
      %p212 = scmp.ne.s32.totalorder %s204, %s207
      %p213 = scmp.eq.s32.totalorder %s21, 0
      %p214 = por %p212, %p213
      %p215 = scmp.ne.s32.totalorder %s204, %s207
      %p216 = scmp.eq.s32.totalorder %s26, 1
      %p217 = por %p215, %p216
      %p218 = scmp.ne.s32.totalorder %s207, %s208
      %p219 = scmp.eq.s32.totalorder %s26, 0
      %p220 = por %p218, %p219
      %p221 = scmp.ne.s32.totalorder %s207, %s208
      %p222 = scmp.eq.s32.totalorder %s27, 1
      %p223 = por %p221, %p222
      %p225 = scmp.ne.s32.totalorder %s208, %s224
      %p226 = scmp.eq.s32.totalorder %s27, 0
      %p227 = por %p225, %p226
      %p228 = scmp.le.s32.totalorder 1, %s21
      %p229 = scmp.lt.s32.totalorder %s21, 3
      %p230 = pnand %p228, %p229
      %p231 = pneg %p230
      // Predicated region
      $region9: #{tpu_custom_call.1} parent=5 // pred_check
        _
      $region10: #{tpu_custom_call.1} parent=5 // pred_check_branch
        %233 = sbr.rel (%p230) target = $region12
      $region11: #{tpu_custom_call.1} parent=5 // pred_region
        %s234 = ssub.s32 %s21, 1
        // Predicated region
        $region13: #{tpu_custom_call.1} parent=11 // pred_check
          %p235 = pneg %p68
        $region14: #{tpu_custom_call.1} parent=11 // pred_check_branch
          %237 = sbr.rel (%p235) target = $region16
        $region15: #{tpu_custom_call.1} parent=11 // pred_region
          _
        $region16: #{tpu_custom_call.1} parent=11 // pred_fallthru
          _
        // Predicated region
        $region17: #{tpu_custom_call.1} parent=11 // pred_check
          %p238 = pneg %p89
        $region18: #{tpu_custom_call.1} parent=11 // pred_check_branch
          %240 = sbr.rel (%p238) target = $region20
        $region19: #{tpu_custom_call.1} parent=11 // pred_region
          _
        $region20: #{tpu_custom_call.1} parent=11 // pred_fallthru
          _
        // Predicated region
        $region21: #{tpu_custom_call.1} parent=11 // pred_check
          %p241 = pneg %p110
        $region22: #{tpu_custom_call.1} parent=11 // pred_check_branch
          %243 = sbr.rel (%p241) target = $region24
        $region23: #{tpu_custom_call.1} parent=11 // pred_region
          _
        $region24: #{tpu_custom_call.1} parent=11 // pred_fallthru
          _
        // Predicated region
        $region25: #{tpu_custom_call.1} parent=11 // pred_check
          %p244 = pneg %p131
        $region26: #{tpu_custom_call.1} parent=11 // pred_check_branch
          %246 = sbr.rel (%p244) target = $region28
        $region27: #{tpu_custom_call.1} parent=11 // pred_region
          _
        $region28: #{tpu_custom_call.1} parent=11 // pred_fallthru
          _
        // Predicated region
        $region29: #{tpu_custom_call.1} parent=11 // pred_check
          %p247 = pneg %p152
        $region30: #{tpu_custom_call.1} parent=11 // pred_check_branch
          %249 = sbr.rel (%p247) target = $region32
        $region31: #{tpu_custom_call.1} parent=11 // pred_region
          _
        $region32: #{tpu_custom_call.1} parent=11 // pred_fallthru
          _
        // Predicated region
        $region33: #{tpu_custom_call.1} parent=11 // pred_check
          %p250 = pneg %p173
        $region34: #{tpu_custom_call.1} parent=11 // pred_check_branch
          %252 = sbr.rel (%p250) target = $region36
        $region35: #{tpu_custom_call.1} parent=11 // pred_region
          _
        $region36: #{tpu_custom_call.1} parent=11 // pred_fallthru
          _
        // Predicated region
        $region37: #{tpu_custom_call.1} parent=11 // pred_check
          %p253 = pneg %p194
        $region38: #{tpu_custom_call.1} parent=11 // pred_check_branch
          %255 = sbr.rel (%p253) target = $region40
        $region39: #{tpu_custom_call.1} parent=11 // pred_region
          %s257 = ssub.s32 2048, 2048
          %258 = vsyncadd [#allocation6], %s257
          %s259 = sshll.u32 [#allocation5], 4
          %s260 = int_to_ptr.vmem [resolvable:$true] %s259
          %265 = dma.hbm_to_vmem [thread:$0]  %s7, 2048, %s260, [#allocation6], 512, 512, 32
        $region40: #{tpu_custom_call.1} parent=11 // pred_fallthru
          _
      $region12: #{tpu_custom_call.1} parent=5 // pred_fallthru
        _
      %p266 = scmp.lt.s32.totalorder %s21, 2
      // Predicated region
      $region41: #{tpu_custom_call.1} parent=5 // pred_check
        %p267 = pneg %p266
      $region42: #{tpu_custom_call.1} parent=5 // pred_check_branch
        %269 = sbr.rel (%p267) target = $region44
      $region43: #{tpu_custom_call.1} parent=5 // pred_region
        // Predicated region
        $region45: #{tpu_custom_call.1} parent=43 // pred_check
          %p270 = pneg %p41
        $region46: #{tpu_custom_call.1} parent=43 // pred_check_branch
          %272 = sbr.rel (%p270) target = $region48
        $region47: #{tpu_custom_call.1} parent=43 // pred_region
          %s273 = sand.u32 %s31, 1
          %s274 = scalar_lea.sflag [#allocation3], %s273
          %s275 = sand.u32 %s31, 1
          %s276 = smul.addr %s275, 16
          %s277 = scalar_lea.vmem [#allocation2], %s276
          %s279 = ssub.s32 256, 256
          %280 = vsyncadd %s274, %s279
          %s281 = smul.addr %s21, 4
          %s282 = smul.addr %s281, 64
          %s283 = scalar_lea.hbm %s0, %s282
          %s285 = sshll.u32 %s277, 4
          %s286 = int_to_ptr.vmem [resolvable:$true] %s285
          %288 = dma.hbm_to_vmem [thread:$0]  %s283, 256, %s286, %s274
        $region48: #{tpu_custom_call.1} parent=43 // pred_fallthru
          _
      $region44: #{tpu_custom_call.1} parent=5 // pred_fallthru
        _
      %p289 = scmp.le.s32.totalorder 1, %s21
      %p290 = scmp.lt.s32.totalorder %s21, 3
      %p291 = pnand %p289, %p290
      %p292 = pneg %p291
      // Predicated region
      $region49: #{tpu_custom_call.1} parent=5 // pred_check
        _
      $region50: #{tpu_custom_call.1} parent=5 // pred_check_branch
        %294 = sbr.rel (%p291) target = $region52
      $region51: #{tpu_custom_call.1} parent=5 // pred_region
        %s295 = ssub.s32 %s21, 1
        %s296 = sand.u32 %s34, 1
        %s297 = scalar_lea.sflag [#allocation3], %s296
        %s298 = sand.u32 %s34, 1
        %s299 = smul.addr %s298, 16
        %s300 = scalar_lea.vmem [#allocation2], %s299
        // Predicated region
        $region53: #{tpu_custom_call.1} parent=51 // pred_check
          %p301 = pneg %p47
        $region54: #{tpu_custom_call.1} parent=51 // pred_check_branch
          %303 = sbr.rel (%p301) target = $region56
        $region55: #{tpu_custom_call.1} parent=51 // pred_region
          %304 = dma.done %s297, 256
        $region56: #{tpu_custom_call.1} parent=51 // pred_fallthru
          _
        // Predicated region
        $region57: #{tpu_custom_call.1} parent=51 // pred_check
          %p305 = pneg %p194
        $region58: #{tpu_custom_call.1} parent=51 // pred_check_branch
          %307 = sbr.rel (%p305) target = $region60
        $region59: #{tpu_custom_call.1} parent=51 // pred_region
          %308 = dma.done [#allocation6], 2048
        $region60: #{tpu_custom_call.1} parent=51 // pred_fallthru
          _
        %s309 = sand.u32 %s34, 1
        %s310 = scalar_lea.sflag [#allocation3], %s309
        %s311 = sand.u32 %s34, 1
        %s312 = smul.addr %s311, 16
        %s313 = scalar_lea.vmem [#allocation2], %s312
        %p314 = pneg %p47
        %p315 = pneg %p44
        %p316 = pneg %p68
        %p317 = pneg %p65
        %p318 = pneg %p89
        %p319 = pneg %p86
        %p320 = pneg %p110
        %p321 = pneg %p107
        %p322 = pneg %p131
        %p323 = pneg %p128
        %p324 = pneg %p152
        %p325 = pneg %p149
        %p326 = pneg %p173
        %p327 = pneg %p170
        %p328 = pneg %p194
        %p329 = pneg %p191
        %p330 = pneg %p220
        %p331 = pneg %p217
        %s332 = sand.u32 %s207, 1
        %s333 = scalar_lea.sflag [#allocation4], %s332
        %s334 = sand.u32 %s207, 1
        %s335 = smul.addr %s334, 16
        %s336 = scalar_lea.vmem [#allocation7], %s335
        %v337 = vld [vmem:[#allocation5] sm:$0xff]
        %v338 = vld [vmem:[#allocation5 + $0x8] sm:$0xff]
        %v339 = vld [vmem:[#allocation5 + $0x10] sm:$0xff]
        %v340 = vld [vmem:[#allocation5 + $0x18] sm:$0xff]
        %v341 = vld [vmem:[#allocation5 + $0x20] sm:$0xff]
        %v342 = vld [vmem:[#allocation5 + $0x28] sm:$0xff]
        %v343 = vld [vmem:[#allocation5 + $0x30] sm:$0xff]
        %v344 = vld [vmem:[#allocation5 + $0x38] sm:$0xff]
        %v345 = vld [vmem:[#allocation5 + $0x40] sm:$0xff]
        %v346 = vld [vmem:[#allocation5 + $0x48] sm:$0xff]
        %v347 = vld [vmem:[#allocation5 + $0x50] sm:$0xff]
        %v348 = vld [vmem:[#allocation5 + $0x58] sm:$0xff]
        %v349 = vld [vmem:[#allocation5 + $0x60] sm:$0x7]
        %v350 = vld [vmem:[#allocation5 + $0x68] sm:$0x7]
        %v351 = vld [vmem:[#allocation5 + $0x70] sm:$0x7]
        %v352 = vld [vmem:[#allocation5 + $0x78] sm:$0x7]
        %v353 = vld [vmem:[%s300] sm:$0xff]
        %v354 = vld [vmem:[%s300 + $0x8] sm:$0xff]
        %v357 = vcombine.high %v353, %v353
        %v358 = vcombine.high %v354, %v354
        %359 = vrot.lane.b32.xlu0 %v353, 73
        %v360 = vpop.permute.xlu0 %359
        %361 = vrot.lane.b32.xlu0 %v357, 73
        %v362 = vpop.permute.xlu0 %361
        %363 = vrot.lane.b32.xlu0 %v354, 73
        %v364 = vpop.permute.xlu0 %363
        %365 = vrot.lane.b32.xlu0 %v358, 73
        %v366 = vpop.permute.xlu0 %365
        %vm367 = vcmask 596992
        %v368 = vsel %vm367, %v360, %v362
        %v369 = vsel %vm367, %v362, %v364
        %v370 = vsel %vm367, %v364, %v366
        %v376 = vsel %vm367, 0.0, %v360
        %v377 = vsel %vm367, %v366, 0.0
        %v378 = vlaneseq
        %v379 = vshrl.u32 %v378, 7
        %v380 = vsub.s32 0, %v379
        %v381 = vrot.slane %v337, %v380
        %v382 = vlaneseq
        %v383 = vshrl.u32 %v382, 7
        %v384 = vsub.s32 0, %v383
        %v385 = vrot.slane %v338, %v384
        %v386 = vlaneseq
        %v387 = vshrl.u32 %v386, 7
        %v388 = vsub.s32 0, %v387
        %v389 = vrot.slane %v339, %v388
        %v390 = vlaneseq
        %v391 = vshrl.u32 %v390, 7
        %v392 = vsub.s32 0, %v391
        %v393 = vrot.slane %v340, %v392
        %v394 = vmul.f32 %v376, %v381
        %v395 = vmul.f32 %v368, %v385
        %v396 = vmul.f32 %v369, %v389
        %v397 = vmul.f32 %v370, %v393
        %v398 = vlaneseq
        %v399 = vshrl.u32 %v398, 7
        %v400 = vsub.s32 1, %v399
        %v401 = vrot.slane %v337, %v400
        %v402 = vlaneseq
        %v403 = vshrl.u32 %v402, 7
        %v404 = vsub.s32 1, %v403
        %v405 = vrot.slane %v338, %v404
        %v406 = vlaneseq
        %v407 = vshrl.u32 %v406, 7
        %v408 = vsub.s32 1, %v407
        %v409 = vrot.slane %v339, %v408
        %v410 = vlaneseq
        %v411 = vshrl.u32 %v410, 7
        %v412 = vsub.s32 1, %v411
        %v413 = vrot.slane %v340, %v412
        %418 = vrot.lane.b32.xlu0 %v401, 1
        %v419 = vpop.permute.xlu0 %418
        %420 = vrot.lane.b32.xlu0 %v405, 1
        %v421 = vpop.permute.xlu0 %420
        %422 = vrot.lane.b32.xlu0 %v409, 1
        %v423 = vpop.permute.xlu0 %422
        %424 = vrot.lane.b32.xlu0 %v413, 1
        %v425 = vpop.permute.xlu0 %424
        %vm426 = vcmask 7168
        %v427 = vsel %vm426, %v419, %v421
        %v428 = vsel %vm426, %v421, %v423
        %v429 = vsel %vm426, %v423, %v425
        %v435 = vmul.f32 %v376, %v419
        %v436 = vmul.f32 %v368, %v427
        %v437 = vmul.f32 %v369, %v428
        %v438 = vmul.f32 %v370, %v429
        %v439 = vmul.f32 %v377, %v425
        %v440 = vlaneseq
        %v441 = vshrl.u32 %v440, 7
        %v442 = vsub.s32 2, %v441
        %v443 = vrot.slane %v337, %v442
        %v444 = vlaneseq
        %v445 = vshrl.u32 %v444, 7
        %v446 = vsub.s32 2, %v445
        %v447 = vrot.slane %v338, %v446
        %v448 = vlaneseq
        %v449 = vshrl.u32 %v448, 7
        %v450 = vsub.s32 2, %v449
        %v451 = vrot.slane %v339, %v450
        %v452 = vlaneseq
        %v453 = vshrl.u32 %v452, 7
        %v454 = vsub.s32 2, %v453
        %v455 = vrot.slane %v340, %v454
        %460 = vrot.lane.b32.xlu0 %v443, 2
        %v461 = vpop.permute.xlu0 %460
        %462 = vrot.lane.b32.xlu0 %v447, 2
        %v463 = vpop.permute.xlu0 %462
        %464 = vrot.lane.b32.xlu0 %v451, 2
        %v465 = vpop.permute.xlu0 %464
        %466 = vrot.lane.b32.xlu0 %v455, 2
        %v467 = vpop.permute.xlu0 %466
        %vm468 = vcmask 15360
        %v469 = vsel %vm468, %v461, %v463
        %v470 = vsel %vm468, %v463, %v465
        %v471 = vsel %vm468, %v465, %v467
        %v477 = vmul.f32 %v376, %v461
        %v478 = vmul.f32 %v368, %v469
        %v479 = vmul.f32 %v369, %v470
        %v480 = vmul.f32 %v370, %v471
        %v481 = vmul.f32 %v377, %v467
        %v482 = vlaneseq
        %v483 = vshrl.u32 %v482, 7
        %v484 = vsub.s32 3, %v483
        %v485 = vrot.slane %v337, %v484
        %v486 = vlaneseq
        %v487 = vshrl.u32 %v486, 7
        %v488 = vsub.s32 3, %v487
        %v489 = vrot.slane %v338, %v488
        %v490 = vlaneseq
        %v491 = vshrl.u32 %v490, 7
        %v492 = vsub.s32 3, %v491
        %v493 = vrot.slane %v339, %v492
        %v494 = vlaneseq
        %v495 = vshrl.u32 %v494, 7
        %v496 = vsub.s32 3, %v495
        %v497 = vrot.slane %v340, %v496
        %502 = vrot.lane.b32.xlu0 %v485, 8
        %v503 = vpop.permute.xlu0 %502
        %504 = vrot.lane.b32.xlu0 %v489, 8
        %v505 = vpop.permute.xlu0 %504
        %506 = vrot.lane.b32.xlu0 %v493, 8
        %v507 = vpop.permute.xlu0 %506
        %508 = vrot.lane.b32.xlu0 %v497, 8
        %v509 = vpop.permute.xlu0 %508
        %vm510 = vcmask 64512
        %v511 = vsel %vm510, %v503, %v505
        %v512 = vsel %vm510, %v505, %v507
        %v513 = vsel %vm510, %v507, %v509
        %v519 = vmul.f32 %v376, %v503
        %v520 = vmul.f32 %v368, %v511
        %v521 = vmul.f32 %v369, %v512
        %v522 = vmul.f32 %v370, %v513
        %v523 = vmul.f32 %v377, %v509
        %v524 = vlaneseq
        %v525 = vshrl.u32 %v524, 7
        %v526 = vsub.s32 4, %v525
        %v527 = vrot.slane %v337, %v526
        %v528 = vlaneseq
        %v529 = vshrl.u32 %v528, 7
        %v530 = vsub.s32 4, %v529
        %v531 = vrot.slane %v338, %v530
        %v532 = vlaneseq
        %v533 = vshrl.u32 %v532, 7
        %v534 = vsub.s32 4, %v533
        %v535 = vrot.slane %v339, %v534
        %v536 = vlaneseq
        %v537 = vshrl.u32 %v536, 7
        %v538 = vsub.s32 4, %v537
        %v539 = vrot.slane %v340, %v538
        %544 = vrot.lane.b32.xlu0 %v527, 9
        %v545 = vpop.permute.xlu0 %544
        %546 = vrot.lane.b32.xlu0 %v531, 9
        %v547 = vpop.permute.xlu0 %546
        %548 = vrot.lane.b32.xlu0 %v535, 9
        %v549 = vpop.permute.xlu0 %548
        %550 = vrot.lane.b32.xlu0 %v539, 9
        %v551 = vpop.permute.xlu0 %550
        %vm552 = vcmask 72704
        %v553 = vsel %vm552, %v545, %v547
        %v554 = vsel %vm552, %v547, %v549
        %v555 = vsel %vm552, %v549, %v551
        %v561 = vmul.f32 %v376, %v545
        %v562 = vmul.f32 %v368, %v553
        %v563 = vmul.f32 %v369, %v554
        %v564 = vmul.f32 %v370, %v555
        %v565 = vmul.f32 %v377, %v551
        %v566 = vlaneseq
        %v567 = vshrl.u32 %v566, 7
        %v568 = vsub.s32 5, %v567
        %v569 = vrot.slane %v337, %v568
        %v570 = vlaneseq
        %v571 = vshrl.u32 %v570, 7
        %v572 = vsub.s32 5, %v571
        %v573 = vrot.slane %v338, %v572
        %v574 = vlaneseq
        %v575 = vshrl.u32 %v574, 7
        %v576 = vsub.s32 5, %v575
        %v577 = vrot.slane %v339, %v576
        %v578 = vlaneseq
        %v579 = vshrl.u32 %v578, 7
        %v580 = vsub.s32 5, %v579
        %v581 = vrot.slane %v340, %v580
        %586 = vrot.lane.b32.xlu0 %v569, 10
        %v587 = vpop.permute.xlu0 %586
        %588 = vrot.lane.b32.xlu0 %v573, 10
        %v589 = vpop.permute.xlu0 %588
        %590 = vrot.lane.b32.xlu0 %v577, 10
        %v591 = vpop.permute.xlu0 %590
        %592 = vrot.lane.b32.xlu0 %v581, 10
        %v593 = vpop.permute.xlu0 %592
        %vm594 = vcmask 80896
        %v595 = vsel %vm594, %v587, %v589
        %v596 = vsel %vm594, %v589, %v591
        %v597 = vsel %vm594, %v591, %v593
        %v603 = vmul.f32 %v376, %v587
        %v604 = vmul.f32 %v368, %v595
        %v605 = vmul.f32 %v369, %v596
        %v606 = vmul.f32 %v370, %v597
        %v607 = vmul.f32 %v377, %v593
        %v608 = vlaneseq
        %v609 = vshrl.u32 %v608, 7
        %v610 = vsub.s32 6, %v609
        %v611 = vrot.slane %v337, %v610
        %v612 = vlaneseq
        %v613 = vshrl.u32 %v612, 7
        %v614 = vsub.s32 6, %v613
        %v615 = vrot.slane %v338, %v614
        %v616 = vlaneseq
        %v617 = vshrl.u32 %v616, 7
        %v618 = vsub.s32 6, %v617
        %v619 = vrot.slane %v339, %v618
        %v620 = vlaneseq
        %v621 = vshrl.u32 %v620, 7
        %v622 = vsub.s32 6, %v621
        %v623 = vrot.slane %v340, %v622
        %628 = vrot.lane.b32.xlu0 %v611, 16
        %v629 = vpop.permute.xlu0 %628
        %630 = vrot.lane.b32.xlu0 %v615, 16
        %v631 = vpop.permute.xlu0 %630
        %632 = vrot.lane.b32.xlu0 %v619, 16
        %v633 = vpop.permute.xlu0 %632
        %634 = vrot.lane.b32.xlu0 %v623, 16
        %v635 = vpop.permute.xlu0 %634
        %vm636 = vcmask 130048
        %v637 = vsel %vm636, %v629, %v631
        %v638 = vsel %vm636, %v631, %v633
        %v639 = vsel %vm636, %v633, %v635
        %v645 = vmul.f32 %v376, %v629
        %v646 = vmul.f32 %v368, %v637
        %v647 = vmul.f32 %v369, %v638
        %v648 = vmul.f32 %v370, %v639
        %v649 = vmul.f32 %v377, %v635
        %v650 = vlaneseq
        %v651 = vshrl.u32 %v650, 7
        %v652 = vsub.s32 7, %v651
        %v653 = vrot.slane %v337, %v652
        %v654 = vlaneseq
        %v655 = vshrl.u32 %v654, 7
        %v656 = vsub.s32 7, %v655
        %v657 = vrot.slane %v338, %v656
        %v658 = vlaneseq
        %v659 = vshrl.u32 %v658, 7
        %v660 = vsub.s32 7, %v659
        %v661 = vrot.slane %v339, %v660
        %v662 = vlaneseq
        %v663 = vshrl.u32 %v662, 7
        %v664 = vsub.s32 7, %v663
        %v665 = vrot.slane %v340, %v664
        %670 = vrot.lane.b32.xlu0 %v653, 17
        %v671 = vpop.permute.xlu0 %670
        %672 = vrot.lane.b32.xlu0 %v657, 17
        %v673 = vpop.permute.xlu0 %672
        %674 = vrot.lane.b32.xlu0 %v661, 17
        %v675 = vpop.permute.xlu0 %674
        %676 = vrot.lane.b32.xlu0 %v665, 17
        %v677 = vpop.permute.xlu0 %676
        %vm678 = vcmask 138240
        %v679 = vsel %vm678, %v671, %v673
        %v680 = vsel %vm678, %v673, %v675
        %v681 = vsel %vm678, %v675, %v677
        %v687 = vmul.f32 %v376, %v671
        %v688 = vmul.f32 %v368, %v679
        %v689 = vmul.f32 %v369, %v680
        %v690 = vmul.f32 %v370, %v681
        %v691 = vmul.f32 %v377, %v677
        %v692 = vlaneseq
        %v693 = vshrl.u32 %v692, 7
        %v694 = vsub.s32 0, %v693
        %v695 = vrot.slane %v341, %v694
        %v696 = vlaneseq
        %v697 = vshrl.u32 %v696, 7
        %v698 = vsub.s32 0, %v697
        %v699 = vrot.slane %v342, %v698
        %v700 = vlaneseq
        %v701 = vshrl.u32 %v700, 7
        %v702 = vsub.s32 0, %v701
        %v703 = vrot.slane %v343, %v702
        %v704 = vlaneseq
        %v705 = vshrl.u32 %v704, 7
        %v706 = vsub.s32 0, %v705
        %v707 = vrot.slane %v344, %v706
        %712 = vrot.lane.b32.xlu0 %v695, 18
        %v713 = vpop.permute.xlu0 %712
        %714 = vrot.lane.b32.xlu0 %v699, 18
        %v715 = vpop.permute.xlu0 %714
        %716 = vrot.lane.b32.xlu0 %v703, 18
        %v717 = vpop.permute.xlu0 %716
        %718 = vrot.lane.b32.xlu0 %v707, 18
        %v719 = vpop.permute.xlu0 %718
        %vm720 = vcmask 146432
        %v721 = vsel %vm720, %v713, %v715
        %v722 = vsel %vm720, %v715, %v717
        %v723 = vsel %vm720, %v717, %v719
        %v729 = vmul.f32 %v376, %v713
        %v730 = vmul.f32 %v368, %v721
        %v731 = vmul.f32 %v369, %v722
        %v732 = vmul.f32 %v370, %v723
        %v733 = vmul.f32 %v377, %v719
        %v734 = vlaneseq
        %v735 = vshrl.u32 %v734, 7
        %v736 = vsub.s32 1, %v735
        %v737 = vrot.slane %v341, %v736
        %v738 = vlaneseq
        %v739 = vshrl.u32 %v738, 7
        %v740 = vsub.s32 1, %v739
        %v741 = vrot.slane %v342, %v740
        %v742 = vlaneseq
        %v743 = vshrl.u32 %v742, 7
        %v744 = vsub.s32 1, %v743
        %v745 = vrot.slane %v343, %v744
        %v746 = vlaneseq
        %v747 = vshrl.u32 %v746, 7
        %v748 = vsub.s32 1, %v747
        %v749 = vrot.slane %v344, %v748
        %754 = vrot.lane.b32.xlu0 %v737, 64
        %v755 = vpop.permute.xlu0 %754
        %756 = vrot.lane.b32.xlu0 %v741, 64
        %v757 = vpop.permute.xlu0 %756
        %758 = vrot.lane.b32.xlu0 %v745, 64
        %v759 = vpop.permute.xlu0 %758
        %760 = vrot.lane.b32.xlu0 %v749, 64
        %v761 = vpop.permute.xlu0 %760
        %vm762 = vcmask 523264
        %v763 = vsel %vm762, %v755, %v757
        %v764 = vsel %vm762, %v757, %v759
        %v765 = vsel %vm762, %v759, %v761
        %v771 = vmul.f32 %v376, %v755
        %v772 = vmul.f32 %v368, %v763
        %v773 = vmul.f32 %v369, %v764
        %v774 = vmul.f32 %v370, %v765
        %v775 = vmul.f32 %v377, %v761
        %v776 = vlaneseq
        %v777 = vshrl.u32 %v776, 7
        %v778 = vsub.s32 2, %v777
        %v779 = vrot.slane %v341, %v778
        %v780 = vlaneseq
        %v781 = vshrl.u32 %v780, 7
        %v782 = vsub.s32 2, %v781
        %v783 = vrot.slane %v342, %v782
        %v784 = vlaneseq
        %v785 = vshrl.u32 %v784, 7
        %v786 = vsub.s32 2, %v785
        %v787 = vrot.slane %v343, %v786
        %v788 = vlaneseq
        %v789 = vshrl.u32 %v788, 7
        %v790 = vsub.s32 2, %v789
        %v791 = vrot.slane %v344, %v790
        %796 = vrot.lane.b32.xlu0 %v779, 65
        %v797 = vpop.permute.xlu0 %796
        %798 = vrot.lane.b32.xlu0 %v783, 65
        %v799 = vpop.permute.xlu0 %798
        %800 = vrot.lane.b32.xlu0 %v787, 65
        %v801 = vpop.permute.xlu0 %800
        %802 = vrot.lane.b32.xlu0 %v791, 65
        %v803 = vpop.permute.xlu0 %802
        %vm804 = vcmask 531456
        %v805 = vsel %vm804, %v797, %v799
        %v806 = vsel %vm804, %v799, %v801
        %v807 = vsel %vm804, %v801, %v803
        %v813 = vmul.f32 %v376, %v797
        %v814 = vmul.f32 %v368, %v805
        %v815 = vmul.f32 %v369, %v806
        %v816 = vmul.f32 %v370, %v807
        %v817 = vmul.f32 %v377, %v803
        %v818 = vlaneseq
        %v819 = vshrl.u32 %v818, 7
        %v820 = vsub.s32 3, %v819
        %v821 = vrot.slane %v341, %v820
        %v822 = vlaneseq
        %v823 = vshrl.u32 %v822, 7
        %v824 = vsub.s32 3, %v823
        %v825 = vrot.slane %v342, %v824
        %v826 = vlaneseq
        %v827 = vshrl.u32 %v826, 7
        %v828 = vsub.s32 3, %v827
        %v829 = vrot.slane %v343, %v828
        %v830 = vlaneseq
        %v831 = vshrl.u32 %v830, 7
        %v832 = vsub.s32 3, %v831
        %v833 = vrot.slane %v344, %v832
        %838 = vrot.lane.b32.xlu0 %v821, 66
        %v839 = vpop.permute.xlu0 %838
        %840 = vrot.lane.b32.xlu0 %v825, 66
        %v841 = vpop.permute.xlu0 %840
        %842 = vrot.lane.b32.xlu0 %v829, 66
        %v843 = vpop.permute.xlu0 %842
        %844 = vrot.lane.b32.xlu0 %v833, 66
        %v845 = vpop.permute.xlu0 %844
        %vm846 = vcmask 539648
        %v847 = vsel %vm846, %v839, %v841
        %v848 = vsel %vm846, %v841, %v843
        %v849 = vsel %vm846, %v843, %v845
        %v855 = vmul.f32 %v376, %v839
        %v856 = vmul.f32 %v368, %v847
        %v857 = vmul.f32 %v369, %v848
        %v858 = vmul.f32 %v370, %v849
        %v859 = vmul.f32 %v377, %v845
        %v860 = vlaneseq
        %v861 = vshrl.u32 %v860, 7
        %v862 = vsub.s32 4, %v861
        %v863 = vrot.slane %v341, %v862
        %v864 = vlaneseq
        %v865 = vshrl.u32 %v864, 7
        %v866 = vsub.s32 4, %v865
        %v867 = vrot.slane %v342, %v866
        %v868 = vlaneseq
        %v869 = vshrl.u32 %v868, 7
        %v870 = vsub.s32 4, %v869
        %v871 = vrot.slane %v343, %v870
        %v872 = vlaneseq
        %v873 = vshrl.u32 %v872, 7
        %v874 = vsub.s32 4, %v873
        %v875 = vrot.slane %v344, %v874
        %880 = vrot.lane.b32.xlu0 %v863, 72
        %v881 = vpop.permute.xlu0 %880
        %882 = vrot.lane.b32.xlu0 %v867, 72
        %v883 = vpop.permute.xlu0 %882
        %884 = vrot.lane.b32.xlu0 %v871, 72
        %v885 = vpop.permute.xlu0 %884
        %886 = vrot.lane.b32.xlu0 %v875, 72
        %v887 = vpop.permute.xlu0 %886
        %vm888 = vcmask 588800
        %v889 = vsel %vm888, %v881, %v883
        %v890 = vsel %vm888, %v883, %v885
        %v891 = vsel %vm888, %v885, %v887
        %v897 = vmul.f32 %v376, %v881
        %v898 = vmul.f32 %v368, %v889
        %v899 = vmul.f32 %v369, %v890
        %v900 = vmul.f32 %v370, %v891
        %v901 = vmul.f32 %v377, %v887
        %v902 = vlaneseq
        %v903 = vshrl.u32 %v902, 7
        %v904 = vsub.s32 5, %v903
        %v905 = vrot.slane %v341, %v904
        %v906 = vlaneseq
        %v907 = vshrl.u32 %v906, 7
        %v908 = vsub.s32 5, %v907
        %v909 = vrot.slane %v342, %v908
        %v910 = vlaneseq
        %v911 = vshrl.u32 %v910, 7
        %v912 = vsub.s32 5, %v911
        %v913 = vrot.slane %v343, %v912
        %v914 = vlaneseq
        %v915 = vshrl.u32 %v914, 7
        %v916 = vsub.s32 5, %v915
        %v917 = vrot.slane %v344, %v916
        %922 = vrot.lane.b32.xlu0 %v905, 73
        %v923 = vpop.permute.xlu0 %922
        %924 = vrot.lane.b32.xlu0 %v909, 73
        %v925 = vpop.permute.xlu0 %924
        %926 = vrot.lane.b32.xlu0 %v913, 73
        %v927 = vpop.permute.xlu0 %926
        %928 = vrot.lane.b32.xlu0 %v917, 73
        %v929 = vpop.permute.xlu0 %928
        %v930 = vsel %vm367, %v923, %v925
        %v931 = vsel %vm367, %v925, %v927
        %v932 = vsel %vm367, %v927, %v929
        %v938 = vmul.f32 %v376, %v923
        %v939 = vmul.f32 %v368, %v930
        %v940 = vmul.f32 %v369, %v931
        %v941 = vmul.f32 %v370, %v932
        %v942 = vmul.f32 %v377, %v929
        %v943 = vlaneseq
        %v944 = vshrl.u32 %v943, 7
        %v945 = vsub.s32 6, %v944
        %v946 = vrot.slane %v341, %v945
        %v947 = vlaneseq
        %v948 = vshrl.u32 %v947, 7
        %v949 = vsub.s32 6, %v948
        %v950 = vrot.slane %v342, %v949
        %v951 = vlaneseq
        %v952 = vshrl.u32 %v951, 7
        %v953 = vsub.s32 6, %v952
        %v954 = vrot.slane %v343, %v953
        %v955 = vlaneseq
        %v956 = vshrl.u32 %v955, 7
        %v957 = vsub.s32 6, %v956
        %v958 = vrot.slane %v344, %v957
        %963 = vrot.lane.b32.xlu0 %v946, 74
        %v964 = vpop.permute.xlu0 %963
        %965 = vrot.lane.b32.xlu0 %v950, 74
        %v966 = vpop.permute.xlu0 %965
        %967 = vrot.lane.b32.xlu0 %v954, 74
        %v968 = vpop.permute.xlu0 %967
        %969 = vrot.lane.b32.xlu0 %v958, 74
        %v970 = vpop.permute.xlu0 %969
        %vm971 = vcmask 605184
        %v972 = vsel %vm971, %v964, %v966
        %v973 = vsel %vm971, %v966, %v968
        %v974 = vsel %vm971, %v968, %v970
        %v980 = vmul.f32 %v376, %v964
        %v981 = vmul.f32 %v368, %v972
        %v982 = vmul.f32 %v369, %v973
        %v983 = vmul.f32 %v370, %v974
        %v984 = vmul.f32 %v377, %v970
        %v985 = vlaneseq
        %v986 = vshrl.u32 %v985, 7
        %v987 = vsub.s32 7, %v986
        %v988 = vrot.slane %v341, %v987
        %v989 = vlaneseq
        %v990 = vshrl.u32 %v989, 7
        %v991 = vsub.s32 7, %v990
        %v992 = vrot.slane %v342, %v991
        %v993 = vlaneseq
        %v994 = vshrl.u32 %v993, 7
        %v995 = vsub.s32 7, %v994
        %v996 = vrot.slane %v343, %v995
        %v997 = vlaneseq
        %v998 = vshrl.u32 %v997, 7
        %v999 = vsub.s32 7, %v998
        %v1000 = vrot.slane %v344, %v999
        %1005 = vrot.lane.b32.xlu0 %v988, 80
        %v1006 = vpop.permute.xlu0 %1005
        %1007 = vrot.lane.b32.xlu0 %v992, 80
        %v1008 = vpop.permute.xlu0 %1007
        %1009 = vrot.lane.b32.xlu0 %v996, 80
        %v1010 = vpop.permute.xlu0 %1009
        %1011 = vrot.lane.b32.xlu0 %v1000, 80
        %v1012 = vpop.permute.xlu0 %1011
        %vm1013 = vcmask 654336
        %v1014 = vsel %vm1013, %v1006, %v1008
        %v1015 = vsel %vm1013, %v1008, %v1010
        %v1016 = vsel %vm1013, %v1010, %v1012
        %v1022 = vmul.f32 %v376, %v1006
        %v1023 = vmul.f32 %v368, %v1014
        %v1024 = vmul.f32 %v369, %v1015
        %v1025 = vmul.f32 %v370, %v1016
        %v1026 = vmul.f32 %v377, %v1012
        %v1027 = vlaneseq
        %v1028 = vshrl.u32 %v1027, 7
        %v1029 = vsub.s32 0, %v1028
        %v1030 = vrot.slane %v345, %v1029
        %v1031 = vlaneseq
        %v1032 = vshrl.u32 %v1031, 7
        %v1033 = vsub.s32 0, %v1032
        %v1034 = vrot.slane %v346, %v1033
        %v1035 = vlaneseq
        %v1036 = vshrl.u32 %v1035, 7
        %v1037 = vsub.s32 0, %v1036
        %v1038 = vrot.slane %v347, %v1037
        %v1039 = vlaneseq
        %v1040 = vshrl.u32 %v1039, 7
        %v1041 = vsub.s32 0, %v1040
        %v1042 = vrot.slane %v348, %v1041
        %1047 = vrot.lane.b32.xlu0 %v1030, 81
        %v1048 = vpop.permute.xlu0 %1047
        %1049 = vrot.lane.b32.xlu0 %v1034, 81
        %v1050 = vpop.permute.xlu0 %1049
        %1051 = vrot.lane.b32.xlu0 %v1038, 81
        %v1052 = vpop.permute.xlu0 %1051
        %1053 = vrot.lane.b32.xlu0 %v1042, 81
        %v1054 = vpop.permute.xlu0 %1053
        %vm1055 = vcmask 662528
        %v1056 = vsel %vm1055, %v1048, %v1050
        %v1057 = vsel %vm1055, %v1050, %v1052
        %v1058 = vsel %vm1055, %v1052, %v1054
        %v1064 = vmul.f32 %v376, %v1048
        %v1065 = vmul.f32 %v368, %v1056
        %v1066 = vmul.f32 %v369, %v1057
        %v1067 = vmul.f32 %v370, %v1058
        %v1068 = vmul.f32 %v377, %v1054
        %v1069 = vlaneseq
        %v1070 = vshrl.u32 %v1069, 7
        %v1071 = vsub.s32 1, %v1070
        %v1072 = vrot.slane %v345, %v1071
        %v1073 = vlaneseq
        %v1074 = vshrl.u32 %v1073, 7
        %v1075 = vsub.s32 1, %v1074
        %v1076 = vrot.slane %v346, %v1075
        %v1077 = vlaneseq
        %v1078 = vshrl.u32 %v1077, 7
        %v1079 = vsub.s32 1, %v1078
        %v1080 = vrot.slane %v347, %v1079
        %v1081 = vlaneseq
        %v1082 = vshrl.u32 %v1081, 7
        %v1083 = vsub.s32 1, %v1082
        %v1084 = vrot.slane %v348, %v1083
        %1089 = vrot.lane.b32.xlu0 %v1072, 82
        %v1090 = vpop.permute.xlu0 %1089
        %1091 = vrot.lane.b32.xlu0 %v1076, 82
        %v1092 = vpop.permute.xlu0 %1091
        %1093 = vrot.lane.b32.xlu0 %v1080, 82
        %v1094 = vpop.permute.xlu0 %1093
        %1095 = vrot.lane.b32.xlu0 %v1084, 82
        %v1096 = vpop.permute.xlu0 %1095
        %vm1097 = vcmask 670720
        %v1098 = vsel %vm1097, %v1090, %v1092
        %v1099 = vsel %vm1097, %v1092, %v1094
        %v1100 = vsel %vm1097, %v1094, %v1096
        %v1106 = vmul.f32 %v376, %v1090
        %v1107 = vmul.f32 %v368, %v1098
        %v1108 = vmul.f32 %v369, %v1099
        %v1109 = vmul.f32 %v370, %v1100
        %v1110 = vmul.f32 %v377, %v1096
        %v1111 = vlaneseq
        %v1112 = vshrl.u32 %v1111, 7
        %v1113 = vsub.s32 2, %v1112
        %v1114 = vrot.slane %v345, %v1113
        %v1115 = vlaneseq
        %v1116 = vshrl.u32 %v1115, 7
        %v1117 = vsub.s32 2, %v1116
        %v1118 = vrot.slane %v346, %v1117
        %v1119 = vlaneseq
        %v1120 = vshrl.u32 %v1119, 7
        %v1121 = vsub.s32 2, %v1120
        %v1122 = vrot.slane %v347, %v1121
        %v1123 = vlaneseq
        %v1124 = vshrl.u32 %v1123, 7
        %v1125 = vsub.s32 2, %v1124
        %v1126 = vrot.slane %v348, %v1125
        %v1127 = vmul.f32 %v368, %v1114
        %v1128 = vmul.f32 %v369, %v1118
        %v1129 = vmul.f32 %v370, %v1122
        %v1130 = vmul.f32 %v377, %v1126
        %v1131 = vlaneseq
        %v1132 = vshrl.u32 %v1131, 7
        %v1133 = vsub.s32 3, %v1132
        %v1134 = vrot.slane %v345, %v1133
        %v1135 = vlaneseq
        %v1136 = vshrl.u32 %v1135, 7
        %v1137 = vsub.s32 3, %v1136
        %v1138 = vrot.slane %v346, %v1137
        %v1139 = vlaneseq
        %v1140 = vshrl.u32 %v1139, 7
        %v1141 = vsub.s32 3, %v1140
        %v1142 = vrot.slane %v347, %v1141
        %v1143 = vlaneseq
        %v1144 = vshrl.u32 %v1143, 7
        %v1145 = vsub.s32 3, %v1144
        %v1146 = vrot.slane %v348, %v1145
        %1151 = vrot.lane.b32.xlu0 %v1134, 1
        %v1152 = vpop.permute.xlu0 %1151
        %1153 = vrot.lane.b32.xlu0 %v1138, 1
        %v1154 = vpop.permute.xlu0 %1153
        %1155 = vrot.lane.b32.xlu0 %v1142, 1
        %v1156 = vpop.permute.xlu0 %1155
        %1157 = vrot.lane.b32.xlu0 %v1146, 1
        %v1158 = vpop.permute.xlu0 %1157
        %v1159 = vsel %vm426, %v1152, %v1154
        %v1160 = vsel %vm426, %v1154, %v1156
        %v1161 = vsel %vm426, %v1156, %v1158
        %v1167 = vmul.f32 %v368, %v1152
        %v1168 = vmul.f32 %v369, %v1159
        %v1169 = vmul.f32 %v370, %v1160
        %v1170 = vmul.f32 %v377, %v1161
        %v1171 = vmul.f32 %v1158, 0.0
        %v1172 = vlaneseq
        %v1173 = vshrl.u32 %v1172, 7
        %v1174 = vsub.s32 4, %v1173
        %v1175 = vrot.slane %v345, %v1174
        %v1176 = vlaneseq
        %v1177 = vshrl.u32 %v1176, 7
        %v1178 = vsub.s32 4, %v1177
        %v1179 = vrot.slane %v346, %v1178
        %v1180 = vlaneseq
        %v1181 = vshrl.u32 %v1180, 7
        %v1182 = vsub.s32 4, %v1181
        %v1183 = vrot.slane %v347, %v1182
        %v1184 = vlaneseq
        %v1185 = vshrl.u32 %v1184, 7
        %v1186 = vsub.s32 4, %v1185
        %v1187 = vrot.slane %v348, %v1186
        %1192 = vrot.lane.b32.xlu0 %v1175, 2
        %v1193 = vpop.permute.xlu0 %1192
        %1194 = vrot.lane.b32.xlu0 %v1179, 2
        %v1195 = vpop.permute.xlu0 %1194
        %1196 = vrot.lane.b32.xlu0 %v1183, 2
        %v1197 = vpop.permute.xlu0 %1196
        %1198 = vrot.lane.b32.xlu0 %v1187, 2
        %v1199 = vpop.permute.xlu0 %1198
        %v1200 = vsel %vm468, %v1193, %v1195
        %v1201 = vsel %vm468, %v1195, %v1197
        %v1202 = vsel %vm468, %v1197, %v1199
        %v1208 = vmul.f32 %v368, %v1193
        %v1209 = vmul.f32 %v369, %v1200
        %v1210 = vmul.f32 %v370, %v1201
        %v1211 = vmul.f32 %v377, %v1202
        %v1212 = vmul.f32 %v1199, 0.0
        %v1213 = vlaneseq
        %v1214 = vshrl.u32 %v1213, 7
        %v1215 = vsub.s32 5, %v1214
        %v1216 = vrot.slane %v345, %v1215
        %v1217 = vlaneseq
        %v1218 = vshrl.u32 %v1217, 7
        %v1219 = vsub.s32 5, %v1218
        %v1220 = vrot.slane %v346, %v1219
        %v1221 = vlaneseq
        %v1222 = vshrl.u32 %v1221, 7
        %v1223 = vsub.s32 5, %v1222
        %v1224 = vrot.slane %v347, %v1223
        %v1225 = vlaneseq
        %v1226 = vshrl.u32 %v1225, 7
        %v1227 = vsub.s32 5, %v1226
        %v1228 = vrot.slane %v348, %v1227
        %1233 = vrot.lane.b32.xlu0 %v1216, 8
        %v1234 = vpop.permute.xlu0 %1233
        %1235 = vrot.lane.b32.xlu0 %v1220, 8
        %v1236 = vpop.permute.xlu0 %1235
        %1237 = vrot.lane.b32.xlu0 %v1224, 8
        %v1238 = vpop.permute.xlu0 %1237
        %1239 = vrot.lane.b32.xlu0 %v1228, 8
        %v1240 = vpop.permute.xlu0 %1239
        %v1241 = vsel %vm510, %v1234, %v1236
        %v1242 = vsel %vm510, %v1236, %v1238
        %v1243 = vsel %vm510, %v1238, %v1240
        %v1249 = vmul.f32 %v368, %v1234
        %v1250 = vmul.f32 %v369, %v1241
        %v1251 = vmul.f32 %v370, %v1242
        %v1252 = vmul.f32 %v377, %v1243
        %v1253 = vmul.f32 %v1240, 0.0
        %v1254 = vlaneseq
        %v1255 = vshrl.u32 %v1254, 7
        %v1256 = vsub.s32 6, %v1255
        %v1257 = vrot.slane %v345, %v1256
        %v1258 = vlaneseq
        %v1259 = vshrl.u32 %v1258, 7
        %v1260 = vsub.s32 6, %v1259
        %v1261 = vrot.slane %v346, %v1260
        %v1262 = vlaneseq
        %v1263 = vshrl.u32 %v1262, 7
        %v1264 = vsub.s32 6, %v1263
        %v1265 = vrot.slane %v347, %v1264
        %v1266 = vlaneseq
        %v1267 = vshrl.u32 %v1266, 7
        %v1268 = vsub.s32 6, %v1267
        %v1269 = vrot.slane %v348, %v1268
        %1274 = vrot.lane.b32.xlu0 %v1257, 9
        %v1275 = vpop.permute.xlu0 %1274
        %1276 = vrot.lane.b32.xlu0 %v1261, 9
        %v1277 = vpop.permute.xlu0 %1276
        %1278 = vrot.lane.b32.xlu0 %v1265, 9
        %v1279 = vpop.permute.xlu0 %1278
        %1280 = vrot.lane.b32.xlu0 %v1269, 9
        %v1281 = vpop.permute.xlu0 %1280
        %v1282 = vsel %vm552, %v1275, %v1277
        %v1283 = vsel %vm552, %v1277, %v1279
        %v1284 = vsel %vm552, %v1279, %v1281
        %v1290 = vmul.f32 %v368, %v1275
        %v1291 = vmul.f32 %v369, %v1282
        %v1292 = vmul.f32 %v370, %v1283
        %v1293 = vmul.f32 %v377, %v1284
        %v1294 = vmul.f32 %v1281, 0.0
        %v1295 = vlaneseq
        %v1296 = vshrl.u32 %v1295, 7
        %v1297 = vsub.s32 7, %v1296
        %v1298 = vrot.slane %v345, %v1297
        %v1299 = vlaneseq
        %v1300 = vshrl.u32 %v1299, 7
        %v1301 = vsub.s32 7, %v1300
        %v1302 = vrot.slane %v346, %v1301
        %v1303 = vlaneseq
        %v1304 = vshrl.u32 %v1303, 7
        %v1305 = vsub.s32 7, %v1304
        %v1306 = vrot.slane %v347, %v1305
        %v1307 = vlaneseq
        %v1308 = vshrl.u32 %v1307, 7
        %v1309 = vsub.s32 7, %v1308
        %v1310 = vrot.slane %v348, %v1309
        %1315 = vrot.lane.b32.xlu0 %v1298, 10
        %v1316 = vpop.permute.xlu0 %1315
        %1317 = vrot.lane.b32.xlu0 %v1302, 10
        %v1318 = vpop.permute.xlu0 %1317
        %1319 = vrot.lane.b32.xlu0 %v1306, 10
        %v1320 = vpop.permute.xlu0 %1319
        %1321 = vrot.lane.b32.xlu0 %v1310, 10
        %v1322 = vpop.permute.xlu0 %1321
        %v1323 = vsel %vm594, %v1316, %v1318
        %v1324 = vsel %vm594, %v1318, %v1320
        %v1325 = vsel %vm594, %v1320, %v1322
        %v1331 = vmul.f32 %v368, %v1316
        %v1332 = vmul.f32 %v369, %v1323
        %v1333 = vmul.f32 %v370, %v1324
        %v1334 = vmul.f32 %v377, %v1325
        %v1335 = vmul.f32 %v1322, 0.0
        %v1336 = vlaneseq
        %v1337 = vshrl.u32 %v1336, 7
        %v1338 = vsub.s32 0, %v1337
        %v1339 = vrot.slane %v349, %v1338
        %v1340 = vlaneseq
        %v1341 = vshrl.u32 %v1340, 7
        %v1342 = vsub.s32 0, %v1341
        %v1343 = vrot.slane %v350, %v1342
        %v1344 = vlaneseq
        %v1345 = vshrl.u32 %v1344, 7
        %v1346 = vsub.s32 0, %v1345
        %v1347 = vrot.slane %v351, %v1346
        %v1348 = vlaneseq
        %v1349 = vshrl.u32 %v1348, 7
        %v1350 = vsub.s32 0, %v1349
        %v1351 = vrot.slane %v352, %v1350
        %1356 = vrot.lane.b32.xlu0 %v1339, 16
        %v1357 = vpop.permute.xlu0 %1356
        %1358 = vrot.lane.b32.xlu0 %v1343, 16
        %v1359 = vpop.permute.xlu0 %1358
        %1360 = vrot.lane.b32.xlu0 %v1347, 16
        %v1361 = vpop.permute.xlu0 %1360
        %1362 = vrot.lane.b32.xlu0 %v1351, 16
        %v1363 = vpop.permute.xlu0 %1362
        %v1364 = vsel %vm636, %v1357, %v1359
        %v1365 = vsel %vm636, %v1359, %v1361
        %v1366 = vsel %vm636, %v1361, %v1363
        %v1372 = vmul.f32 %v368, %v1357
        %v1373 = vmul.f32 %v369, %v1364
        %v1374 = vmul.f32 %v370, %v1365
        %v1375 = vmul.f32 %v377, %v1366
        %v1376 = vmul.f32 %v1363, 0.0
        %v1377 = vlaneseq
        %v1378 = vshrl.u32 %v1377, 7
        %v1379 = vsub.s32 1, %v1378
        %v1380 = vrot.slane %v349, %v1379
        %v1381 = vlaneseq
        %v1382 = vshrl.u32 %v1381, 7
        %v1383 = vsub.s32 1, %v1382
        %v1384 = vrot.slane %v350, %v1383
        %v1385 = vlaneseq
        %v1386 = vshrl.u32 %v1385, 7
        %v1387 = vsub.s32 1, %v1386
        %v1388 = vrot.slane %v351, %v1387
        %v1389 = vlaneseq
        %v1390 = vshrl.u32 %v1389, 7
        %v1391 = vsub.s32 1, %v1390
        %v1392 = vrot.slane %v352, %v1391
        %1397 = vrot.lane.b32.xlu0 %v1380, 17
        %v1398 = vpop.permute.xlu0 %1397
        %1399 = vrot.lane.b32.xlu0 %v1384, 17
        %v1400 = vpop.permute.xlu0 %1399
        %1401 = vrot.lane.b32.xlu0 %v1388, 17
        %v1402 = vpop.permute.xlu0 %1401
        %1403 = vrot.lane.b32.xlu0 %v1392, 17
        %v1404 = vpop.permute.xlu0 %1403
        %v1405 = vsel %vm678, %v1398, %v1400
        %v1406 = vsel %vm678, %v1400, %v1402
        %v1407 = vsel %vm678, %v1402, %v1404
        %v1413 = vmul.f32 %v368, %v1398
        %v1414 = vmul.f32 %v369, %v1405
        %v1415 = vmul.f32 %v370, %v1406
        %v1416 = vmul.f32 %v377, %v1407
        %v1417 = vmul.f32 %v1404, 0.0
        %v1418 = vlaneseq
        %v1419 = vshrl.u32 %v1418, 7
        %v1420 = vsub.s32 2, %v1419
        %v1421 = vrot.slane %v349, %v1420
        %v1422 = vlaneseq
        %v1423 = vshrl.u32 %v1422, 7
        %v1424 = vsub.s32 2, %v1423
        %v1425 = vrot.slane %v350, %v1424
        %v1426 = vlaneseq
        %v1427 = vshrl.u32 %v1426, 7
        %v1428 = vsub.s32 2, %v1427
        %v1429 = vrot.slane %v351, %v1428
        %v1430 = vlaneseq
        %v1431 = vshrl.u32 %v1430, 7
        %v1432 = vsub.s32 2, %v1431
        %v1433 = vrot.slane %v352, %v1432
        %1438 = vrot.lane.b32.xlu0 %v1421, 18
        %v1439 = vpop.permute.xlu0 %1438
        %1440 = vrot.lane.b32.xlu0 %v1425, 18
        %v1441 = vpop.permute.xlu0 %1440
        %1442 = vrot.lane.b32.xlu0 %v1429, 18
        %v1443 = vpop.permute.xlu0 %1442
        %1444 = vrot.lane.b32.xlu0 %v1433, 18
        %v1445 = vpop.permute.xlu0 %1444
        %v1446 = vsel %vm720, %v1439, %v1441
        %v1447 = vsel %vm720, %v1441, %v1443
        %v1448 = vsel %vm720, %v1443, %v1445
        %v1454 = vmul.f32 %v368, %v1439
        %v1455 = vmul.f32 %v369, %v1446
        %v1456 = vmul.f32 %v370, %v1447
        %v1457 = vmul.f32 %v377, %v1448
        %v1458 = vmul.f32 %v1445, 0.0
        %v1464 = vrot.slane %v435, 4
        %v1465 = vrot.slane %v436, 4
        %v1466 = vrot.slane %v437, 4
        %v1467 = vrot.slane %v438, 4
        %v1468 = vrot.slane %v439, 4
        %1469 = vrot.lane.b32.xlu0 %v1464, 127
        %v1470 = vpop.permute.xlu0 %1469
        %1471 = vrot.lane.b32.xlu0 %v1465, 127
        %v1472 = vpop.permute.xlu0 %1471
        %1473 = vrot.lane.b32.xlu0 %v1466, 127
        %v1474 = vpop.permute.xlu0 %1473
        %1475 = vrot.lane.b32.xlu0 %v1467, 127
        %v1476 = vpop.permute.xlu0 %1475
        %1477 = vrot.lane.b32.xlu0 %v1468, 127
        %v1478 = vpop.permute.xlu0 %1477
        %vm1479 = vcmask 1039360
        %v1480 = vsel %vm1479, %v1470, %v1472
        %v1481 = vsel %vm1479, %v1472, %v1474
        %v1482 = vsel %vm1479, %v1474, %v1476
        %v1483 = vsel %vm1479, %v1476, %v1478
        %1493 = vrot.lane.b32.xlu0 %v477, 126
        %v1494 = vpop.permute.xlu0 %1493
        %1495 = vrot.lane.b32.xlu0 %v478, 126
        %v1496 = vpop.permute.xlu0 %1495
        %1497 = vrot.lane.b32.xlu0 %v479, 126
        %v1498 = vpop.permute.xlu0 %1497
        %1499 = vrot.lane.b32.xlu0 %v480, 126
        %v1500 = vpop.permute.xlu0 %1499
        %1501 = vrot.lane.b32.xlu0 %v481, 126
        %v1502 = vpop.permute.xlu0 %1501
        %vm1503 = vcmask 1031168
        %v1504 = vsel %vm1503, %v1494, %v1496
        %v1505 = vsel %vm1503, %v1496, %v1498
        %v1506 = vsel %vm1503, %v1498, %v1500
        %v1507 = vsel %vm1503, %v1500, %v1502
        %v1517 = vrot.slane %v519, 4
        %v1518 = vrot.slane %v520, 4
        %v1519 = vrot.slane %v521, 4
        %v1520 = vrot.slane %v522, 4
        %v1521 = vrot.slane %v523, 4
        %1522 = vrot.lane.b32.xlu0 %v1517, 120
        %v1523 = vpop.permute.xlu0 %1522
        %1524 = vrot.lane.b32.xlu0 %v1518, 120
        %v1525 = vpop.permute.xlu0 %1524
        %1526 = vrot.lane.b32.xlu0 %v1519, 120
        %v1527 = vpop.permute.xlu0 %1526
        %1528 = vrot.lane.b32.xlu0 %v1520, 120
        %v1529 = vpop.permute.xlu0 %1528
        %1530 = vrot.lane.b32.xlu0 %v1521, 120
        %v1531 = vpop.permute.xlu0 %1530
        %vm1532 = vcmask 982016
        %v1533 = vsel %vm1532, %v1523, %v1525
        %v1534 = vsel %vm1532, %v1525, %v1527
        %v1535 = vsel %vm1532, %v1527, %v1529
        %v1536 = vsel %vm1532, %v1529, %v1531
        %1546 = vrot.lane.b32.xlu0 %v561, 119
        %v1547 = vpop.permute.xlu0 %1546
        %1548 = vrot.lane.b32.xlu0 %v562, 119
        %v1549 = vpop.permute.xlu0 %1548
        %1550 = vrot.lane.b32.xlu0 %v563, 119
        %v1551 = vpop.permute.xlu0 %1550
        %1552 = vrot.lane.b32.xlu0 %v564, 119
        %v1553 = vpop.permute.xlu0 %1552
        %1554 = vrot.lane.b32.xlu0 %v565, 119
        %v1555 = vpop.permute.xlu0 %1554
        %vm1556 = vcmask 973824
        %v1557 = vsel %vm1556, %v1547, %v1549
        %v1558 = vsel %vm1556, %v1549, %v1551
        %v1559 = vsel %vm1556, %v1551, %v1553
        %v1560 = vsel %vm1556, %v1553, %v1555
        %v1570 = vrot.slane %v603, 4
        %v1571 = vrot.slane %v604, 4
        %v1572 = vrot.slane %v605, 4
        %v1573 = vrot.slane %v606, 4
        %v1574 = vrot.slane %v607, 4
        %1575 = vrot.lane.b32.xlu0 %v1570, 118
        %v1576 = vpop.permute.xlu0 %1575
        %1577 = vrot.lane.b32.xlu0 %v1571, 118
        %v1578 = vpop.permute.xlu0 %1577
        %1579 = vrot.lane.b32.xlu0 %v1572, 118
        %v1580 = vpop.permute.xlu0 %1579
        %1581 = vrot.lane.b32.xlu0 %v1573, 118
        %v1582 = vpop.permute.xlu0 %1581
        %1583 = vrot.lane.b32.xlu0 %v1574, 118
        %v1584 = vpop.permute.xlu0 %1583
        %vm1585 = vcmask 965632
        %v1586 = vsel %vm1585, %v1576, %v1578
        %v1587 = vsel %vm1585, %v1578, %v1580
        %v1588 = vsel %vm1585, %v1580, %v1582
        %v1589 = vsel %vm1585, %v1582, %v1584
        %1599 = vrot.lane.b32.xlu0 %v645, 112
        %v1600 = vpop.permute.xlu0 %1599
        %1601 = vrot.lane.b32.xlu0 %v646, 112
        %v1602 = vpop.permute.xlu0 %1601
        %1603 = vrot.lane.b32.xlu0 %v647, 112
        %v1604 = vpop.permute.xlu0 %1603
        %1605 = vrot.lane.b32.xlu0 %v648, 112
        %v1606 = vpop.permute.xlu0 %1605
        %1607 = vrot.lane.b32.xlu0 %v649, 112
        %v1608 = vpop.permute.xlu0 %1607
        %vm1609 = vcmask 916480
        %v1610 = vsel %vm1609, %v1600, %v1602
        %v1611 = vsel %vm1609, %v1602, %v1604
        %v1612 = vsel %vm1609, %v1604, %v1606
        %v1613 = vsel %vm1609, %v1606, %v1608
        %v1623 = vrot.slane %v687, 4
        %v1624 = vrot.slane %v688, 4
        %v1625 = vrot.slane %v689, 4
        %v1626 = vrot.slane %v690, 4
        %v1627 = vrot.slane %v691, 4
        %1628 = vrot.lane.b32.xlu0 %v1623, 111
        %v1629 = vpop.permute.xlu0 %1628
        %1630 = vrot.lane.b32.xlu0 %v1624, 111
        %v1631 = vpop.permute.xlu0 %1630
        %1632 = vrot.lane.b32.xlu0 %v1625, 111
        %v1633 = vpop.permute.xlu0 %1632
        %1634 = vrot.lane.b32.xlu0 %v1626, 111
        %v1635 = vpop.permute.xlu0 %1634
        %1636 = vrot.lane.b32.xlu0 %v1627, 111
        %v1637 = vpop.permute.xlu0 %1636
        %vm1638 = vcmask 908288
        %v1639 = vsel %vm1638, %v1629, %v1631
        %v1640 = vsel %vm1638, %v1631, %v1633
        %v1641 = vsel %vm1638, %v1633, %v1635
        %v1642 = vsel %vm1638, %v1635, %v1637
        %1652 = vrot.lane.b32.xlu0 %v729, 110
        %v1653 = vpop.permute.xlu0 %1652
        %1654 = vrot.lane.b32.xlu0 %v730, 110
        %v1655 = vpop.permute.xlu0 %1654
        %1656 = vrot.lane.b32.xlu0 %v731, 110
        %v1657 = vpop.permute.xlu0 %1656
        %1658 = vrot.lane.b32.xlu0 %v732, 110
        %v1659 = vpop.permute.xlu0 %1658
        %1660 = vrot.lane.b32.xlu0 %v733, 110
        %v1661 = vpop.permute.xlu0 %1660
        %vm1662 = vcmask 900096
        %v1663 = vsel %vm1662, %v1653, %v1655
        %v1664 = vsel %vm1662, %v1655, %v1657
        %v1665 = vsel %vm1662, %v1657, %v1659
        %v1666 = vsel %vm1662, %v1659, %v1661
        %v1676 = vrot.slane %v771, 4
        %v1677 = vrot.slane %v772, 4
        %v1678 = vrot.slane %v773, 4
        %v1679 = vrot.slane %v774, 4
        %v1680 = vrot.slane %v775, 4
        %1681 = vrot.lane.b32.xlu0 %v1676, 64
        %v1682 = vpop.permute.xlu0 %1681
        %1683 = vrot.lane.b32.xlu0 %v1677, 64
        %v1684 = vpop.permute.xlu0 %1683
        %1685 = vrot.lane.b32.xlu0 %v1678, 64
        %v1686 = vpop.permute.xlu0 %1685
        %1687 = vrot.lane.b32.xlu0 %v1679, 64
        %v1688 = vpop.permute.xlu0 %1687
        %1689 = vrot.lane.b32.xlu0 %v1680, 64
        %v1690 = vpop.permute.xlu0 %1689
        %v1691 = vsel %vm762, %v1682, %v1684
        %v1692 = vsel %vm762, %v1684, %v1686
        %v1693 = vsel %vm762, %v1686, %v1688
        %v1694 = vsel %vm762, %v1688, %v1690
        %1704 = vrot.lane.b32.xlu0 %v813, 63
        %v1705 = vpop.permute.xlu0 %1704
        %1706 = vrot.lane.b32.xlu0 %v814, 63
        %v1707 = vpop.permute.xlu0 %1706
        %1708 = vrot.lane.b32.xlu0 %v815, 63
        %v1709 = vpop.permute.xlu0 %1708
        %1710 = vrot.lane.b32.xlu0 %v816, 63
        %v1711 = vpop.permute.xlu0 %1710
        %1712 = vrot.lane.b32.xlu0 %v817, 63
        %v1713 = vpop.permute.xlu0 %1712
        %vm1714 = vcmask 515072
        %v1715 = vsel %vm1714, %v1705, %v1707
        %v1716 = vsel %vm1714, %v1707, %v1709
        %v1717 = vsel %vm1714, %v1709, %v1711
        %v1718 = vsel %vm1714, %v1711, %v1713
        %v1728 = vrot.slane %v855, 4
        %v1729 = vrot.slane %v856, 4
        %v1730 = vrot.slane %v857, 4
        %v1731 = vrot.slane %v858, 4
        %v1732 = vrot.slane %v859, 4
        %1733 = vrot.lane.b32.xlu0 %v1728, 62
        %v1734 = vpop.permute.xlu0 %1733
        %1735 = vrot.lane.b32.xlu0 %v1729, 62
        %v1736 = vpop.permute.xlu0 %1735
        %1737 = vrot.lane.b32.xlu0 %v1730, 62
        %v1738 = vpop.permute.xlu0 %1737
        %1739 = vrot.lane.b32.xlu0 %v1731, 62
        %v1740 = vpop.permute.xlu0 %1739
        %1741 = vrot.lane.b32.xlu0 %v1732, 62
        %v1742 = vpop.permute.xlu0 %1741
        %vm1743 = vcmask 506880
        %v1744 = vsel %vm1743, %v1734, %v1736
        %v1745 = vsel %vm1743, %v1736, %v1738
        %v1746 = vsel %vm1743, %v1738, %v1740
        %v1747 = vsel %vm1743, %v1740, %v1742
        %1757 = vrot.lane.b32.xlu0 %v897, 56
        %v1758 = vpop.permute.xlu0 %1757
        %1759 = vrot.lane.b32.xlu0 %v898, 56
        %v1760 = vpop.permute.xlu0 %1759
        %1761 = vrot.lane.b32.xlu0 %v899, 56
        %v1762 = vpop.permute.xlu0 %1761
        %1763 = vrot.lane.b32.xlu0 %v900, 56
        %v1764 = vpop.permute.xlu0 %1763
        %1765 = vrot.lane.b32.xlu0 %v901, 56
        %v1766 = vpop.permute.xlu0 %1765
        %vm1767 = vcmask 457728
        %v1768 = vsel %vm1767, %v1758, %v1760
        %v1769 = vsel %vm1767, %v1760, %v1762
        %v1770 = vsel %vm1767, %v1762, %v1764
        %v1771 = vsel %vm1767, %v1764, %v1766
        %v1781 = vrot.slane %v938, 4
        %v1782 = vrot.slane %v939, 4
        %v1783 = vrot.slane %v940, 4
        %v1784 = vrot.slane %v941, 4
        %v1785 = vrot.slane %v942, 4
        %1786 = vrot.lane.b32.xlu0 %v1781, 55
        %v1787 = vpop.permute.xlu0 %1786
        %1788 = vrot.lane.b32.xlu0 %v1782, 55
        %v1789 = vpop.permute.xlu0 %1788
        %1790 = vrot.lane.b32.xlu0 %v1783, 55
        %v1791 = vpop.permute.xlu0 %1790
        %1792 = vrot.lane.b32.xlu0 %v1784, 55
        %v1793 = vpop.permute.xlu0 %1792
        %1794 = vrot.lane.b32.xlu0 %v1785, 55
        %v1795 = vpop.permute.xlu0 %1794
        %vm1796 = vcmask 449536
        %v1797 = vsel %vm1796, %v1787, %v1789
        %v1798 = vsel %vm1796, %v1789, %v1791
        %v1799 = vsel %vm1796, %v1791, %v1793
        %v1800 = vsel %vm1796, %v1793, %v1795
        %1810 = vrot.lane.b32.xlu0 %v980, 54
        %v1811 = vpop.permute.xlu0 %1810
        %1812 = vrot.lane.b32.xlu0 %v981, 54
        %v1813 = vpop.permute.xlu0 %1812
        %1814 = vrot.lane.b32.xlu0 %v982, 54
        %v1815 = vpop.permute.xlu0 %1814
        %1816 = vrot.lane.b32.xlu0 %v983, 54
        %v1817 = vpop.permute.xlu0 %1816
        %1818 = vrot.lane.b32.xlu0 %v984, 54
        %v1819 = vpop.permute.xlu0 %1818
        %vm1820 = vcmask 441344
        %v1821 = vsel %vm1820, %v1811, %v1813
        %v1822 = vsel %vm1820, %v1813, %v1815
        %v1823 = vsel %vm1820, %v1815, %v1817
        %v1824 = vsel %vm1820, %v1817, %v1819
        %v1834 = vrot.slane %v1022, 4
        %v1835 = vrot.slane %v1023, 4
        %v1836 = vrot.slane %v1024, 4
        %v1837 = vrot.slane %v1025, 4
        %v1838 = vrot.slane %v1026, 4
        %1839 = vrot.lane.b32.xlu0 %v1834, 48
        %v1840 = vpop.permute.xlu0 %1839
        %1841 = vrot.lane.b32.xlu0 %v1835, 48
        %v1842 = vpop.permute.xlu0 %1841
        %1843 = vrot.lane.b32.xlu0 %v1836, 48
        %v1844 = vpop.permute.xlu0 %1843
        %1845 = vrot.lane.b32.xlu0 %v1837, 48
        %v1846 = vpop.permute.xlu0 %1845
        %1847 = vrot.lane.b32.xlu0 %v1838, 48
        %v1848 = vpop.permute.xlu0 %1847
        %vm1849 = vcmask 392192
        %v1850 = vsel %vm1849, %v1840, %v1842
        %v1851 = vsel %vm1849, %v1842, %v1844
        %v1852 = vsel %vm1849, %v1844, %v1846
        %v1853 = vsel %vm1849, %v1846, %v1848
        %vm1858 = vcmask 1043456
        %v1859 = vsel %vm1858, %v394, %v1480
        %v1860 = vsel %vm1858, %v395, %v1481
        %v1861 = vsel %vm1858, %v396, %v1482
        %v1862 = vsel %vm1858, %v397, %v1483
        %v1863 = vsel %vm1858, %v1504, %v1533
        %v1864 = vsel %vm1858, %v1505, %v1534
        %v1865 = vsel %vm1858, %v1506, %v1535
        %v1866 = vsel %vm1858, %v1507, %v1536
        %v1867 = vsel %vm1858, %v1557, %v1586
        %v1868 = vsel %vm1858, %v1558, %v1587
        %v1869 = vsel %vm1858, %v1559, %v1588
        %v1870 = vsel %vm1858, %v1560, %v1589
        %v1871 = vsel %vm1858, %v1610, %v1639
        %v1872 = vsel %vm1858, %v1611, %v1640
        %v1873 = vsel %vm1858, %v1612, %v1641
        %v1874 = vsel %vm1858, %v1613, %v1642
        %v1875 = vsel %vm1858, %v1663, %v1691
        %v1876 = vsel %vm1858, %v1664, %v1692
        %v1877 = vsel %vm1858, %v1665, %v1693
        %v1878 = vsel %vm1858, %v1666, %v1694
        %v1879 = vsel %vm1858, %v1715, %v1744
        %v1880 = vsel %vm1858, %v1716, %v1745
        %v1881 = vsel %vm1858, %v1717, %v1746
        %v1882 = vsel %vm1858, %v1718, %v1747
        %v1883 = vsel %vm1858, %v1768, %v1797
        %v1884 = vsel %vm1858, %v1769, %v1798
        %v1885 = vsel %vm1858, %v1770, %v1799
        %v1886 = vsel %vm1858, %v1771, %v1800
        %v1887 = vsel %vm1858, %v1821, %v1850
        %v1888 = vsel %vm1858, %v1822, %v1851
        %v1889 = vsel %vm1858, %v1823, %v1852
        %v1890 = vsel %vm1858, %v1824, %v1853
        %v1896 = vrot.slane %v1106, 4
        %v1897 = vrot.slane %v1107, 4
        %v1898 = vrot.slane %v1108, 4
        %v1899 = vrot.slane %v1109, 4
        %v1900 = vrot.slane %v1110, 4
        %1901 = vrot.lane.b32.xlu0 %v1896, 127
        %v1902 = vpop.permute.xlu0 %1901
        %1903 = vrot.lane.b32.xlu0 %v1897, 127
        %v1904 = vpop.permute.xlu0 %1903
        %1905 = vrot.lane.b32.xlu0 %v1898, 127
        %v1906 = vpop.permute.xlu0 %1905
        %1907 = vrot.lane.b32.xlu0 %v1899, 127
        %v1908 = vpop.permute.xlu0 %1907
        %1909 = vrot.lane.b32.xlu0 %v1900, 127
        %v1910 = vpop.permute.xlu0 %1909
        %v1911 = vsel %vm1479, %v1902, %v1904
        %v1912 = vsel %vm1479, %v1904, %v1906
        %v1913 = vsel %vm1479, %v1906, %v1908
        %v1914 = vsel %vm1479, %v1908, %v1910
        %1924 = vrot.lane.b32.xlu0 %v1127, 81
        %v1925 = vpop.permute.xlu0 %1924
        %1926 = vrot.lane.b32.xlu0 %v1128, 81
        %v1927 = vpop.permute.xlu0 %1926
        %1928 = vrot.lane.b32.xlu0 %v1129, 81
        %v1929 = vpop.permute.xlu0 %1928
        %1930 = vrot.lane.b32.xlu0 %v1130, 81
        %v1931 = vpop.permute.xlu0 %1930
        %v1932 = vsel %vm1055, %v1925, %v1927
        %v1933 = vsel %vm1055, %v1927, %v1929
        %v1934 = vsel %vm1055, %v1929, %v1931
        %v1945 = vrot.slane %v1167, 4
        %v1946 = vrot.slane %v1168, 4
        %v1947 = vrot.slane %v1169, 4
        %v1948 = vrot.slane %v1170, 4
        %v1949 = vrot.slane %v1171, 4
        %1950 = vrot.lane.b32.xlu0 %v1945, 80
        %v1951 = vpop.permute.xlu0 %1950
        %1952 = vrot.lane.b32.xlu0 %v1946, 80
        %v1953 = vpop.permute.xlu0 %1952
        %1954 = vrot.lane.b32.xlu0 %v1947, 80
        %v1955 = vpop.permute.xlu0 %1954
        %1956 = vrot.lane.b32.xlu0 %v1948, 80
        %v1957 = vpop.permute.xlu0 %1956
        %1958 = vrot.lane.b32.xlu0 %v1949, 80
        %v1959 = vpop.permute.xlu0 %1958
        %v1960 = vsel %vm1013, %v1951, %v1953
        %v1961 = vsel %vm1013, %v1953, %v1955
        %v1962 = vsel %vm1013, %v1955, %v1957
        %v1963 = vsel %vm1013, %v1957, %v1959
        %1974 = vrot.lane.b32.xlu0 %v1208, 79
        %v1975 = vpop.permute.xlu0 %1974
        %1976 = vrot.lane.b32.xlu0 %v1209, 79
        %v1977 = vpop.permute.xlu0 %1976
        %1978 = vrot.lane.b32.xlu0 %v1210, 79
        %v1979 = vpop.permute.xlu0 %1978
        %1980 = vrot.lane.b32.xlu0 %v1211, 79
        %v1981 = vpop.permute.xlu0 %1980
        %1982 = vrot.lane.b32.xlu0 %v1212, 79
        %v1983 = vpop.permute.xlu0 %1982
        %vm1984 = vcmask 646144
        %v1985 = vsel %vm1984, %v1975, %v1977
        %v1986 = vsel %vm1984, %v1977, %v1979
        %v1987 = vsel %vm1984, %v1979, %v1981
        %v1988 = vsel %vm1984, %v1981, %v1983
        %v1999 = vrot.slane %v1249, 4
        %v2000 = vrot.slane %v1250, 4
        %v2001 = vrot.slane %v1251, 4
        %v2002 = vrot.slane %v1252, 4
        %v2003 = vrot.slane %v1253, 4
        %2004 = vrot.lane.b32.xlu0 %v1999, 73
        %v2005 = vpop.permute.xlu0 %2004
        %2006 = vrot.lane.b32.xlu0 %v2000, 73
        %v2007 = vpop.permute.xlu0 %2006
        %2008 = vrot.lane.b32.xlu0 %v2001, 73
        %v2009 = vpop.permute.xlu0 %2008
        %2010 = vrot.lane.b32.xlu0 %v2002, 73
        %v2011 = vpop.permute.xlu0 %2010
        %2012 = vrot.lane.b32.xlu0 %v2003, 73
        %v2013 = vpop.permute.xlu0 %2012
        %v2014 = vsel %vm367, %v2005, %v2007
        %v2015 = vsel %vm367, %v2007, %v2009
        %v2016 = vsel %vm367, %v2009, %v2011
        %v2017 = vsel %vm367, %v2011, %v2013
        %2028 = vrot.lane.b32.xlu0 %v1290, 72
        %v2029 = vpop.permute.xlu0 %2028
        %2030 = vrot.lane.b32.xlu0 %v1291, 72
        %v2031 = vpop.permute.xlu0 %2030
        %2032 = vrot.lane.b32.xlu0 %v1292, 72
        %v2033 = vpop.permute.xlu0 %2032
        %2034 = vrot.lane.b32.xlu0 %v1293, 72
        %v2035 = vpop.permute.xlu0 %2034
        %2036 = vrot.lane.b32.xlu0 %v1294, 72
        %v2037 = vpop.permute.xlu0 %2036
        %v2038 = vsel %vm888, %v2029, %v2031
        %v2039 = vsel %vm888, %v2031, %v2033
        %v2040 = vsel %vm888, %v2033, %v2035
        %v2041 = vsel %vm888, %v2035, %v2037
        %v2052 = vrot.slane %v1331, 4
        %v2053 = vrot.slane %v1332, 4
        %v2054 = vrot.slane %v1333, 4
        %v2055 = vrot.slane %v1334, 4
        %v2056 = vrot.slane %v1335, 4
        %2057 = vrot.lane.b32.xlu0 %v2052, 71
        %v2058 = vpop.permute.xlu0 %2057
        %2059 = vrot.lane.b32.xlu0 %v2053, 71
        %v2060 = vpop.permute.xlu0 %2059
        %2061 = vrot.lane.b32.xlu0 %v2054, 71
        %v2062 = vpop.permute.xlu0 %2061
        %2063 = vrot.lane.b32.xlu0 %v2055, 71
        %v2064 = vpop.permute.xlu0 %2063
        %2065 = vrot.lane.b32.xlu0 %v2056, 71
        %v2066 = vpop.permute.xlu0 %2065
        %vm2067 = vcmask 580608
        %v2068 = vsel %vm2067, %v2058, %v2060
        %v2069 = vsel %vm2067, %v2060, %v2062
        %v2070 = vsel %vm2067, %v2062, %v2064
        %v2071 = vsel %vm2067, %v2064, %v2066
        %2082 = vrot.lane.b32.xlu0 %v1372, 65
        %v2083 = vpop.permute.xlu0 %2082
        %2084 = vrot.lane.b32.xlu0 %v1373, 65
        %v2085 = vpop.permute.xlu0 %2084
        %2086 = vrot.lane.b32.xlu0 %v1374, 65
        %v2087 = vpop.permute.xlu0 %2086
        %2088 = vrot.lane.b32.xlu0 %v1375, 65
        %v2089 = vpop.permute.xlu0 %2088
        %2090 = vrot.lane.b32.xlu0 %v1376, 65
        %v2091 = vpop.permute.xlu0 %2090
        %v2092 = vsel %vm804, %v2083, %v2085
        %v2093 = vsel %vm804, %v2085, %v2087
        %v2094 = vsel %vm804, %v2087, %v2089
        %v2095 = vsel %vm804, %v2089, %v2091
        %v2106 = vrot.slane %v1413, 4
        %v2107 = vrot.slane %v1414, 4
        %v2108 = vrot.slane %v1415, 4
        %v2109 = vrot.slane %v1416, 4
        %v2110 = vrot.slane %v1417, 4
        %2111 = vrot.lane.b32.xlu0 %v2106, 64
        %v2112 = vpop.permute.xlu0 %2111
        %2113 = vrot.lane.b32.xlu0 %v2107, 64
        %v2114 = vpop.permute.xlu0 %2113
        %2115 = vrot.lane.b32.xlu0 %v2108, 64
        %v2116 = vpop.permute.xlu0 %2115
        %2117 = vrot.lane.b32.xlu0 %v2109, 64
        %v2118 = vpop.permute.xlu0 %2117
        %2119 = vrot.lane.b32.xlu0 %v2110, 64
        %v2120 = vpop.permute.xlu0 %2119
        %v2121 = vsel %vm762, %v2112, %v2114
        %v2122 = vsel %vm762, %v2114, %v2116
        %v2123 = vsel %vm762, %v2116, %v2118
        %v2124 = vsel %vm762, %v2118, %v2120
        %2135 = vrot.lane.b32.xlu0 %v1454, 63
        %v2136 = vpop.permute.xlu0 %2135
        %2137 = vrot.lane.b32.xlu0 %v1455, 63
        %v2138 = vpop.permute.xlu0 %2137
        %2139 = vrot.lane.b32.xlu0 %v1456, 63
        %v2140 = vpop.permute.xlu0 %2139
        %2141 = vrot.lane.b32.xlu0 %v1457, 63
        %v2142 = vpop.permute.xlu0 %2141
        %2143 = vrot.lane.b32.xlu0 %v1458, 63
        %v2144 = vpop.permute.xlu0 %2143
        %v2145 = vsel %vm1714, %v2136, %v2138
        %v2146 = vsel %vm1714, %v2138, %v2140
        %v2147 = vsel %vm1714, %v2140, %v2142
        %v2148 = vsel %vm1714, %v2142, %v2144
        %v2149 = vsel %vm1858, %v1064, %v1911
        %v2150 = vsel %vm1858, %v1065, %v1912
        %v2151 = vsel %vm1858, %v1066, %v1913
        %v2152 = vsel %vm1858, %v1067, %v1914
        %v2153 = vsel %vm1858, %v1068, %v1910
        %v2154 = vsel %vm1858, %v1925, %v1951
        %v2155 = vsel %vm1858, %v1932, %v1960
        %v2156 = vsel %vm1858, %v1933, %v1961
        %v2157 = vsel %vm1858, %v1934, %v1962
        %v2158 = vsel %vm1858, %v1931, %v1963
        %v2159 = vsel %vm1858, %v1975, %v2005
        %v2160 = vsel %vm1858, %v1985, %v2014
        %v2161 = vsel %vm1858, %v1986, %v2015
        %v2162 = vsel %vm1858, %v1987, %v2016
        %v2163 = vsel %vm1858, %v1988, %v2017
        %v2164 = vsel %vm1858, %v2029, %v2058
        %v2165 = vsel %vm1858, %v2038, %v2068
        %v2166 = vsel %vm1858, %v2039, %v2069
        %v2167 = vsel %vm1858, %v2040, %v2070
        %v2168 = vsel %vm1858, %v2041, %v2071
        %v2169 = vsel %vm1858, %v2083, %v2112
        %v2170 = vsel %vm1858, %v2092, %v2121
        %v2171 = vsel %vm1858, %v2093, %v2122
        %v2172 = vsel %vm1858, %v2094, %v2123
        %v2173 = vsel %vm1858, %v2095, %v2124
        %2199 = vrot.lane.b32.xlu0 %v2149, 47
        %v2200 = vpop.permute.xlu0 %2199
        %2201 = vrot.lane.b32.xlu0 %v2150, 47
        %v2202 = vpop.permute.xlu0 %2201
        %2203 = vrot.lane.b32.xlu0 %v2151, 47
        %v2204 = vpop.permute.xlu0 %2203
        %2205 = vrot.lane.b32.xlu0 %v2152, 47
        %v2206 = vpop.permute.xlu0 %2205
        %2207 = vrot.lane.b32.xlu0 %v2153, 47
        %v2208 = vpop.permute.xlu0 %2207
        %2209 = vrot.lane.b32.xlu0 %v2154, 47
        %v2210 = vpop.permute.xlu0 %2209
        %2211 = vrot.lane.b32.xlu0 %v2155, 47
        %v2212 = vpop.permute.xlu0 %2211
        %2213 = vrot.lane.b32.xlu0 %v2156, 47
        %v2214 = vpop.permute.xlu0 %2213
        %2215 = vrot.lane.b32.xlu0 %v2157, 47
        %v2216 = vpop.permute.xlu0 %2215
        %2217 = vrot.lane.b32.xlu0 %v2158, 47
        %v2218 = vpop.permute.xlu0 %2217
        %2219 = vrot.lane.b32.xlu0 %v2159, 47
        %v2220 = vpop.permute.xlu0 %2219
        %2221 = vrot.lane.b32.xlu0 %v2160, 47
        %v2222 = vpop.permute.xlu0 %2221
        %2223 = vrot.lane.b32.xlu0 %v2161, 47
        %v2224 = vpop.permute.xlu0 %2223
        %2225 = vrot.lane.b32.xlu0 %v2162, 47
        %v2226 = vpop.permute.xlu0 %2225
        %2227 = vrot.lane.b32.xlu0 %v2163, 47
        %v2228 = vpop.permute.xlu0 %2227
        %2229 = vrot.lane.b32.xlu0 %v2164, 47
        %v2230 = vpop.permute.xlu0 %2229
        %2231 = vrot.lane.b32.xlu0 %v2165, 47
        %v2232 = vpop.permute.xlu0 %2231
        %2233 = vrot.lane.b32.xlu0 %v2166, 47
        %v2234 = vpop.permute.xlu0 %2233
        %2235 = vrot.lane.b32.xlu0 %v2167, 47
        %v2236 = vpop.permute.xlu0 %2235
        %2237 = vrot.lane.b32.xlu0 %v2168, 47
        %v2238 = vpop.permute.xlu0 %2237
        %2239 = vrot.lane.b32.xlu0 %v2169, 47
        %v2240 = vpop.permute.xlu0 %2239
        %2241 = vrot.lane.b32.xlu0 %v2170, 47
        %v2242 = vpop.permute.xlu0 %2241
        %2243 = vrot.lane.b32.xlu0 %v2171, 47
        %v2244 = vpop.permute.xlu0 %2243
        %2245 = vrot.lane.b32.xlu0 %v2172, 47
        %v2246 = vpop.permute.xlu0 %2245
        %2247 = vrot.lane.b32.xlu0 %v2173, 47
        %v2248 = vpop.permute.xlu0 %2247
        %2249 = vrot.lane.b32.xlu0 %v2136, 47
        %v2250 = vpop.permute.xlu0 %2249
        %2251 = vrot.lane.b32.xlu0 %v2145, 47
        %v2252 = vpop.permute.xlu0 %2251
        %2253 = vrot.lane.b32.xlu0 %v2146, 47
        %v2254 = vpop.permute.xlu0 %2253
        %2255 = vrot.lane.b32.xlu0 %v2147, 47
        %v2256 = vpop.permute.xlu0 %2255
        %2257 = vrot.lane.b32.xlu0 %v2148, 47
        %v2258 = vpop.permute.xlu0 %2257
        %vm2259 = vcmask 384000
        %v2260 = vsel %vm2259, %v2200, %v2202
        %v2261 = vsel %vm2259, %v2202, %v2204
        %v2262 = vsel %vm2259, %v2204, %v2206
        %v2263 = vsel %vm2259, %v2206, %v2208
        %v2264 = vsel %vm2259, %v2210, %v2212
        %v2265 = vsel %vm2259, %v2212, %v2214
        %v2266 = vsel %vm2259, %v2214, %v2216
        %v2267 = vsel %vm2259, %v2216, %v2218
        %v2268 = vsel %vm2259, %v2220, %v2222
        %v2269 = vsel %vm2259, %v2222, %v2224
        %v2270 = vsel %vm2259, %v2224, %v2226
        %v2271 = vsel %vm2259, %v2226, %v2228
        %v2272 = vsel %vm2259, %v2230, %v2232
        %v2273 = vsel %vm2259, %v2232, %v2234
        %v2274 = vsel %vm2259, %v2234, %v2236
        %v2275 = vsel %vm2259, %v2236, %v2238
        %v2276 = vsel %vm2259, %v2240, %v2242
        %v2277 = vsel %vm2259, %v2242, %v2244
        %v2278 = vsel %vm2259, %v2244, %v2246
        %v2279 = vsel %vm2259, %v2246, %v2248
        %v2280 = vsel %vm2259, %v2250, %v2252
        %v2281 = vsel %vm2259, %v2252, %v2254
        %v2282 = vsel %vm2259, %v2254, %v2256
        %v2283 = vsel %vm2259, %v2256, %v2258
        %v2304 = vld [vmem:[%s1] sm:$0xf]
        %vm2305 = vcmask 883712
        %v2307 = vsel %vm2305, %v2304, 0
        %v2309 = vsel %vm1858, %v2280, 0
        %v2311 = vsel %vm1858, %v2281, 0
        %v2313 = vsel %vm1858, %v2282, 0
        %v2315 = vsel %vm1858, %v2283, 0
        %2317 = vmatprep.subr.mxu0 %v1860
        %2318 = vmatpush1.msra.mxu0 %v1859
        %2319 = vmatprep.subr.mxu0 %v1864
        %2320 = vmatpush1.msra.mxu0 %v1863
        %2321 = vmatprep.subr.mxu0 %v1868
        %2322 = vmatpush1.msra.mxu0 %v1867
        %2323 = vmatprep.subr.mxu0 %v1872
        %2324 = vmatpush1.msra.mxu0 %v1871
        %2325 = vmatprep.subr.mxu0 %v1876
        %2326 = vmatpush1.msra.mxu0 %v1875
        %2327 = vmatprep.subr.mxu0 %v1880
        %2328 = vmatpush1.msra.mxu0 %v1879
        %2329 = vmatprep.subr.mxu0 %v1884
        %2330 = vmatpush1.msra.mxu0 %v1883
        %2331 = vmatprep.subr.mxu0 %v1888
        %2332 = vmatpush1.msra.mxu0 %v1887
        %2333 = vmatprep.subr.mxu0 %v2261
        %2334 = vmatpush1.msra.mxu0 %v2260
        %2335 = vmatprep.subr.mxu0 %v2265
        %2336 = vmatpush1.msra.mxu0 %v2264
        %2337 = vmatprep.subr.mxu0 %v2269
        %2338 = vmatpush1.msra.mxu0 %v2268
        %2339 = vmatprep.subr.mxu0 %v2273
        %2340 = vmatpush1.msra.mxu0 %v2272
        %2341 = vmatprep.subr.mxu0 %v2277
        %2342 = vmatpush1.msra.mxu0 %v2276
        %2343 = vmatprep.subr.mxu0 %v2311
        %2344 = vmatpush1.msra.mxu0 %v2309
        %2345 = vmatprep.subr.mxu0 0.0
        %2346 = vmatpush1.msra.mxu0 0.0
        %2347 = vmatprep.subr.mxu0 0.0
        %2348 = vmatpush1.msra.mxu0 0.0
        %2349 = vmatprep.subr.mxu0 0.0
        %2350 = vmatpush1.msra.mxu0 0.0
        %2351 = vmatprep.subr.mxu0 0.0
        %2352 = vmatpush1.msra.mxu0 0.0
        %2353 = vmatprep.subr.mxu0 0.0
        %2354 = vmatpush1.msra.mxu0 0.0
        %2355 = vmatprep.subr.mxu0 0.0
        %2356 = vmatpush1.msra.mxu0 0.0
        %2357 = vmatprep.subr.mxu0 0.0
        %2358 = vmatpush1.msra.mxu0 0.0
        %2359 = vmatprep.subr.mxu0 0.0
        %2360 = vmatpush1.msra.mxu0 0.0
        %2361 = vmatprep.subr.mxu0 0.0
        %2362 = vmatpush1.msra.mxu0 0.0
        %2363 = vmatprep.subr.mxu0 0.0
        %2364 = vmatpush1.msra.mxu0 0.0
        %2365 = vmatprep.subr.mxu0 0.0
        %2366 = vmatpush1.msra.mxu0 0.0
        %2367 = vmatprep.subr.mxu0 0.0
        %2368 = vmatpush1.msra.mxu0 0.0
        %2369 = vmatprep.subr.mxu0 0.0
        %2370 = vmatpush1.msra.mxu0 0.0
        %2371 = vmatprep.subr.mxu0 0.0
        %2372 = vmatpush1.msra.mxu0 0.0
        %2373 = vmatprep.subr.mxu0 0.0
        %2374 = vmatpush1.msra.mxu0 0.0
        %2375 = vmatprep.subr.mxu0 0.0
        %2376 = vmatpush1.msra.mxu0 0.0
        %2377 = vmatprep.subr.mxu0 0.0
        %2378 = vmatpush1.msra.mxu0 0.0
        %2379 = vmatprep.subr.mxu0 0.0
        %2380 = vmatpush1.msra.mxu0 0.0
        %2381 = vmatprep.mubr.f32.mxu0 0.0
        %2382 = vmatmul.mubr.f32.gmra.mrb[0].mxu0 %v2307
        %v2383 = vpop.f32.mrb[0].mxu0
        %v2384 = vadd.f32 0.0, %v2383
        %v2385 = vpop.f32.mrb[0].mxu0
        %v2386 = vadd.f32 0.0, %v2385
        %2387 = vdwg.mxu0
        %2388 = vmatprep.subr.mxu0 %v1862
        %2389 = vmatpush1.msra.mxu0 %v1861
        %2390 = vmatprep.subr.mxu0 %v1866
        %2391 = vmatpush1.msra.mxu0 %v1865
        %2392 = vmatprep.subr.mxu0 %v1870
        %2393 = vmatpush1.msra.mxu0 %v1869
        %2394 = vmatprep.subr.mxu0 %v1874
        %2395 = vmatpush1.msra.mxu0 %v1873
        %2396 = vmatprep.subr.mxu0 %v1878
        %2397 = vmatpush1.msra.mxu0 %v1877
        %2398 = vmatprep.subr.mxu0 %v1882
        %2399 = vmatpush1.msra.mxu0 %v1881
        %2400 = vmatprep.subr.mxu0 %v1886
        %2401 = vmatpush1.msra.mxu0 %v1885
        %2402 = vmatprep.subr.mxu0 %v1890
        %2403 = vmatpush1.msra.mxu0 %v1889
        %2404 = vmatprep.subr.mxu0 %v2263
        %2405 = vmatpush1.msra.mxu0 %v2262
        %2406 = vmatprep.subr.mxu0 %v2267
        %2407 = vmatpush1.msra.mxu0 %v2266
        %2408 = vmatprep.subr.mxu0 %v2271
        %2409 = vmatpush1.msra.mxu0 %v2270
        %2410 = vmatprep.subr.mxu0 %v2275
        %2411 = vmatpush1.msra.mxu0 %v2274
        %2412 = vmatprep.subr.mxu0 %v2279
        %2413 = vmatpush1.msra.mxu0 %v2278
        %2414 = vmatprep.subr.mxu0 %v2315
        %2415 = vmatpush1.msra.mxu0 %v2313
        %2416 = vmatprep.subr.mxu0 0.0
        %2417 = vmatpush1.msra.mxu0 0.0
        %2418 = vmatprep.subr.mxu0 0.0
        %2419 = vmatpush1.msra.mxu0 0.0
        %2420 = vmatprep.subr.mxu0 0.0
        %2421 = vmatpush1.msra.mxu0 0.0
        %2422 = vmatprep.subr.mxu0 0.0
        %2423 = vmatpush1.msra.mxu0 0.0
        %2424 = vmatprep.subr.mxu0 0.0
        %2425 = vmatpush1.msra.mxu0 0.0
        %2426 = vmatprep.subr.mxu0 0.0
        %2427 = vmatpush1.msra.mxu0 0.0
        %2428 = vmatprep.subr.mxu0 0.0
        %2429 = vmatpush1.msra.mxu0 0.0
        %2430 = vmatprep.subr.mxu0 0.0
        %2431 = vmatpush1.msra.mxu0 0.0
        %2432 = vmatprep.subr.mxu0 0.0
        %2433 = vmatpush1.msra.mxu0 0.0
        %2434 = vmatprep.subr.mxu0 0.0
        %2435 = vmatpush1.msra.mxu0 0.0
        %2436 = vmatprep.subr.mxu0 0.0
        %2437 = vmatpush1.msra.mxu0 0.0
        %2438 = vmatprep.subr.mxu0 0.0
        %2439 = vmatpush1.msra.mxu0 0.0
        %2440 = vmatprep.subr.mxu0 0.0
        %2441 = vmatpush1.msra.mxu0 0.0
        %2442 = vmatprep.subr.mxu0 0.0
        %2443 = vmatpush1.msra.mxu0 0.0
        %2444 = vmatprep.subr.mxu0 0.0
        %2445 = vmatpush1.msra.mxu0 0.0
        %2446 = vmatprep.subr.mxu0 0.0
        %2447 = vmatpush1.msra.mxu0 0.0
        %2448 = vmatprep.subr.mxu0 0.0
        %2449 = vmatpush1.msra.mxu0 0.0
        %2450 = vmatprep.subr.mxu0 0.0
        %2451 = vmatpush1.msra.mxu0 0.0
        %2452 = vmatprep.mubr.f32.mxu0 0.0
        %2453 = vmatmul.mubr.f32.gmra.mrb[0].mxu0 %v2307
        %v2454 = vpop.f32.mrb[0].mxu0
        %v2455 = vadd.f32 0.0, %v2454
        %v2456 = vpop.f32.mrb[0].mxu0
        %v2457 = vadd.f32 0.0, %v2456
        %2458 = vdwg.mxu0
        %v2459 = vld [vmem:[%s3] sm:$0xf]
        %v2460 = vld [vmem:[%s4] sm:$0xf]
        %v2461 = vsel %vm1858, %v2384, 0.0
        %v2462 = vsel %vm1858, %v2386, 0.0
        %v2463 = vadd.f32 %v2461, %v2462
        %v2464 = vsel %vm1858, %v2455, 0.0
        %v2465 = vadd.f32 %v2463, %v2464
        %v2466 = vsel %vm1858, %v2457, 0.0
        %v2467 = vadd.f32 %v2465, %v2466
        %2468 = vadd.xlane.f32.xlu0 %v2467
        %v2469 = vpop.xlane.xlu0 %2468
        %v2470 = vrcp.pop 512.0
        %v2471 = vmul.f32 %v2469, %v2470
        %v2472 = vsub.f32 %v2384, %v2471
        %v2473 = vsub.f32 %v2386, %v2471
        %v2474 = vsub.f32 %v2455, %v2471
        %v2475 = vsub.f32 %v2457, %v2471
        %v2476 = vmul.f32 %v2472, %v2472
        %v2477 = vmul.f32 %v2473, %v2473
        %v2478 = vmul.f32 %v2474, %v2474
        %v2479 = vmul.f32 %v2475, %v2475
        %v2480 = vsel %vm1858, %v2476, 0.0
        %v2481 = vsel %vm1858, %v2477, 0.0
        %v2482 = vadd.f32 %v2480, %v2481
        %v2483 = vsel %vm1858, %v2478, 0.0
        %v2484 = vadd.f32 %v2482, %v2483
        %v2485 = vsel %vm1858, %v2479, 0.0
        %v2486 = vadd.f32 %v2484, %v2485
        %2487 = vadd.xlane.f32.xlu0 %v2486
        %v2488 = vpop.xlane.xlu0 %2487
        %v2489 = vmul.f32 %v2488, %v2470
        %v2490 = vadd.f32 %v2489, 1e-05
        %v2491 = vrsqrt.pop %v2490
        %v2492 = vmul.f32 %v2472, %v2491
        %v2493 = vmul.f32 %v2473, %v2491
        %v2494 = vmul.f32 %v2474, %v2491
        %v2495 = vmul.f32 %v2475, %v2491
        %2497 = vset.pattern.permute.xlu0 0
        %2498 = vperm.xlu0 %2497, %v2459
        %v2499 = vpop.permute.xlu0 %2498
        %v2501 = vmul.f32 %v2492, %v2499
        %v2502 = vmul.f32 %v2493, %v2499
        %v2503 = vmul.f32 %v2494, %v2499
        %v2504 = vmul.f32 %v2495, %v2499
        %2506 = vset.pattern.permute.xlu0 0
        %2507 = vperm.xlu0 %2506, %v2460
        %v2508 = vpop.permute.xlu0 %2507
        %v2510 = vadd.f32 %v2501, %v2508
        %v2511 = vadd.f32 %v2502, %v2508
        %v2512 = vadd.f32 %v2503, %v2508
        %v2513 = vadd.f32 %v2504, %v2508
        %v2514 = vmax.f32 %v2510, 0.0
        %v2515 = vmax.f32 %v2511, 0.0
        %v2516 = vmax.f32 %v2512, 0.0
        %v2517 = vmax.f32 %v2513, 0.0
        %2522 = vrot.lane.b32.xlu0 %v2514, 73
        %v2523 = vpop.permute.xlu0 %2522
        %2524 = vrot.lane.b32.xlu0 %v2515, 73
        %v2525 = vpop.permute.xlu0 %2524
        %2526 = vrot.lane.b32.xlu0 %v2516, 73
        %v2527 = vpop.permute.xlu0 %2526
        %2528 = vrot.lane.b32.xlu0 %v2517, 73
        %v2529 = vpop.permute.xlu0 %2528
        %v2530 = vsel %vm367, %v2523, %v2525
        %v2531 = vsel %vm367, %v2525, %v2527
        %v2532 = vsel %vm367, %v2527, %v2529
        %v2538 = vsel %vm367, 0.0, %v2523
        %v2539 = vsel %vm367, %v2529, 0.0
        %v2540 = vmul.f32 %v2538, %v381
        %v2541 = vmul.f32 %v2530, %v385
        %v2542 = vmul.f32 %v2531, %v389
        %v2543 = vmul.f32 %v2532, %v393
        %v2544 = vmul.f32 %v2538, %v419
        %v2545 = vmul.f32 %v2530, %v427
        %v2546 = vmul.f32 %v2531, %v428
        %v2547 = vmul.f32 %v2532, %v429
        %v2548 = vmul.f32 %v2539, %v425
        %v2549 = vmul.f32 %v2538, %v461
        %v2550 = vmul.f32 %v2530, %v469
        %v2551 = vmul.f32 %v2531, %v470
        %v2552 = vmul.f32 %v2532, %v471
        %v2553 = vmul.f32 %v2539, %v467
        %v2554 = vmul.f32 %v2538, %v503
        %v2555 = vmul.f32 %v2530, %v511
        %v2556 = vmul.f32 %v2531, %v512
        %v2557 = vmul.f32 %v2532, %v513
        %v2558 = vmul.f32 %v2539, %v509
        %v2559 = vmul.f32 %v2538, %v545
        %v2560 = vmul.f32 %v2530, %v553
        %v2561 = vmul.f32 %v2531, %v554
        %v2562 = vmul.f32 %v2532, %v555
        %v2563 = vmul.f32 %v2539, %v551
        %v2564 = vmul.f32 %v2538, %v587
        %v2565 = vmul.f32 %v2530, %v595
        %v2566 = vmul.f32 %v2531, %v596
        %v2567 = vmul.f32 %v2532, %v597
        %v2568 = vmul.f32 %v2539, %v593
        %v2569 = vmul.f32 %v2538, %v629
        %v2570 = vmul.f32 %v2530, %v637
        %v2571 = vmul.f32 %v2531, %v638
        %v2572 = vmul.f32 %v2532, %v639
        %v2573 = vmul.f32 %v2539, %v635
        %v2574 = vmul.f32 %v2538, %v671
        %v2575 = vmul.f32 %v2530, %v679
        %v2576 = vmul.f32 %v2531, %v680
        %v2577 = vmul.f32 %v2532, %v681
        %v2578 = vmul.f32 %v2539, %v677
        %v2579 = vmul.f32 %v2538, %v713
        %v2580 = vmul.f32 %v2530, %v721
        %v2581 = vmul.f32 %v2531, %v722
        %v2582 = vmul.f32 %v2532, %v723
        %v2583 = vmul.f32 %v2539, %v719
        %v2584 = vmul.f32 %v2538, %v755
        %v2585 = vmul.f32 %v2530, %v763
        %v2586 = vmul.f32 %v2531, %v764
        %v2587 = vmul.f32 %v2532, %v765
        %v2588 = vmul.f32 %v2539, %v761
        %v2589 = vmul.f32 %v2538, %v797
        %v2590 = vmul.f32 %v2530, %v805
        %v2591 = vmul.f32 %v2531, %v806
        %v2592 = vmul.f32 %v2532, %v807
        %v2593 = vmul.f32 %v2539, %v803
        %v2594 = vmul.f32 %v2538, %v839
        %v2595 = vmul.f32 %v2530, %v847
        %v2596 = vmul.f32 %v2531, %v848
        %v2597 = vmul.f32 %v2532, %v849
        %v2598 = vmul.f32 %v2539, %v845
        %v2599 = vmul.f32 %v2538, %v881
        %v2600 = vmul.f32 %v2530, %v889
        %v2601 = vmul.f32 %v2531, %v890
        %v2602 = vmul.f32 %v2532, %v891
        %v2603 = vmul.f32 %v2539, %v887
        %v2604 = vmul.f32 %v2538, %v923
        %v2605 = vmul.f32 %v2530, %v930
        %v2606 = vmul.f32 %v2531, %v931
        %v2607 = vmul.f32 %v2532, %v932
        %v2608 = vmul.f32 %v2539, %v929
        %v2609 = vmul.f32 %v2538, %v964
        %v2610 = vmul.f32 %v2530, %v972
        %v2611 = vmul.f32 %v2531, %v973
        %v2612 = vmul.f32 %v2532, %v974
        %v2613 = vmul.f32 %v2539, %v970
        %v2614 = vmul.f32 %v2538, %v1006
        %v2615 = vmul.f32 %v2530, %v1014
        %v2616 = vmul.f32 %v2531, %v1015
        %v2617 = vmul.f32 %v2532, %v1016
        %v2618 = vmul.f32 %v2539, %v1012
        %v2619 = vmul.f32 %v2538, %v1048
        %v2620 = vmul.f32 %v2530, %v1056
        %v2621 = vmul.f32 %v2531, %v1057
        %v2622 = vmul.f32 %v2532, %v1058
        %v2623 = vmul.f32 %v2539, %v1054
        %v2624 = vmul.f32 %v2538, %v1090
        %v2625 = vmul.f32 %v2530, %v1098
        %v2626 = vmul.f32 %v2531, %v1099
        %v2627 = vmul.f32 %v2532, %v1100
        %v2628 = vmul.f32 %v2539, %v1096
        %v2629 = vmul.f32 %v2530, %v1114
        %v2630 = vmul.f32 %v2531, %v1118
        %v2631 = vmul.f32 %v2532, %v1122
        %v2632 = vmul.f32 %v2539, %v1126
        %v2633 = vmul.f32 %v2530, %v1152
        %v2634 = vmul.f32 %v2531, %v1159
        %v2635 = vmul.f32 %v2532, %v1160
        %v2636 = vmul.f32 %v2539, %v1161
        %v2637 = vmul.f32 %v2530, %v1193
        %v2638 = vmul.f32 %v2531, %v1200
        %v2639 = vmul.f32 %v2532, %v1201
        %v2640 = vmul.f32 %v2539, %v1202
        %v2641 = vmul.f32 %v2530, %v1234
        %v2642 = vmul.f32 %v2531, %v1241
        %v2643 = vmul.f32 %v2532, %v1242
        %v2644 = vmul.f32 %v2539, %v1243
        %v2645 = vmul.f32 %v2530, %v1275
        %v2646 = vmul.f32 %v2531, %v1282
        %v2647 = vmul.f32 %v2532, %v1283
        %v2648 = vmul.f32 %v2539, %v1284
        %v2649 = vmul.f32 %v2530, %v1316
        %v2650 = vmul.f32 %v2531, %v1323
        %v2651 = vmul.f32 %v2532, %v1324
        %v2652 = vmul.f32 %v2539, %v1325
        %v2653 = vmul.f32 %v2530, %v1357
        %v2654 = vmul.f32 %v2531, %v1364
        %v2655 = vmul.f32 %v2532, %v1365
        %v2656 = vmul.f32 %v2539, %v1366
        %v2657 = vmul.f32 %v2530, %v1398
        %v2658 = vmul.f32 %v2531, %v1405
        %v2659 = vmul.f32 %v2532, %v1406
        %v2660 = vmul.f32 %v2539, %v1407
        %v2661 = vmul.f32 %v2530, %v1439
        %v2662 = vmul.f32 %v2531, %v1446
        %v2663 = vmul.f32 %v2532, %v1447
        %v2664 = vmul.f32 %v2539, %v1448
        %v2670 = vrot.slane %v2544, 4
        %v2671 = vrot.slane %v2545, 4
        %v2672 = vrot.slane %v2546, 4
        %v2673 = vrot.slane %v2547, 4
        %v2674 = vrot.slane %v2548, 4
        %2675 = vrot.lane.b32.xlu0 %v2670, 127
        %v2676 = vpop.permute.xlu0 %2675
        %2677 = vrot.lane.b32.xlu0 %v2671, 127
        %v2678 = vpop.permute.xlu0 %2677
        %2679 = vrot.lane.b32.xlu0 %v2672, 127
        %v2680 = vpop.permute.xlu0 %2679
        %2681 = vrot.lane.b32.xlu0 %v2673, 127
        %v2682 = vpop.permute.xlu0 %2681
        %2683 = vrot.lane.b32.xlu0 %v2674, 127
        %v2684 = vpop.permute.xlu0 %2683
        %v2685 = vsel %vm1479, %v2676, %v2678
        %v2686 = vsel %vm1479, %v2678, %v2680
        %v2687 = vsel %vm1479, %v2680, %v2682
        %v2688 = vsel %vm1479, %v2682, %v2684
        %2698 = vrot.lane.b32.xlu0 %v2549, 126
        %v2699 = vpop.permute.xlu0 %2698
        %2700 = vrot.lane.b32.xlu0 %v2550, 126
        %v2701 = vpop.permute.xlu0 %2700
        %2702 = vrot.lane.b32.xlu0 %v2551, 126
        %v2703 = vpop.permute.xlu0 %2702
        %2704 = vrot.lane.b32.xlu0 %v2552, 126
        %v2705 = vpop.permute.xlu0 %2704
        %2706 = vrot.lane.b32.xlu0 %v2553, 126
        %v2707 = vpop.permute.xlu0 %2706
        %v2708 = vsel %vm1503, %v2699, %v2701
        %v2709 = vsel %vm1503, %v2701, %v2703
        %v2710 = vsel %vm1503, %v2703, %v2705
        %v2711 = vsel %vm1503, %v2705, %v2707
        %v2721 = vrot.slane %v2554, 4
        %v2722 = vrot.slane %v2555, 4
        %v2723 = vrot.slane %v2556, 4
        %v2724 = vrot.slane %v2557, 4
        %v2725 = vrot.slane %v2558, 4
        %2726 = vrot.lane.b32.xlu0 %v2721, 120
        %v2727 = vpop.permute.xlu0 %2726
        %2728 = vrot.lane.b32.xlu0 %v2722, 120
        %v2729 = vpop.permute.xlu0 %2728
        %2730 = vrot.lane.b32.xlu0 %v2723, 120
        %v2731 = vpop.permute.xlu0 %2730
        %2732 = vrot.lane.b32.xlu0 %v2724, 120
        %v2733 = vpop.permute.xlu0 %2732
        %2734 = vrot.lane.b32.xlu0 %v2725, 120
        %v2735 = vpop.permute.xlu0 %2734
        %v2736 = vsel %vm1532, %v2727, %v2729
        %v2737 = vsel %vm1532, %v2729, %v2731
        %v2738 = vsel %vm1532, %v2731, %v2733
        %v2739 = vsel %vm1532, %v2733, %v2735
        %2749 = vrot.lane.b32.xlu0 %v2559, 119
        %v2750 = vpop.permute.xlu0 %2749
        %2751 = vrot.lane.b32.xlu0 %v2560, 119
        %v2752 = vpop.permute.xlu0 %2751
        %2753 = vrot.lane.b32.xlu0 %v2561, 119
        %v2754 = vpop.permute.xlu0 %2753
        %2755 = vrot.lane.b32.xlu0 %v2562, 119
        %v2756 = vpop.permute.xlu0 %2755
        %2757 = vrot.lane.b32.xlu0 %v2563, 119
        %v2758 = vpop.permute.xlu0 %2757
        %v2759 = vsel %vm1556, %v2750, %v2752
        %v2760 = vsel %vm1556, %v2752, %v2754
        %v2761 = vsel %vm1556, %v2754, %v2756
        %v2762 = vsel %vm1556, %v2756, %v2758
        %v2772 = vrot.slane %v2564, 4
        %v2773 = vrot.slane %v2565, 4
        %v2774 = vrot.slane %v2566, 4
        %v2775 = vrot.slane %v2567, 4
        %v2776 = vrot.slane %v2568, 4
        %2777 = vrot.lane.b32.xlu0 %v2772, 118
        %v2778 = vpop.permute.xlu0 %2777
        %2779 = vrot.lane.b32.xlu0 %v2773, 118
        %v2780 = vpop.permute.xlu0 %2779
        %2781 = vrot.lane.b32.xlu0 %v2774, 118
        %v2782 = vpop.permute.xlu0 %2781
        %2783 = vrot.lane.b32.xlu0 %v2775, 118
        %v2784 = vpop.permute.xlu0 %2783
        %2785 = vrot.lane.b32.xlu0 %v2776, 118
        %v2786 = vpop.permute.xlu0 %2785
        %v2787 = vsel %vm1585, %v2778, %v2780
        %v2788 = vsel %vm1585, %v2780, %v2782
        %v2789 = vsel %vm1585, %v2782, %v2784
        %v2790 = vsel %vm1585, %v2784, %v2786
        %2800 = vrot.lane.b32.xlu0 %v2569, 112
        %v2801 = vpop.permute.xlu0 %2800
        %2802 = vrot.lane.b32.xlu0 %v2570, 112
        %v2803 = vpop.permute.xlu0 %2802
        %2804 = vrot.lane.b32.xlu0 %v2571, 112
        %v2805 = vpop.permute.xlu0 %2804
        %2806 = vrot.lane.b32.xlu0 %v2572, 112
        %v2807 = vpop.permute.xlu0 %2806
        %2808 = vrot.lane.b32.xlu0 %v2573, 112
        %v2809 = vpop.permute.xlu0 %2808
        %v2810 = vsel %vm1609, %v2801, %v2803
        %v2811 = vsel %vm1609, %v2803, %v2805
        %v2812 = vsel %vm1609, %v2805, %v2807
        %v2813 = vsel %vm1609, %v2807, %v2809
        %v2823 = vrot.slane %v2574, 4
        %v2824 = vrot.slane %v2575, 4
        %v2825 = vrot.slane %v2576, 4
        %v2826 = vrot.slane %v2577, 4
        %v2827 = vrot.slane %v2578, 4
        %2828 = vrot.lane.b32.xlu0 %v2823, 111
        %v2829 = vpop.permute.xlu0 %2828
        %2830 = vrot.lane.b32.xlu0 %v2824, 111
        %v2831 = vpop.permute.xlu0 %2830
        %2832 = vrot.lane.b32.xlu0 %v2825, 111
        %v2833 = vpop.permute.xlu0 %2832
        %2834 = vrot.lane.b32.xlu0 %v2826, 111
        %v2835 = vpop.permute.xlu0 %2834
        %2836 = vrot.lane.b32.xlu0 %v2827, 111
        %v2837 = vpop.permute.xlu0 %2836
        %v2838 = vsel %vm1638, %v2829, %v2831
        %v2839 = vsel %vm1638, %v2831, %v2833
        %v2840 = vsel %vm1638, %v2833, %v2835
        %v2841 = vsel %vm1638, %v2835, %v2837
        %2851 = vrot.lane.b32.xlu0 %v2579, 110
        %v2852 = vpop.permute.xlu0 %2851
        %2853 = vrot.lane.b32.xlu0 %v2580, 110
        %v2854 = vpop.permute.xlu0 %2853
        %2855 = vrot.lane.b32.xlu0 %v2581, 110
        %v2856 = vpop.permute.xlu0 %2855
        %2857 = vrot.lane.b32.xlu0 %v2582, 110
        %v2858 = vpop.permute.xlu0 %2857
        %2859 = vrot.lane.b32.xlu0 %v2583, 110
        %v2860 = vpop.permute.xlu0 %2859
        %v2861 = vsel %vm1662, %v2852, %v2854
        %v2862 = vsel %vm1662, %v2854, %v2856
        %v2863 = vsel %vm1662, %v2856, %v2858
        %v2864 = vsel %vm1662, %v2858, %v2860
        %v2874 = vrot.slane %v2584, 4
        %v2875 = vrot.slane %v2585, 4
        %v2876 = vrot.slane %v2586, 4
        %v2877 = vrot.slane %v2587, 4
        %v2878 = vrot.slane %v2588, 4
        %2879 = vrot.lane.b32.xlu0 %v2874, 64
        %v2880 = vpop.permute.xlu0 %2879
        %2881 = vrot.lane.b32.xlu0 %v2875, 64
        %v2882 = vpop.permute.xlu0 %2881
        %2883 = vrot.lane.b32.xlu0 %v2876, 64
        %v2884 = vpop.permute.xlu0 %2883
        %2885 = vrot.lane.b32.xlu0 %v2877, 64
        %v2886 = vpop.permute.xlu0 %2885
        %2887 = vrot.lane.b32.xlu0 %v2878, 64
        %v2888 = vpop.permute.xlu0 %2887
        %v2889 = vsel %vm762, %v2880, %v2882
        %v2890 = vsel %vm762, %v2882, %v2884
        %v2891 = vsel %vm762, %v2884, %v2886
        %v2892 = vsel %vm762, %v2886, %v2888
        %2902 = vrot.lane.b32.xlu0 %v2589, 63
        %v2903 = vpop.permute.xlu0 %2902
        %2904 = vrot.lane.b32.xlu0 %v2590, 63
        %v2905 = vpop.permute.xlu0 %2904
        %2906 = vrot.lane.b32.xlu0 %v2591, 63
        %v2907 = vpop.permute.xlu0 %2906
        %2908 = vrot.lane.b32.xlu0 %v2592, 63
        %v2909 = vpop.permute.xlu0 %2908
        %2910 = vrot.lane.b32.xlu0 %v2593, 63
        %v2911 = vpop.permute.xlu0 %2910
        %v2912 = vsel %vm1714, %v2903, %v2905
        %v2913 = vsel %vm1714, %v2905, %v2907
        %v2914 = vsel %vm1714, %v2907, %v2909
        %v2915 = vsel %vm1714, %v2909, %v2911
        %v2925 = vrot.slane %v2594, 4
        %v2926 = vrot.slane %v2595, 4
        %v2927 = vrot.slane %v2596, 4
        %v2928 = vrot.slane %v2597, 4
        %v2929 = vrot.slane %v2598, 4
        %2930 = vrot.lane.b32.xlu0 %v2925, 62
        %v2931 = vpop.permute.xlu0 %2930
        %2932 = vrot.lane.b32.xlu0 %v2926, 62
        %v2933 = vpop.permute.xlu0 %2932
        %2934 = vrot.lane.b32.xlu0 %v2927, 62
        %v2935 = vpop.permute.xlu0 %2934
        %2936 = vrot.lane.b32.xlu0 %v2928, 62
        %v2937 = vpop.permute.xlu0 %2936
        %2938 = vrot.lane.b32.xlu0 %v2929, 62
        %v2939 = vpop.permute.xlu0 %2938
        %v2940 = vsel %vm1743, %v2931, %v2933
        %v2941 = vsel %vm1743, %v2933, %v2935
        %v2942 = vsel %vm1743, %v2935, %v2937
        %v2943 = vsel %vm1743, %v2937, %v2939
        %2953 = vrot.lane.b32.xlu0 %v2599, 56
        %v2954 = vpop.permute.xlu0 %2953
        %2955 = vrot.lane.b32.xlu0 %v2600, 56
        %v2956 = vpop.permute.xlu0 %2955
        %2957 = vrot.lane.b32.xlu0 %v2601, 56
        %v2958 = vpop.permute.xlu0 %2957
        %2959 = vrot.lane.b32.xlu0 %v2602, 56
        %v2960 = vpop.permute.xlu0 %2959
        %2961 = vrot.lane.b32.xlu0 %v2603, 56
        %v2962 = vpop.permute.xlu0 %2961
        %v2963 = vsel %vm1767, %v2954, %v2956
        %v2964 = vsel %vm1767, %v2956, %v2958
        %v2965 = vsel %vm1767, %v2958, %v2960
        %v2966 = vsel %vm1767, %v2960, %v2962
        %v2976 = vrot.slane %v2604, 4
        %v2977 = vrot.slane %v2605, 4
        %v2978 = vrot.slane %v2606, 4
        %v2979 = vrot.slane %v2607, 4
        %v2980 = vrot.slane %v2608, 4
        %2981 = vrot.lane.b32.xlu0 %v2976, 55
        %v2982 = vpop.permute.xlu0 %2981
        %2983 = vrot.lane.b32.xlu0 %v2977, 55
        %v2984 = vpop.permute.xlu0 %2983
        %2985 = vrot.lane.b32.xlu0 %v2978, 55
        %v2986 = vpop.permute.xlu0 %2985
        %2987 = vrot.lane.b32.xlu0 %v2979, 55
        %v2988 = vpop.permute.xlu0 %2987
        %2989 = vrot.lane.b32.xlu0 %v2980, 55
        %v2990 = vpop.permute.xlu0 %2989
        %v2991 = vsel %vm1796, %v2982, %v2984
        %v2992 = vsel %vm1796, %v2984, %v2986
        %v2993 = vsel %vm1796, %v2986, %v2988
        %v2994 = vsel %vm1796, %v2988, %v2990
        %3004 = vrot.lane.b32.xlu0 %v2609, 54
        %v3005 = vpop.permute.xlu0 %3004
        %3006 = vrot.lane.b32.xlu0 %v2610, 54
        %v3007 = vpop.permute.xlu0 %3006
        %3008 = vrot.lane.b32.xlu0 %v2611, 54
        %v3009 = vpop.permute.xlu0 %3008
        %3010 = vrot.lane.b32.xlu0 %v2612, 54
        %v3011 = vpop.permute.xlu0 %3010
        %3012 = vrot.lane.b32.xlu0 %v2613, 54
        %v3013 = vpop.permute.xlu0 %3012
        %v3014 = vsel %vm1820, %v3005, %v3007
        %v3015 = vsel %vm1820, %v3007, %v3009
        %v3016 = vsel %vm1820, %v3009, %v3011
        %v3017 = vsel %vm1820, %v3011, %v3013
        %v3027 = vrot.slane %v2614, 4
        %v3028 = vrot.slane %v2615, 4
        %v3029 = vrot.slane %v2616, 4
        %v3030 = vrot.slane %v2617, 4
        %v3031 = vrot.slane %v2618, 4
        %3032 = vrot.lane.b32.xlu0 %v3027, 48
        %v3033 = vpop.permute.xlu0 %3032
        %3034 = vrot.lane.b32.xlu0 %v3028, 48
        %v3035 = vpop.permute.xlu0 %3034
        %3036 = vrot.lane.b32.xlu0 %v3029, 48
        %v3037 = vpop.permute.xlu0 %3036
        %3038 = vrot.lane.b32.xlu0 %v3030, 48
        %v3039 = vpop.permute.xlu0 %3038
        %3040 = vrot.lane.b32.xlu0 %v3031, 48
        %v3041 = vpop.permute.xlu0 %3040
        %v3042 = vsel %vm1849, %v3033, %v3035
        %v3043 = vsel %vm1849, %v3035, %v3037
        %v3044 = vsel %vm1849, %v3037, %v3039
        %v3045 = vsel %vm1849, %v3039, %v3041
        %v3050 = vsel %vm1858, %v2540, %v2685
        %v3051 = vsel %vm1858, %v2541, %v2686
        %v3052 = vsel %vm1858, %v2542, %v2687
        %v3053 = vsel %vm1858, %v2543, %v2688
        %v3054 = vsel %vm1858, %v2708, %v2736
        %v3055 = vsel %vm1858, %v2709, %v2737
        %v3056 = vsel %vm1858, %v2710, %v2738
        %v3057 = vsel %vm1858, %v2711, %v2739
        %v3058 = vsel %vm1858, %v2759, %v2787
        %v3059 = vsel %vm1858, %v2760, %v2788
        %v3060 = vsel %vm1858, %v2761, %v2789
        %v3061 = vsel %vm1858, %v2762, %v2790
        %v3062 = vsel %vm1858, %v2810, %v2838
        %v3063 = vsel %vm1858, %v2811, %v2839
        %v3064 = vsel %vm1858, %v2812, %v2840
        %v3065 = vsel %vm1858, %v2813, %v2841
        %v3066 = vsel %vm1858, %v2861, %v2889
        %v3067 = vsel %vm1858, %v2862, %v2890
        %v3068 = vsel %vm1858, %v2863, %v2891
        %v3069 = vsel %vm1858, %v2864, %v2892
        %v3070 = vsel %vm1858, %v2912, %v2940
        %v3071 = vsel %vm1858, %v2913, %v2941
        %v3072 = vsel %vm1858, %v2914, %v2942
        %v3073 = vsel %vm1858, %v2915, %v2943
        %v3074 = vsel %vm1858, %v2963, %v2991
        %v3075 = vsel %vm1858, %v2964, %v2992
        %v3076 = vsel %vm1858, %v2965, %v2993
        %v3077 = vsel %vm1858, %v2966, %v2994
        %v3078 = vsel %vm1858, %v3014, %v3042
        %v3079 = vsel %vm1858, %v3015, %v3043
        %v3080 = vsel %vm1858, %v3016, %v3044
        %v3081 = vsel %vm1858, %v3017, %v3045
        %v3087 = vrot.slane %v2624, 4
        %v3088 = vrot.slane %v2625, 4
        %v3089 = vrot.slane %v2626, 4
        %v3090 = vrot.slane %v2627, 4
        %v3091 = vrot.slane %v2628, 4
        %3092 = vrot.lane.b32.xlu0 %v3087, 127
        %v3093 = vpop.permute.xlu0 %3092
        %3094 = vrot.lane.b32.xlu0 %v3088, 127
        %v3095 = vpop.permute.xlu0 %3094
        %3096 = vrot.lane.b32.xlu0 %v3089, 127
        %v3097 = vpop.permute.xlu0 %3096
        %3098 = vrot.lane.b32.xlu0 %v3090, 127
        %v3099 = vpop.permute.xlu0 %3098
        %3100 = vrot.lane.b32.xlu0 %v3091, 127
        %v3101 = vpop.permute.xlu0 %3100
        %v3102 = vsel %vm1479, %v3093, %v3095
        %v3103 = vsel %vm1479, %v3095, %v3097
        %v3104 = vsel %vm1479, %v3097, %v3099
        %v3105 = vsel %vm1479, %v3099, %v3101
        %3115 = vrot.lane.b32.xlu0 %v2629, 81
        %v3116 = vpop.permute.xlu0 %3115
        %3117 = vrot.lane.b32.xlu0 %v2630, 81
        %v3118 = vpop.permute.xlu0 %3117
        %3119 = vrot.lane.b32.xlu0 %v2631, 81
        %v3120 = vpop.permute.xlu0 %3119
        %3121 = vrot.lane.b32.xlu0 %v2632, 81
        %v3122 = vpop.permute.xlu0 %3121
        %v3123 = vsel %vm1055, %v3116, %v3118
        %v3124 = vsel %vm1055, %v3118, %v3120
        %v3125 = vsel %vm1055, %v3120, %v3122
        %v3135 = vrot.slane %v2633, 4
        %v3136 = vrot.slane %v2634, 4
        %v3137 = vrot.slane %v2635, 4
        %v3138 = vrot.slane %v2636, 4
        %3139 = vrot.lane.b32.xlu0 %v3135, 80
        %v3140 = vpop.permute.xlu0 %3139
        %3141 = vrot.lane.b32.xlu0 %v3136, 80
        %v3142 = vpop.permute.xlu0 %3141
        %3143 = vrot.lane.b32.xlu0 %v3137, 80
        %v3144 = vpop.permute.xlu0 %3143
        %3145 = vrot.lane.b32.xlu0 %v3138, 80
        %v3146 = vpop.permute.xlu0 %3145
        %v3147 = vsel %vm1013, %v3140, %v3142
        %v3148 = vsel %vm1013, %v3142, %v3144
        %v3149 = vsel %vm1013, %v3144, %v3146
        %v3150 = vsel %vm1013, %v3146, %v1959
        %3160 = vrot.lane.b32.xlu0 %v2637, 79
        %v3161 = vpop.permute.xlu0 %3160
        %3162 = vrot.lane.b32.xlu0 %v2638, 79
        %v3163 = vpop.permute.xlu0 %3162
        %3164 = vrot.lane.b32.xlu0 %v2639, 79
        %v3165 = vpop.permute.xlu0 %3164
        %3166 = vrot.lane.b32.xlu0 %v2640, 79
        %v3167 = vpop.permute.xlu0 %3166
        %v3168 = vsel %vm1984, %v3161, %v3163
        %v3169 = vsel %vm1984, %v3163, %v3165
        %v3170 = vsel %vm1984, %v3165, %v3167
        %v3171 = vsel %vm1984, %v3167, %v1983
        %v3181 = vrot.slane %v2641, 4
        %v3182 = vrot.slane %v2642, 4
        %v3183 = vrot.slane %v2643, 4
        %v3184 = vrot.slane %v2644, 4
        %3185 = vrot.lane.b32.xlu0 %v3181, 73
        %v3186 = vpop.permute.xlu0 %3185
        %3187 = vrot.lane.b32.xlu0 %v3182, 73
        %v3188 = vpop.permute.xlu0 %3187
        %3189 = vrot.lane.b32.xlu0 %v3183, 73
        %v3190 = vpop.permute.xlu0 %3189
        %3191 = vrot.lane.b32.xlu0 %v3184, 73
        %v3192 = vpop.permute.xlu0 %3191
        %v3193 = vsel %vm367, %v3186, %v3188
        %v3194 = vsel %vm367, %v3188, %v3190
        %v3195 = vsel %vm367, %v3190, %v3192
        %v3196 = vsel %vm367, %v3192, %v2013
        %3206 = vrot.lane.b32.xlu0 %v2645, 72
        %v3207 = vpop.permute.xlu0 %3206
        %3208 = vrot.lane.b32.xlu0 %v2646, 72
        %v3209 = vpop.permute.xlu0 %3208
        %3210 = vrot.lane.b32.xlu0 %v2647, 72
        %v3211 = vpop.permute.xlu0 %3210
        %3212 = vrot.lane.b32.xlu0 %v2648, 72
        %v3213 = vpop.permute.xlu0 %3212
        %v3214 = vsel %vm888, %v3207, %v3209
        %v3215 = vsel %vm888, %v3209, %v3211
        %v3216 = vsel %vm888, %v3211, %v3213
        %v3217 = vsel %vm888, %v3213, %v2037
        %v3227 = vrot.slane %v2649, 4
        %v3228 = vrot.slane %v2650, 4
        %v3229 = vrot.slane %v2651, 4
        %v3230 = vrot.slane %v2652, 4
        %3231 = vrot.lane.b32.xlu0 %v3227, 71
        %v3232 = vpop.permute.xlu0 %3231
        %3233 = vrot.lane.b32.xlu0 %v3228, 71
        %v3234 = vpop.permute.xlu0 %3233
        %3235 = vrot.lane.b32.xlu0 %v3229, 71
        %v3236 = vpop.permute.xlu0 %3235
        %3237 = vrot.lane.b32.xlu0 %v3230, 71
        %v3238 = vpop.permute.xlu0 %3237
        %v3239 = vsel %vm2067, %v3232, %v3234
        %v3240 = vsel %vm2067, %v3234, %v3236
        %v3241 = vsel %vm2067, %v3236, %v3238
        %v3242 = vsel %vm2067, %v3238, %v2066
        %3252 = vrot.lane.b32.xlu0 %v2653, 65
        %v3253 = vpop.permute.xlu0 %3252
        %3254 = vrot.lane.b32.xlu0 %v2654, 65
        %v3255 = vpop.permute.xlu0 %3254
        %3256 = vrot.lane.b32.xlu0 %v2655, 65
        %v3257 = vpop.permute.xlu0 %3256
        %3258 = vrot.lane.b32.xlu0 %v2656, 65
        %v3259 = vpop.permute.xlu0 %3258
        %v3260 = vsel %vm804, %v3253, %v3255
        %v3261 = vsel %vm804, %v3255, %v3257
        %v3262 = vsel %vm804, %v3257, %v3259
        %v3263 = vsel %vm804, %v3259, %v2091
        %v3273 = vrot.slane %v2657, 4
        %v3274 = vrot.slane %v2658, 4
        %v3275 = vrot.slane %v2659, 4
        %v3276 = vrot.slane %v2660, 4
        %3277 = vrot.lane.b32.xlu0 %v3273, 64
        %v3278 = vpop.permute.xlu0 %3277
        %3279 = vrot.lane.b32.xlu0 %v3274, 64
        %v3280 = vpop.permute.xlu0 %3279
        %3281 = vrot.lane.b32.xlu0 %v3275, 64
        %v3282 = vpop.permute.xlu0 %3281
        %3283 = vrot.lane.b32.xlu0 %v3276, 64
        %v3284 = vpop.permute.xlu0 %3283
        %v3285 = vsel %vm762, %v3278, %v3280
        %v3286 = vsel %vm762, %v3280, %v3282
        %v3287 = vsel %vm762, %v3282, %v3284
        %v3288 = vsel %vm762, %v3284, %v2120
        %3298 = vrot.lane.b32.xlu0 %v2661, 63
        %v3299 = vpop.permute.xlu0 %3298
        %3300 = vrot.lane.b32.xlu0 %v2662, 63
        %v3301 = vpop.permute.xlu0 %3300
        %3302 = vrot.lane.b32.xlu0 %v2663, 63
        %v3303 = vpop.permute.xlu0 %3302
        %3304 = vrot.lane.b32.xlu0 %v2664, 63
        %v3305 = vpop.permute.xlu0 %3304
        %v3306 = vsel %vm1714, %v3299, %v3301
        %v3307 = vsel %vm1714, %v3301, %v3303
        %v3308 = vsel %vm1714, %v3303, %v3305
        %v3309 = vsel %vm1714, %v3305, %v2144
        %v3310 = vsel %vm1858, %v2619, %v3102
        %v3311 = vsel %vm1858, %v2620, %v3103
        %v3312 = vsel %vm1858, %v2621, %v3104
        %v3313 = vsel %vm1858, %v2622, %v3105
        %v3314 = vsel %vm1858, %v2623, %v3101
        %v3315 = vsel %vm1858, %v3116, %v3140
        %v3316 = vsel %vm1858, %v3123, %v3147
        %v3317 = vsel %vm1858, %v3124, %v3148
        %v3318 = vsel %vm1858, %v3125, %v3149
        %v3319 = vsel %vm1858, %v3122, %v3150
        %v3320 = vsel %vm1858, %v3161, %v3186
        %v3321 = vsel %vm1858, %v3168, %v3193
        %v3322 = vsel %vm1858, %v3169, %v3194
        %v3323 = vsel %vm1858, %v3170, %v3195
        %v3324 = vsel %vm1858, %v3171, %v3196
        %v3325 = vsel %vm1858, %v3207, %v3232
        %v3326 = vsel %vm1858, %v3214, %v3239
        %v3327 = vsel %vm1858, %v3215, %v3240
        %v3328 = vsel %vm1858, %v3216, %v3241
        %v3329 = vsel %vm1858, %v3217, %v3242
        %v3330 = vsel %vm1858, %v3253, %v3278
        %v3331 = vsel %vm1858, %v3260, %v3285
        %v3332 = vsel %vm1858, %v3261, %v3286
        %v3333 = vsel %vm1858, %v3262, %v3287
        %v3334 = vsel %vm1858, %v3263, %v3288
        %3360 = vrot.lane.b32.xlu0 %v3310, 47
        %v3361 = vpop.permute.xlu0 %3360
        %3362 = vrot.lane.b32.xlu0 %v3311, 47
        %v3363 = vpop.permute.xlu0 %3362
        %3364 = vrot.lane.b32.xlu0 %v3312, 47
        %v3365 = vpop.permute.xlu0 %3364
        %3366 = vrot.lane.b32.xlu0 %v3313, 47
        %v3367 = vpop.permute.xlu0 %3366
        %3368 = vrot.lane.b32.xlu0 %v3314, 47
        %v3369 = vpop.permute.xlu0 %3368
        %3370 = vrot.lane.b32.xlu0 %v3315, 47
        %v3371 = vpop.permute.xlu0 %3370
        %3372 = vrot.lane.b32.xlu0 %v3316, 47
        %v3373 = vpop.permute.xlu0 %3372
        %3374 = vrot.lane.b32.xlu0 %v3317, 47
        %v3375 = vpop.permute.xlu0 %3374
        %3376 = vrot.lane.b32.xlu0 %v3318, 47
        %v3377 = vpop.permute.xlu0 %3376
        %3378 = vrot.lane.b32.xlu0 %v3319, 47
        %v3379 = vpop.permute.xlu0 %3378
        %3380 = vrot.lane.b32.xlu0 %v3320, 47
        %v3381 = vpop.permute.xlu0 %3380
        %3382 = vrot.lane.b32.xlu0 %v3321, 47
        %v3383 = vpop.permute.xlu0 %3382
        %3384 = vrot.lane.b32.xlu0 %v3322, 47
        %v3385 = vpop.permute.xlu0 %3384
        %3386 = vrot.lane.b32.xlu0 %v3323, 47
        %v3387 = vpop.permute.xlu0 %3386
        %3388 = vrot.lane.b32.xlu0 %v3324, 47
        %v3389 = vpop.permute.xlu0 %3388
        %3390 = vrot.lane.b32.xlu0 %v3325, 47
        %v3391 = vpop.permute.xlu0 %3390
        %3392 = vrot.lane.b32.xlu0 %v3326, 47
        %v3393 = vpop.permute.xlu0 %3392
        %3394 = vrot.lane.b32.xlu0 %v3327, 47
        %v3395 = vpop.permute.xlu0 %3394
        %3396 = vrot.lane.b32.xlu0 %v3328, 47
        %v3397 = vpop.permute.xlu0 %3396
        %3398 = vrot.lane.b32.xlu0 %v3329, 47
        %v3399 = vpop.permute.xlu0 %3398
        %3400 = vrot.lane.b32.xlu0 %v3330, 47
        %v3401 = vpop.permute.xlu0 %3400
        %3402 = vrot.lane.b32.xlu0 %v3331, 47
        %v3403 = vpop.permute.xlu0 %3402
        %3404 = vrot.lane.b32.xlu0 %v3332, 47
        %v3405 = vpop.permute.xlu0 %3404
        %3406 = vrot.lane.b32.xlu0 %v3333, 47
        %v3407 = vpop.permute.xlu0 %3406
        %3408 = vrot.lane.b32.xlu0 %v3334, 47
        %v3409 = vpop.permute.xlu0 %3408
        %3410 = vrot.lane.b32.xlu0 %v3299, 47
        %v3411 = vpop.permute.xlu0 %3410
        %3412 = vrot.lane.b32.xlu0 %v3306, 47
        %v3413 = vpop.permute.xlu0 %3412
        %3414 = vrot.lane.b32.xlu0 %v3307, 47
        %v3415 = vpop.permute.xlu0 %3414
        %3416 = vrot.lane.b32.xlu0 %v3308, 47
        %v3417 = vpop.permute.xlu0 %3416
        %3418 = vrot.lane.b32.xlu0 %v3309, 47
        %v3419 = vpop.permute.xlu0 %3418
        %v3420 = vsel %vm2259, %v3361, %v3363
        %v3421 = vsel %vm2259, %v3363, %v3365
        %v3422 = vsel %vm2259, %v3365, %v3367
        %v3423 = vsel %vm2259, %v3367, %v3369
        %v3424 = vsel %vm2259, %v3371, %v3373
        %v3425 = vsel %vm2259, %v3373, %v3375
        %v3426 = vsel %vm2259, %v3375, %v3377
        %v3427 = vsel %vm2259, %v3377, %v3379
        %v3428 = vsel %vm2259, %v3381, %v3383
        %v3429 = vsel %vm2259, %v3383, %v3385
        %v3430 = vsel %vm2259, %v3385, %v3387
        %v3431 = vsel %vm2259, %v3387, %v3389
        %v3432 = vsel %vm2259, %v3391, %v3393
        %v3433 = vsel %vm2259, %v3393, %v3395
        %v3434 = vsel %vm2259, %v3395, %v3397
        %v3435 = vsel %vm2259, %v3397, %v3399
        %v3436 = vsel %vm2259, %v3401, %v3403
        %v3437 = vsel %vm2259, %v3403, %v3405
        %v3438 = vsel %vm2259, %v3405, %v3407
        %v3439 = vsel %vm2259, %v3407, %v3409
        %v3440 = vsel %vm2259, %v3411, %v3413
        %v3441 = vsel %vm2259, %v3413, %v3415
        %v3442 = vsel %vm2259, %v3415, %v3417
        %v3443 = vsel %vm2259, %v3417, %v3419
        %v3464 = vld [vmem:[%s2] sm:$0xf]
        %v3466 = vsel %vm2305, %v3464, 0
        %v3468 = vsel %vm1858, %v3440, 0
        %v3470 = vsel %vm1858, %v3441, 0
        %v3472 = vsel %vm1858, %v3442, 0
        %v3474 = vsel %vm1858, %v3443, 0
        %3476 = vmatprep.subr.mxu0 %v3051
        %3477 = vmatpush1.msra.mxu0 %v3050
        %3478 = vmatprep.subr.mxu0 %v3055
        %3479 = vmatpush1.msra.mxu0 %v3054
        %3480 = vmatprep.subr.mxu0 %v3059
        %3481 = vmatpush1.msra.mxu0 %v3058
        %3482 = vmatprep.subr.mxu0 %v3063
        %3483 = vmatpush1.msra.mxu0 %v3062
        %3484 = vmatprep.subr.mxu0 %v3067
        %3485 = vmatpush1.msra.mxu0 %v3066
        %3486 = vmatprep.subr.mxu0 %v3071
        %3487 = vmatpush1.msra.mxu0 %v3070
        %3488 = vmatprep.subr.mxu0 %v3075
        %3489 = vmatpush1.msra.mxu0 %v3074
        %3490 = vmatprep.subr.mxu0 %v3079
        %3491 = vmatpush1.msra.mxu0 %v3078
        %3492 = vmatprep.subr.mxu0 %v3421
        %3493 = vmatpush1.msra.mxu0 %v3420
        %3494 = vmatprep.subr.mxu0 %v3425
        %3495 = vmatpush1.msra.mxu0 %v3424
        %3496 = vmatprep.subr.mxu0 %v3429
        %3497 = vmatpush1.msra.mxu0 %v3428
        %3498 = vmatprep.subr.mxu0 %v3433
        %3499 = vmatpush1.msra.mxu0 %v3432
        %3500 = vmatprep.subr.mxu0 %v3437
        %3501 = vmatpush1.msra.mxu0 %v3436
        %3502 = vmatprep.subr.mxu0 %v3470
        %3503 = vmatpush1.msra.mxu0 %v3468
        %3504 = vmatprep.subr.mxu0 0.0
        %3505 = vmatpush1.msra.mxu0 0.0
        %3506 = vmatprep.subr.mxu0 0.0
        %3507 = vmatpush1.msra.mxu0 0.0
        %3508 = vmatprep.subr.mxu0 0.0
        %3509 = vmatpush1.msra.mxu0 0.0
        %3510 = vmatprep.subr.mxu0 0.0
        %3511 = vmatpush1.msra.mxu0 0.0
        %3512 = vmatprep.subr.mxu0 0.0
        %3513 = vmatpush1.msra.mxu0 0.0
        %3514 = vmatprep.subr.mxu0 0.0
        %3515 = vmatpush1.msra.mxu0 0.0
        %3516 = vmatprep.subr.mxu0 0.0
        %3517 = vmatpush1.msra.mxu0 0.0
        %3518 = vmatprep.subr.mxu0 0.0
        %3519 = vmatpush1.msra.mxu0 0.0
        %3520 = vmatprep.subr.mxu0 0.0
        %3521 = vmatpush1.msra.mxu0 0.0
        %3522 = vmatprep.subr.mxu0 0.0
        %3523 = vmatpush1.msra.mxu0 0.0
        %3524 = vmatprep.subr.mxu0 0.0
        %3525 = vmatpush1.msra.mxu0 0.0
        %3526 = vmatprep.subr.mxu0 0.0
        %3527 = vmatpush1.msra.mxu0 0.0
        %3528 = vmatprep.subr.mxu0 0.0
        %3529 = vmatpush1.msra.mxu0 0.0
        %3530 = vmatprep.subr.mxu0 0.0
        %3531 = vmatpush1.msra.mxu0 0.0
        %3532 = vmatprep.subr.mxu0 0.0
        %3533 = vmatpush1.msra.mxu0 0.0
        %3534 = vmatprep.subr.mxu0 0.0
        %3535 = vmatpush1.msra.mxu0 0.0
        %3536 = vmatprep.subr.mxu0 0.0
        %3537 = vmatpush1.msra.mxu0 0.0
        %3538 = vmatprep.subr.mxu0 0.0
        %3539 = vmatpush1.msra.mxu0 0.0
        %3540 = vmatprep.mubr.f32.mxu0 0.0
        %3541 = vmatmul.mubr.f32.gmra.mrb[0].mxu0 %v3466
        %v3542 = vpop.f32.mrb[0].mxu0
        %v3543 = vadd.f32 0.0, %v3542
        %v3544 = vpop.f32.mrb[0].mxu0
        %v3545 = vadd.f32 0.0, %v3544
        %3546 = vdwg.mxu0
        %3547 = vmatprep.subr.mxu0 %v3053
        %3548 = vmatpush1.msra.mxu0 %v3052
        %3549 = vmatprep.subr.mxu0 %v3057
        %3550 = vmatpush1.msra.mxu0 %v3056
        %3551 = vmatprep.subr.mxu0 %v3061
        %3552 = vmatpush1.msra.mxu0 %v3060
        %3553 = vmatprep.subr.mxu0 %v3065
        %3554 = vmatpush1.msra.mxu0 %v3064
        %3555 = vmatprep.subr.mxu0 %v3069
        %3556 = vmatpush1.msra.mxu0 %v3068
        %3557 = vmatprep.subr.mxu0 %v3073
        %3558 = vmatpush1.msra.mxu0 %v3072
        %3559 = vmatprep.subr.mxu0 %v3077
        %3560 = vmatpush1.msra.mxu0 %v3076
        %3561 = vmatprep.subr.mxu0 %v3081
        %3562 = vmatpush1.msra.mxu0 %v3080
        %3563 = vmatprep.subr.mxu0 %v3423
        %3564 = vmatpush1.msra.mxu0 %v3422
        %3565 = vmatprep.subr.mxu0 %v3427
        %3566 = vmatpush1.msra.mxu0 %v3426
        %3567 = vmatprep.subr.mxu0 %v3431
        %3568 = vmatpush1.msra.mxu0 %v3430
        %3569 = vmatprep.subr.mxu0 %v3435
        %3570 = vmatpush1.msra.mxu0 %v3434
        %3571 = vmatprep.subr.mxu0 %v3439
        %3572 = vmatpush1.msra.mxu0 %v3438
        %3573 = vmatprep.subr.mxu0 %v3474
        %3574 = vmatpush1.msra.mxu0 %v3472
        %3575 = vmatprep.subr.mxu0 0.0
        %3576 = vmatpush1.msra.mxu0 0.0
        %3577 = vmatprep.subr.mxu0 0.0
        %3578 = vmatpush1.msra.mxu0 0.0
        %3579 = vmatprep.subr.mxu0 0.0
        %3580 = vmatpush1.msra.mxu0 0.0
        %3581 = vmatprep.subr.mxu0 0.0
        %3582 = vmatpush1.msra.mxu0 0.0
        %3583 = vmatprep.subr.mxu0 0.0
        %3584 = vmatpush1.msra.mxu0 0.0
        %3585 = vmatprep.subr.mxu0 0.0
        %3586 = vmatpush1.msra.mxu0 0.0
        %3587 = vmatprep.subr.mxu0 0.0
        %3588 = vmatpush1.msra.mxu0 0.0
        %3589 = vmatprep.subr.mxu0 0.0
        %3590 = vmatpush1.msra.mxu0 0.0
        %3591 = vmatprep.subr.mxu0 0.0
        %3592 = vmatpush1.msra.mxu0 0.0
        %3593 = vmatprep.subr.mxu0 0.0
        %3594 = vmatpush1.msra.mxu0 0.0
        %3595 = vmatprep.subr.mxu0 0.0
        %3596 = vmatpush1.msra.mxu0 0.0
        %3597 = vmatprep.subr.mxu0 0.0
        %3598 = vmatpush1.msra.mxu0 0.0
        %3599 = vmatprep.subr.mxu0 0.0
        %3600 = vmatpush1.msra.mxu0 0.0
        %3601 = vmatprep.subr.mxu0 0.0
        %3602 = vmatpush1.msra.mxu0 0.0
        %3603 = vmatprep.subr.mxu0 0.0
        %3604 = vmatpush1.msra.mxu0 0.0
        %3605 = vmatprep.subr.mxu0 0.0
        %3606 = vmatpush1.msra.mxu0 0.0
        %3607 = vmatprep.subr.mxu0 0.0
        %3608 = vmatpush1.msra.mxu0 0.0
        %3609 = vmatprep.subr.mxu0 0.0
        %3610 = vmatpush1.msra.mxu0 0.0
        %3611 = vmatprep.mubr.f32.mxu0 0.0
        %3612 = vmatmul.mubr.f32.gmra.mrb[0].mxu0 %v3466
        %v3613 = vpop.f32.mrb[0].mxu0
        %v3614 = vadd.f32 0.0, %v3613
        %v3615 = vpop.f32.mrb[0].mxu0
        %v3616 = vadd.f32 0.0, %v3615
        %3617 = vdwg.mxu0
        %v3618 = vld [vmem:[%s5] sm:$0xf]
        %v3619 = vld [vmem:[%s6] sm:$0xf]
        %v3620 = vsel %vm1858, %v3543, 0.0
        %v3621 = vsel %vm1858, %v3545, 0.0
        %v3622 = vadd.f32 %v3620, %v3621
        %v3623 = vsel %vm1858, %v3614, 0.0
        %v3624 = vadd.f32 %v3622, %v3623
        %v3625 = vsel %vm1858, %v3616, 0.0
        %v3626 = vadd.f32 %v3624, %v3625
        %3627 = vadd.xlane.f32.xlu0 %v3626
        %v3628 = vpop.xlane.xlu0 %3627
        %v3629 = vmul.f32 %v3628, %v2470
        %v3630 = vsub.f32 %v3543, %v3629
        %v3631 = vsub.f32 %v3545, %v3629
        %v3632 = vsub.f32 %v3614, %v3629
        %v3633 = vsub.f32 %v3616, %v3629
        %v3634 = vmul.f32 %v3630, %v3630
        %v3635 = vmul.f32 %v3631, %v3631
        %v3636 = vmul.f32 %v3632, %v3632
        %v3637 = vmul.f32 %v3633, %v3633
        %v3638 = vsel %vm1858, %v3634, 0.0
        %v3639 = vsel %vm1858, %v3635, 0.0
        %v3640 = vadd.f32 %v3638, %v3639
        %v3641 = vsel %vm1858, %v3636, 0.0
        %v3642 = vadd.f32 %v3640, %v3641
        %v3643 = vsel %vm1858, %v3637, 0.0
        %v3644 = vadd.f32 %v3642, %v3643
        %3645 = vadd.xlane.f32.xlu0 %v3644
        %v3646 = vpop.xlane.xlu0 %3645
        %v3647 = vmul.f32 %v3646, %v2470
        %v3648 = vadd.f32 %v3647, 1e-05
        %v3649 = vrsqrt.pop %v3648
        %v3650 = vmul.f32 %v3630, %v3649
        %v3651 = vmul.f32 %v3631, %v3649
        %v3652 = vmul.f32 %v3632, %v3649
        %v3653 = vmul.f32 %v3633, %v3649
        %3655 = vset.pattern.permute.xlu0 0
        %3656 = vperm.xlu0 %3655, %v3618
        %v3657 = vpop.permute.xlu0 %3656
        %v3659 = vmul.f32 %v3650, %v3657
        %v3660 = vmul.f32 %v3651, %v3657
        %v3661 = vmul.f32 %v3652, %v3657
        %v3662 = vmul.f32 %v3653, %v3657
        %3664 = vset.pattern.permute.xlu0 0
        %3665 = vperm.xlu0 %3664, %v3619
        %v3666 = vpop.permute.xlu0 %3665
        %v3668 = vadd.f32 %v3659, %v3666
        %v3669 = vadd.f32 %v3660, %v3666
        %v3670 = vadd.f32 %v3661, %v3666
        %v3671 = vadd.f32 %v3662, %v3666
        %v3676 = vcombine.low %v3668, %v3669
        %v3677 = vcombine.low %v3670, %v3671
        %v3680 = vadd.f32 %v353, %v3676
        %v3681 = vadd.f32 %v354, %v3677
        %3682 = vst [vmem:[%s336] sm:$0xff] %v3680
        %3683 = vst [vmem:[%s336 + $0x8] sm:$0xff] %v3681
        %s3684 = sand.u32 %s207, 1
        %s3685 = scalar_lea.sflag [#allocation4], %s3684
        %s3686 = sand.u32 %s207, 1
        %s3687 = smul.addr %s3686, 16
        %s3688 = scalar_lea.vmem [#allocation7], %s3687
        // Predicated region
        $region61: #{tpu_custom_call.1} parent=51 // pred_check
          %p3689 = pneg %p217
        $region62: #{tpu_custom_call.1} parent=51 // pred_check_branch
          %3691 = sbr.rel (%p3689) target = $region64
        $region63: #{tpu_custom_call.1} parent=51 // pred_region
          %s3693 = ssub.s32 256, 256
          %3694 = vsyncadd %s3685, %s3693
          %s3695 = smul.addr %s26, 4
          %s3696 = smul.addr %s3695, 64
          %s3697 = scalar_lea.hbm %s8, %s3696
          %s3699 = sshll.u32 %s3688, 4
          %s3700 = int_to_ptr.vmem [resolvable:$true] %s3699
          %3702 = dma.vmem_to_hbm [thread:$0]  %s3700, 256, %s3697, %s3685
        $region64: #{tpu_custom_call.1} parent=51 // pred_fallthru
          _
      $region52: #{tpu_custom_call.1} parent=5 // pred_fallthru
        _
      %p3703 = scmp.le.s32.totalorder 2, %s21
      // Predicated region
      $region65: #{tpu_custom_call.1} parent=5 // pred_check
        %p3704 = pneg %p3703
      $region66: #{tpu_custom_call.1} parent=5 // pred_check_branch
        %3706 = sbr.rel (%p3704) target = $region68
      $region67: #{tpu_custom_call.1} parent=5 // pred_region
        %s3707 = ssub.s32 %s21, 2
        // Predicated region
        $region69: #{tpu_custom_call.1} parent=67 // pred_check
          %p3708 = pneg %p223
        $region70: #{tpu_custom_call.1} parent=67 // pred_check_branch
          %3710 = sbr.rel (%p3708) target = $region72
        $region71: #{tpu_custom_call.1} parent=67 // pred_region
          %s3711 = sand.u32 %s208, 1
          %s3712 = scalar_lea.sflag [#allocation4], %s3711
          %s3713 = sand.u32 %s208, 1
          %s3714 = smul.addr %s3713, 16
          %s3715 = scalar_lea.vmem [#allocation7], %s3714
          %3716 = dma.done %s3712, 256
        $region72: #{tpu_custom_call.1} parent=67 // pred_fallthru
          _
      $region68: #{tpu_custom_call.1} parent=5 // pred_fallthru
        _
    $region6: #{tpu_custom_call.1} parent=1 // loop_footer
      %s25 = sadd.s32 1, %s21
    $region7: #{tpu_custom_call.1} parent=1 // loop_footer_branch
      %20 = sbr.rel target = $region3
    $region8: #{tpu_custom_call.1} parent=1 // loop_exit
      _
    %3717 = vsyncpa [#allocation3], 1
    %s3718 = scalar_lea.sflag [#allocation3], 1
    %3719 = vsyncpa %s3718, 1
    %3720 = vsyncpa [#allocation6], 1
    %3721 = vsyncpa [#allocation4], 1
    %s3722 = scalar_lea.sflag [#allocation4], 1
    %3723 = vsyncpa %s3722, 1

</llo_original>
